<compile_context>
chip_gen: v7x
topology: tpu7x:2x2x1
jax: 0.10.0
libtpu: 0.0.40
codegen_flags: <defaults>
</compile_context>

<pallas_src>
import math

import jax
import jax.numpy as jnp
from jax.experimental import pallas as pl
from jax.experimental.pallas import tpu as pltpu  # noqa: F401  (TPU backend)

# ----------------------------- model config --------------------------------
DIM = 32
N_LAYERS = 2
N_HEADS = 4
N_KV_HEADS = 4          # must equal N_HEADS: the original apply_rotary_emb bug
                        # (mixing xq_out_r with xk_out_i) only type-checks then.
VOCAB_SIZE = 64
VOCAB_PAD = 128         # lane-pad the logits for dense (unmasked) vector stores
MULTIPLE_OF = 16
NORM_EPS = 1e-5
MAX_SEQ_LEN = 16
HEAD_DIM = DIM // N_HEADS
N_REP = N_HEADS // N_KV_HEADS

_hidden = int(2 * (4 * DIM) / 3)
HIDDEN_DIM = MULTIPLE_OF * ((_hidden + MULTIPLE_OF - 1) // MULTIPLE_OF)   # 96

ATTN_SCALE = 1.0 / math.sqrt(HEAD_DIM)
NEG_BIG = -1e30          # finite "-inf" for the additive attention mask


# --------------------------- fused Pallas kernel ----------------------------
def _fused_transformer_kernel(
    h_ref,           # (B*S, D)   embedded tokens
    fc_ref,          # (B*S, D)   expanded "freqs_cos" buffer (holds sin - quirk)
    fs_ref,          # (B*S, D)   expanded "freqs_sin" buffer (holds cos - quirk)
    rope_p_ref,      # (D, D)     pair-swap-with-sign matrix for RoPE
    bias_ref,        # (B*S, B*S) additive mask: causal + same-batch block-diagonal
    attn_norm_ref,   # (L, 1, D)
    wqkv_ref,        # (L, D, 3D)  [wq^T | wk^T | wv^T]
    wo_ref,          # (L, D, D)   wo^T
    ffn_norm_ref,    # (L, 1, D)
    w13_ref,         # (L, D, 2H)  [w1^T | w3^T]
    w2_ref,          # (L, H, D)   w2^T
    final_norm_ref,  # (1, D)
    outw_ref,        # (D, VOCAB_PAD)  tied output weight, transposed + lane-padded
    logits_ref,      # (B*S, VOCAB_PAD)
):
    h = h_ref[...]                       # (BS, D) float32
    fc = fc_ref[...]
    fs = fs_ref[...]
    rope_p = rope_p_ref[...]
    bias = bias_ref[...]

    bs, d = h.shape
    lane = jax.lax.broadcasted_iota(jnp.int32, (bs, d), 1)
    even_lane = (lane & 1) == 0          # even slots hold the "real" rotation part

    def rms(x, w):
        ms = jnp.mean(x * x, axis=-1, keepdims=True)
        return x * jax.lax.rsqrt(ms + NORM_EPS) * w

    def mm(a, b):
        return jnp.dot(a, b, preferred_element_type=jnp.float32)

    for l in range(N_LAYERS):            # static unroll, 2 layers
        # ------------------------------ attention ---------------------------
        xn = rms(h, attn_norm_ref[l])
        qkv = mm(xn, wqkv_ref[l])                      # (BS, 3D), fused QKV matmul
        xq = qkv[:, :DIM]
        xk = qkv[:, DIM:2 * DIM]
        xv = qkv[:, 2 * DIM:]

        # RoPE — faithful to the reference, including the swapped sin/cos buffers
        # and xk_out's real part coming from xq_out_r (the original typo).
        xq_sw = mm(xq, rope_p)                         # [2j] = -xq[2j+1]; [2j+1] = xq[2j]
        xk_sw = mm(xk, rope_p)
        xq_rot = xq * fc + xq_sw * fs
        xk_tmp = xk * fc + xk_sw * fs                  # even lanes unused (bug), odd = xk_out_i
        xk_rot = jnp.where(even_lane, xq_rot, xk_tmp)

        # repeat_kv is the identity here (N_REP == 1)

        wo_l = wo_ref[l]                               # (D, D)
        attn_proj = jnp.zeros_like(h)
        for hh in range(N_HEADS):                      # static unroll over heads
            lo = hh * HEAD_DIM
            qh = xq_rot[:, lo:lo + HEAD_DIM]
            kh = xk_rot[:, lo:lo + HEAD_DIM]
            vh = xv[:, lo:lo + HEAD_DIM]
            s = jax.lax.dot_general(
                qh, kh, (((1,), (1,)), ((), ())),
                preferred_element_type=jnp.float32) * ATTN_SCALE
            s = s + bias                               # causal + same-batch mask
            m = jnp.max(s, axis=-1, keepdims=True)
            e = jnp.exp(s - m)
            p = e * pl.reciprocal(jnp.sum(e, axis=-1, keepdims=True), approx=True)
            oh = mm(p, vh)                             # (BS, HEAD_DIM)
            # fold the per-head slice of wo directly (equivalent to concat + wo)
            attn_proj = attn_proj + mm(oh, wo_l[lo:lo + HEAD_DIM, :])
        h = h + attn_proj                              # residual (dropout = identity)

        # ----------------------------- feed-forward -------------------------
        xn = rms(h, ffn_norm_ref[l])
        h13 = mm(xn, w13_ref[l])                       # (BS, 2H) fused w1|w3 matmul
        h1 = h13[:, :HIDDEN_DIM]
        h3 = h13[:, HIDDEN_DIM:]
        mid = (h1 * jax.nn.sigmoid(h1)) * h3           # SwiGLU: silu(w1 x) * w3 x
        h = h + mm(mid, w2_ref[l])                     # residual (dropout = identity)

    hn = rms(h, final_norm_ref[...])
    logits_ref[...] = mm(hn, outw_ref[...]).astype(logits_ref.dtype)


# ------------------------------ JAX wrapper ----------------------------------
def precompute_freqs_cis(dim, end, theta=10000.0):
    freqs = 1.0 / theta ** (jnp.arange(0, dim, 2, dtype=jnp.float32)[: dim // 2] / dim)
    t = jnp.arange(end, dtype=jnp.float32)
    f = jnp.outer(t, freqs)
    # NOTE: original returns (sin, cos) in this order.
    return jnp.sin(f), jnp.cos(f)


def _expand_freqs(f, batch):
    """(S, HEAD_DIM//2) -> (B*S, DIM): value duplicated over its (re, im) pair,
    tiled across heads and batch (matches reshape_for_boardcaset broadcasting)."""
    f2 = jnp.repeat(f, 2, axis=-1)          # (S, HEAD_DIM)
    f2 = jnp.tile(f2, (1, N_HEADS))         # (S, DIM)
    return jnp.tile(f2, (batch, 1))         # (B*S, DIM)


def _attention_bias(batch, seqlen):
    """Additive mask on the flat (B*S, B*S) score matrix:
    0 where (same batch AND causal), a large negative otherwise."""
    bs = batch * seqlen
    row = jnp.arange(bs)[:, None]
    col = jnp.arange(bs)[None, :]
    allowed = (row // seqlen == col // seqlen) & (col <= row)
    return jnp.where(allowed, 0.0, NEG_BIG).astype(jnp.float32)


def transformer_forward(params, tokens):
    B, S = tokens.shape
    h0 = jnp.take(params["tok_emb"], tokens.reshape(-1), axis=0)   # (B*S, D)
    # dropout (eval mode) -> identity
    # Buffers are swapped exactly as in the reference __init__:
    fc = _expand_freqs(params["freqs_cos"][:S], B)   # "cos" buffer actually holds sin
    fs = _expand_freqs(params["freqs_sin"][:S], B)   # "sin" buffer actually holds cos
    bias = _attention_bias(B, S)

    # Single fused kernel for the entire forward: everything fits in VMEM, no grid.
    logits_pad = pl.pallas_call(
        _fused_transformer_kernel,
        out_shape=jax.ShapeDtypeStruct((B * S, VOCAB_PAD), jnp.float32),
    )(h0, fc, fs, params["rope_p"], bias,
      params["attn_norm"], params["wqkv_t"], params["wo_t"],
      params["ffn_norm"], params["w13_t"], params["w2_t"],
      params["norm_w"], params["out_w_t_pad"])

    logits = logits_pad[:, :VOCAB_SIZE].reshape(B, S, VOCAB_SIZE)
    return logits[:, -1:, :]               # target=None branch: (B, 1, vocab)


# --------------------------- parameter init ---------------------------------
def init_params(key):
    def normal(k, shape):
        return 0.02 * jax.random.normal(k, shape, dtype=jnp.float32)

    keys = iter(jax.random.split(key, 7 * N_LAYERS + 1))
    emb = normal(next(keys), (VOCAB_SIZE, DIM))   # tied embedding / output weight

    wqkv_t, wo_t, w13_t, w2_t = [], [], [], []
    for _ in range(N_LAYERS):
        wq = normal(next(keys), (N_HEADS * HEAD_DIM, DIM))
        wk = normal(next(keys), (N_KV_HEADS * HEAD_DIM, DIM))
        wv = normal(next(keys), (N_KV_HEADS * HEAD_DIM, DIM))
        wo = normal(next(keys), (DIM, N_HEADS * HEAD_DIM))
        w1 = normal(next(keys), (HIDDEN_DIM, DIM))
        w2 = normal(next(keys), (DIM, HIDDEN_DIM))
        w3 = normal(next(keys), (HIDDEN_DIM, DIM))
        # pre-transpose + concatenate once at init (no per-forward transposes)
        wqkv_t.append(jnp.concatenate([wq.T, wk.T, wv.T], axis=1))   # (D, 3D)
        wo_t.append(wo.T)                                            # (D, D)
        w13_t.append(jnp.concatenate([w1.T, w3.T], axis=1))          # (D, 2H)
        w2_t.append(w2.T)                                            # (H, D)

    f_sin, f_cos = precompute_freqs_cis(HEAD_DIM, MAX_SEQ_LEN)
    # Reference: freqs_cos, freqs_sin = precompute_freqs_cis(...) which returns
    # (sin, cos)  ->  buffers are swapped; keep the same naming / contents.

    # RoPE pair-swap-with-sign matrix: (x @ P)[2j] = -x[2j+1], (x @ P)[2j+1] = x[2j]
    ev = jnp.arange(0, DIM, 2)
    rope_p = jnp.zeros((DIM, DIM), jnp.float32)
    rope_p = rope_p.at[ev + 1, ev].set(-1.0)
    rope_p = rope_p.at[ev, ev + 1].set(1.0)

    # tied + pre-transposed + lane-padded output weight
    out_w_t_pad = jnp.zeros((DIM, VOCAB_PAD), jnp.float32).at[:, :VOCAB_SIZE].set(emb.T)

    return dict(
        tok_emb=emb,
        out_w_t_pad=out_w_t_pad,          # weight tying (same values as tok_emb)
        norm_w=jnp.ones((1, DIM), jnp.float32),
        freqs_cos=f_sin,                  # swapped, as in the reference __init__
        freqs_sin=f_cos,
        rope_p=rope_p,
        attn_norm=jnp.ones((N_LAYERS, 1, DIM), jnp.float32),
        ffn_norm=jnp.ones((N_LAYERS, 1, DIM), jnp.float32),
        wqkv_t=jnp.stack(wqkv_t),
        wo_t=jnp.stack(wo_t),
        w13_t=jnp.stack(w13_t),
        w2_t=jnp.stack(w2_t),
    )


# ------------------------------- main ----------------------------------------
if __name__ == "__main__":
    key = jax.random.PRNGKey(0)
    pkey, tkey = jax.random.split(key)
    params = init_params(pkey)

    B, S = 2, 8
    tokens = jax.random.randint(tkey, (B, S), 0, VOCAB_SIZE, dtype=jnp.int32)

    logits = jax.jit(transformer_forward)(params, tokens)
    logits = jax.block_until_ready(logits)

    assert logits.shape == (B, 1, VOCAB_SIZE), logits.shape
    assert logits.dtype == jnp.float32
    assert bool(jnp.all(jnp.isfinite(logits)))
    print("KERNEL_OK")
</pallas_src>

<mosaic_0001>
module attributes {stable_mosaic.version = 11 : i64} {
  func.func @_fused_transformer_kernel(%arg0: memref<16x32xf32, #tpu.memory_space<vmem>>, %arg1: memref<16x32xf32, #tpu.memory_space<vmem>>, %arg2: memref<16x32xf32, #tpu.memory_space<vmem>>, %arg3: memref<32x32xf32, #tpu.memory_space<vmem>>, %arg4: memref<16x16xf32, #tpu.memory_space<vmem>>, %arg5: memref<2x1x32xf32, #tpu.memory_space<vmem>>, %arg6: memref<2x32x96xf32, #tpu.memory_space<vmem>>, %arg7: memref<2x32x32xf32, #tpu.memory_space<vmem>>, %arg8: memref<2x1x32xf32, #tpu.memory_space<vmem>>, %arg9: memref<2x32x192xf32, #tpu.memory_space<vmem>>, %arg10: memref<2x96x32xf32, #tpu.memory_space<vmem>>, %arg11: memref<1x32xf32, #tpu.memory_space<vmem>>, %arg12: memref<32x128xf32, #tpu.memory_space<vmem>>, %arg13: memref<16x128xf32, #tpu.memory_space<vmem>>) attributes {dimension_semantics = [], scalar_prefetch = 0 : i64, scratch_operands = 0 : i64, tpu.core_type = #tpu.core_type<tc>} {
    %c0 = arith.constant 0 : index
    %c0_0 = arith.constant 0 : index
    %0 = vector.load %arg0[%c0, %c0_0] : memref<16x32xf32, #tpu.memory_space<vmem>>, vector<16x32xf32>
    %c0_1 = arith.constant 0 : index
    %c0_2 = arith.constant 0 : index
    %1 = vector.load %arg1[%c0_1, %c0_2] : memref<16x32xf32, #tpu.memory_space<vmem>>, vector<16x32xf32>
    %c0_3 = arith.constant 0 : index
    %c0_4 = arith.constant 0 : index
    %2 = vector.load %arg2[%c0_3, %c0_4] : memref<16x32xf32, #tpu.memory_space<vmem>>, vector<16x32xf32>
    %c0_5 = arith.constant 0 : index
    %c0_6 = arith.constant 0 : index
    %3 = vector.load %arg3[%c0_5, %c0_6] : memref<32x32xf32, #tpu.memory_space<vmem>>, vector<32x32xf32>
    %c0_7 = arith.constant 0 : index
    %c0_8 = arith.constant 0 : index
    %4 = vector.load %arg4[%c0_7, %c0_8] : memref<16x16xf32, #tpu.memory_space<vmem>>, vector<16x16xf32>
    %5 = tpu.iota {dimensions = array<i32: 1>} : vector<16x32xi32>
    %c1_i32 = arith.constant 1 : i32
    %6 = vector.broadcast %c1_i32 : i32 to vector<16x32xi32>
    %7 = arith.andi %5, %6 : vector<16x32xi32>
    %c0_i32 = arith.constant 0 : i32
    %8 = vector.broadcast %c0_i32 : i32 to vector<16x32xi32>
    %9 = arith.cmpi eq, %7, %8 : vector<16x32xi32>
    %c0_9 = arith.constant 0 : index
    %c0_10 = arith.constant 0 : index
    %c0_11 = arith.constant 0 : index
    %10 = vector.load %arg5[%c0_9, %c0_10, %c0_11] : memref<2x1x32xf32, #tpu.memory_space<vmem>>, vector<1x1x32xf32>
    %11 = vector.shape_cast %10 : vector<1x1x32xf32> to vector<1x32xf32>
    %12 = arith.mulf %0, %0 : vector<16x32xf32>
    %cst = arith.constant dense<0.000000e+00> : vector<16xf32>
    %13 = vector.multi_reduction <add>, %12, %cst [1] : vector<16x32xf32> to vector<16xf32>
    %14 = vector.shape_cast %13 : vector<16xf32> to vector<16x1xf32>
    %cst_12 = arith.constant 3.200000e+01 : f32
    %15 = vector.broadcast %cst_12 : f32 to vector<16x1xf32>
    %16 = arith.divf %14, %15 : vector<16x1xf32>
    %cst_13 = arith.constant 9.99999974E-6 : f32
    %17 = vector.broadcast %cst_13 : f32 to vector<16x1xf32>
    %18 = arith.addf %16, %17 : vector<16x1xf32>
    %19 = math.rsqrt %18 : vector<16x1xf32>
    %20 = vector.broadcast %19 : vector<16x1xf32> to vector<16x32xf32>
    %21 = arith.mulf %0, %20 : vector<16x32xf32>
    %22 = vector.broadcast %11 : vector<1x32xf32> to vector<16x32xf32>
    %23 = arith.mulf %21, %22 : vector<16x32xf32>
    %c0_14 = arith.constant 0 : index
    %c0_15 = arith.constant 0 : index
    %c0_16 = arith.constant 0 : index
    %24 = vector.load %arg6[%c0_14, %c0_15, %c0_16] : memref<2x32x96xf32, #tpu.memory_space<vmem>>, vector<1x32x96xf32>
    %25 = vector.shape_cast %24 : vector<1x32x96xf32> to vector<32x96xf32>
    %cst_17 = arith.constant dense<0.000000e+00> : vector<16x96xf32>
    %26 = tpu.matmul %23, %25, %cst_17 {dimension_numbers = #tpu.dot_dimension_numbers<[1], [0], [0], [1], [0, 0, 1, 1], [], []>} : vector<16x32xf32>, vector<32x96xf32>, vector<16x96xf32> -> vector<16x96xf32>
    %27 = vector.extract_strided_slice %26 {offsets = [0, 0], sizes = [16, 32], strides = [1, 1]} : vector<16x96xf32> to vector<16x32xf32>
    %28 = vector.extract_strided_slice %26 {offsets = [0, 32], sizes = [16, 32], strides = [1, 1]} : vector<16x96xf32> to vector<16x32xf32>
    %29 = vector.extract_strided_slice %26 {offsets = [0, 64], sizes = [16, 32], strides = [1, 1]} : vector<16x96xf32> to vector<16x32xf32>
    %cst_18 = arith.constant dense<0.000000e+00> : vector<16x32xf32>
    %30 = tpu.matmul %27, %3, %cst_18 {dimension_numbers = #tpu.dot_dimension_numbers<[1], [0], [0], [1], [0, 0, 1, 1], [], []>} : vector<16x32xf32>, vector<32x32xf32>, vector<16x32xf32> -> vector<16x32xf32>
    %cst_19 = arith.constant dense<0.000000e+00> : vector<16x32xf32>
    %31 = tpu.matmul %28, %3, %cst_19 {dimension_numbers = #tpu.dot_dimension_numbers<[1], [0], [0], [1], [0, 0, 1, 1], [], []>} : vector<16x32xf32>, vector<32x32xf32>, vector<16x32xf32> -> vector<16x32xf32>
    %32 = arith.mulf %27, %1 : vector<16x32xf32>
    %33 = arith.mulf %30, %2 : vector<16x32xf32>
    %34 = arith.addf %32, %33 : vector<16x32xf32>
    %35 = arith.mulf %28, %1 : vector<16x32xf32>
    %36 = arith.mulf %31, %2 : vector<16x32xf32>
    %37 = arith.addf %35, %36 : vector<16x32xf32>
    %38 = arith.select %9, %34, %37 : vector<16x32xi1>, vector<16x32xf32>
    %c0_20 = arith.constant 0 : index
    %c0_21 = arith.constant 0 : index
    %c0_22 = arith.constant 0 : index
    %39 = vector.load %arg7[%c0_20, %c0_21, %c0_22] : memref<2x32x32xf32, #tpu.memory_space<vmem>>, vector<1x32x32xf32>
    %40 = vector.shape_cast %39 : vector<1x32x32xf32> to vector<32x32xf32>
    %cst_23 = arith.constant 0.000000e+00 : f32
    %41 = vector.broadcast %cst_23 : f32 to vector<16x32xf32>
    %42 = vector.extract_strided_slice %34 {offsets = [0, 0], sizes = [16, 8], strides = [1, 1]} : vector<16x32xf32> to vector<16x8xf32>
    %43 = vector.extract_strided_slice %38 {offsets = [0, 0], sizes = [16, 8], strides = [1, 1]} : vector<16x32xf32> to vector<16x8xf32>
    %44 = vector.extract_strided_slice %29 {offsets = [0, 0], sizes = [16, 8], strides = [1, 1]} : vector<16x32xf32> to vector<16x8xf32>
    %cst_24 = arith.constant dense<0.000000e+00> : vector<16x16xf32>
    %45 = tpu.matmul %42, %43, %cst_24 {dimension_numbers = #tpu.dot_dimension_numbers<[1], [1], [0], [0], [0, 0, 1, 0], [], []>} : vector<16x8xf32>, vector<16x8xf32>, vector<16x16xf32> -> vector<16x16xf32>
    %cst_25 = arith.constant 0.353553385 : f32
    %46 = vector.broadcast %cst_25 : f32 to vector<16x16xf32>
    %47 = arith.mulf %45, %46 : vector<16x16xf32>
    %48 = arith.addf %47, %4 : vector<16x16xf32>
    %cst_26 = arith.constant dense<0xFF800000> : vector<16xf32>
    %49 = vector.multi_reduction <maximumf>, %48, %cst_26 [1] : vector<16x16xf32> to vector<16xf32>
    %50 = vector.shape_cast %49 : vector<16xf32> to vector<16x1xf32>
    %51 = vector.broadcast %50 : vector<16x1xf32> to vector<16x16xf32>
    %52 = arith.subf %48, %51 : vector<16x16xf32>
    %53 = math.exp %52 : vector<16x16xf32>
    %cst_27 = arith.constant dense<0.000000e+00> : vector<16xf32>
    %54 = vector.multi_reduction <add>, %53, %cst_27 [1] : vector<16x16xf32> to vector<16xf32>
    %55 = vector.shape_cast %54 : vector<16xf32> to vector<16x1xf32>
    %56 = tpu.reciprocal %55 {approx = true} : vector<16x1xf32> -> vector<16x1xf32>
    %57 = vector.broadcast %56 : vector<16x1xf32> to vector<16x16xf32>
    %58 = arith.mulf %53, %57 : vector<16x16xf32>
    %cst_28 = arith.constant dense<0.000000e+00> : vector<16x8xf32>
    %59 = tpu.matmul %58, %44, %cst_28 {dimension_numbers = #tpu.dot_dimension_numbers<[1], [0], [0], [1], [0, 0, 1, 1], [], []>} : vector<16x16xf32>, vector<16x8xf32>, vector<16x8xf32> -> vector<16x8xf32>
    %60 = vector.extract_strided_slice %40 {offsets = [0, 0], sizes = [8, 32], strides = [1, 1]} : vector<32x32xf32> to vector<8x32xf32>
    %cst_29 = arith.constant dense<0.000000e+00> : vector<16x32xf32>
    %61 = tpu.matmul %59, %60, %cst_29 {dimension_numbers = #tpu.dot_dimension_numbers<[1], [0], [0], [1], [0, 0, 1, 1], [], []>} : vector<16x8xf32>, vector<8x32xf32>, vector<16x32xf32> -> vector<16x32xf32>
    %62 = arith.addf %41, %61 : vector<16x32xf32>
    %63 = vector.extract_strided_slice %34 {offsets = [0, 8], sizes = [16, 8], strides = [1, 1]} : vector<16x32xf32> to vector<16x8xf32>
    %64 = vector.extract_strided_slice %38 {offsets = [0, 8], sizes = [16, 8], strides = [1, 1]} : vector<16x32xf32> to vector<16x8xf32>
    %65 = vector.extract_strided_slice %29 {offsets = [0, 8], sizes = [16, 8], strides = [1, 1]} : vector<16x32xf32> to vector<16x8xf32>
    %cst_30 = arith.constant dense<0.000000e+00> : vector<16x16xf32>
    %66 = tpu.matmul %63, %64, %cst_30 {dimension_numbers = #tpu.dot_dimension_numbers<[1], [1], [0], [0], [0, 0, 1, 0], [], []>} : vector<16x8xf32>, vector<16x8xf32>, vector<16x16xf32> -> vector<16x16xf32>
    %cst_31 = arith.constant 0.353553385 : f32
    %67 = vector.broadcast %cst_31 : f32 to vector<16x16xf32>
    %68 = arith.mulf %66, %67 : vector<16x16xf32>
    %69 = arith.addf %68, %4 : vector<16x16xf32>
    %cst_32 = arith.constant dense<0xFF800000> : vector<16xf32>
    %70 = vector.multi_reduction <maximumf>, %69, %cst_32 [1] : vector<16x16xf32> to vector<16xf32>
    %71 = vector.shape_cast %70 : vector<16xf32> to vector<16x1xf32>
    %72 = vector.broadcast %71 : vector<16x1xf32> to vector<16x16xf32>
    %73 = arith.subf %69, %72 : vector<16x16xf32>
    %74 = math.exp %73 : vector<16x16xf32>
    %cst_33 = arith.constant dense<0.000000e+00> : vector<16xf32>
    %75 = vector.multi_reduction <add>, %74, %cst_33 [1] : vector<16x16xf32> to vector<16xf32>
    %76 = vector.shape_cast %75 : vector<16xf32> to vector<16x1xf32>
    %77 = tpu.reciprocal %76 {approx = true} : vector<16x1xf32> -> vector<16x1xf32>
    %78 = vector.broadcast %77 : vector<16x1xf32> to vector<16x16xf32>
    %79 = arith.mulf %74, %78 : vector<16x16xf32>
    %cst_34 = arith.constant dense<0.000000e+00> : vector<16x8xf32>
    %80 = tpu.matmul %79, %65, %cst_34 {dimension_numbers = #tpu.dot_dimension_numbers<[1], [0], [0], [1], [0, 0, 1, 1], [], []>} : vector<16x16xf32>, vector<16x8xf32>, vector<16x8xf32> -> vector<16x8xf32>
    %81 = vector.extract_strided_slice %40 {offsets = [8, 0], sizes = [8, 32], strides = [1, 1]} : vector<32x32xf32> to vector<8x32xf32>
    %cst_35 = arith.constant dense<0.000000e+00> : vector<16x32xf32>
    %82 = tpu.matmul %80, %81, %cst_35 {dimension_numbers = #tpu.dot_dimension_numbers<[1], [0], [0], [1], [0, 0, 1, 1], [], []>} : vector<16x8xf32>, vector<8x32xf32>, vector<16x32xf32> -> vector<16x32xf32>
    %83 = arith.addf %62, %82 : vector<16x32xf32>
    %84 = vector.extract_strided_slice %34 {offsets = [0, 16], sizes = [16, 8], strides = [1, 1]} : vector<16x32xf32> to vector<16x8xf32>
    %85 = vector.extract_strided_slice %38 {offsets = [0, 16], sizes = [16, 8], strides = [1, 1]} : vector<16x32xf32> to vector<16x8xf32>
    %86 = vector.extract_strided_slice %29 {offsets = [0, 16], sizes = [16, 8], strides = [1, 1]} : vector<16x32xf32> to vector<16x8xf32>
    %cst_36 = arith.constant dense<0.000000e+00> : vector<16x16xf32>
    %87 = tpu.matmul %84, %85, %cst_36 {dimension_numbers = #tpu.dot_dimension_numbers<[1], [1], [0], [0], [0, 0, 1, 0], [], []>} : vector<16x8xf32>, vector<16x8xf32>, vector<16x16xf32> -> vector<16x16xf32>
    %cst_37 = arith.constant 0.353553385 : f32
    %88 = vector.broadcast %cst_37 : f32 to vector<16x16xf32>
    %89 = arith.mulf %87, %88 : vector<16x16xf32>
    %90 = arith.addf %89, %4 : vector<16x16xf32>
    %cst_38 = arith.constant dense<0xFF800000> : vector<16xf32>
    %91 = vector.multi_reduction <maximumf>, %90, %cst_38 [1] : vector<16x16xf32> to vector<16xf32>
    %92 = vector.shape_cast %91 : vector<16xf32> to vector<16x1xf32>
    %93 = vector.broadcast %92 : vector<16x1xf32> to vector<16x16xf32>
    %94 = arith.subf %90, %93 : vector<16x16xf32>
    %95 = math.exp %94 : vector<16x16xf32>
    %cst_39 = arith.constant dense<0.000000e+00> : vector<16xf32>
    %96 = vector.multi_reduction <add>, %95, %cst_39 [1] : vector<16x16xf32> to vector<16xf32>
    %97 = vector.shape_cast %96 : vector<16xf32> to vector<16x1xf32>
    %98 = tpu.reciprocal %97 {approx = true} : vector<16x1xf32> -> vector<16x1xf32>
    %99 = vector.broadcast %98 : vector<16x1xf32> to vector<16x16xf32>
    %100 = arith.mulf %95, %99 : vector<16x16xf32>
    %cst_40 = arith.constant dense<0.000000e+00> : vector<16x8xf32>
    %101 = tpu.matmul %100, %86, %cst_40 {dimension_numbers = #tpu.dot_dimension_numbers<[1], [0], [0], [1], [0, 0, 1, 1], [], []>} : vector<16x16xf32>, vector<16x8xf32>, vector<16x8xf32> -> vector<16x8xf32>
    %102 = vector.extract_strided_slice %40 {offsets = [16, 0], sizes = [8, 32], strides = [1, 1]} : vector<32x32xf32> to vector<8x32xf32>
    %cst_41 = arith.constant dense<0.000000e+00> : vector<16x32xf32>
    %103 = tpu.matmul %101, %102, %cst_41 {dimension_numbers = #tpu.dot_dimension_numbers<[1], [0], [0], [1], [0, 0, 1, 1], [], []>} : vector<16x8xf32>, vector<8x32xf32>, vector<16x32xf32> -> vector<16x32xf32>
    %104 = arith.addf %83, %103 : vector<16x32xf32>
    %105 = vector.extract_strided_slice %34 {offsets = [0, 24], sizes = [16, 8], strides = [1, 1]} : vector<16x32xf32> to vector<16x8xf32>
    %106 = vector.extract_strided_slice %38 {offsets = [0, 24], sizes = [16, 8], strides = [1, 1]} : vector<16x32xf32> to vector<16x8xf32>
    %107 = vector.extract_strided_slice %29 {offsets = [0, 24], sizes = [16, 8], strides = [1, 1]} : vector<16x32xf32> to vector<16x8xf32>
    %cst_42 = arith.constant dense<0.000000e+00> : vector<16x16xf32>
    %108 = tpu.matmul %105, %106, %cst_42 {dimension_numbers = #tpu.dot_dimension_numbers<[1], [1], [0], [0], [0, 0, 1, 0], [], []>} : vector<16x8xf32>, vector<16x8xf32>, vector<16x16xf32> -> vector<16x16xf32>
    %cst_43 = arith.constant 0.353553385 : f32
    %109 = vector.broadcast %cst_43 : f32 to vector<16x16xf32>
    %110 = arith.mulf %108, %109 : vector<16x16xf32>
    %111 = arith.addf %110, %4 : vector<16x16xf32>
    %cst_44 = arith.constant dense<0xFF800000> : vector<16xf32>
    %112 = vector.multi_reduction <maximumf>, %111, %cst_44 [1] : vector<16x16xf32> to vector<16xf32>
    %113 = vector.shape_cast %112 : vector<16xf32> to vector<16x1xf32>
    %114 = vector.broadcast %113 : vector<16x1xf32> to vector<16x16xf32>
    %115 = arith.subf %111, %114 : vector<16x16xf32>
    %116 = math.exp %115 : vector<16x16xf32>
    %cst_45 = arith.constant dense<0.000000e+00> : vector<16xf32>
    %117 = vector.multi_reduction <add>, %116, %cst_45 [1] : vector<16x16xf32> to vector<16xf32>
    %118 = vector.shape_cast %117 : vector<16xf32> to vector<16x1xf32>
    %119 = tpu.reciprocal %118 {approx = true} : vector<16x1xf32> -> vector<16x1xf32>
    %120 = vector.broadcast %119 : vector<16x1xf32> to vector<16x16xf32>
    %121 = arith.mulf %116, %120 : vector<16x16xf32>
    %cst_46 = arith.constant dense<0.000000e+00> : vector<16x8xf32>
    %122 = tpu.matmul %121, %107, %cst_46 {dimension_numbers = #tpu.dot_dimension_numbers<[1], [0], [0], [1], [0, 0, 1, 1], [], []>} : vector<16x16xf32>, vector<16x8xf32>, vector<16x8xf32> -> vector<16x8xf32>
    %123 = vector.extract_strided_slice %40 {offsets = [24, 0], sizes = [8, 32], strides = [1, 1]} : vector<32x32xf32> to vector<8x32xf32>
    %cst_47 = arith.constant dense<0.000000e+00> : vector<16x32xf32>
    %124 = tpu.matmul %122, %123, %cst_47 {dimension_numbers = #tpu.dot_dimension_numbers<[1], [0], [0], [1], [0, 0, 1, 1], [], []>} : vector<16x8xf32>, vector<8x32xf32>, vector<16x32xf32> -> vector<16x32xf32>
    %125 = arith.addf %104, %124 : vector<16x32xf32>
    %126 = arith.addf %0, %125 : vector<16x32xf32>
    %c0_48 = arith.constant 0 : index
    %c0_49 = arith.constant 0 : index
    %c0_50 = arith.constant 0 : index
    %127 = vector.load %arg8[%c0_48, %c0_49, %c0_50] : memref<2x1x32xf32, #tpu.memory_space<vmem>>, vector<1x1x32xf32>
    %128 = vector.shape_cast %127 : vector<1x1x32xf32> to vector<1x32xf32>
    %129 = arith.mulf %126, %126 : vector<16x32xf32>
    %cst_51 = arith.constant dense<0.000000e+00> : vector<16xf32>
    %130 = vector.multi_reduction <add>, %129, %cst_51 [1] : vector<16x32xf32> to vector<16xf32>
    %131 = vector.shape_cast %130 : vector<16xf32> to vector<16x1xf32>
    %cst_52 = arith.constant 3.200000e+01 : f32
    %132 = vector.broadcast %cst_52 : f32 to vector<16x1xf32>
    %133 = arith.divf %131, %132 : vector<16x1xf32>
    %cst_53 = arith.constant 9.99999974E-6 : f32
    %134 = vector.broadcast %cst_53 : f32 to vector<16x1xf32>
    %135 = arith.addf %133, %134 : vector<16x1xf32>
    %136 = math.rsqrt %135 : vector<16x1xf32>
    %137 = vector.broadcast %136 : vector<16x1xf32> to vector<16x32xf32>
    %138 = arith.mulf %126, %137 : vector<16x32xf32>
    %139 = vector.broadcast %128 : vector<1x32xf32> to vector<16x32xf32>
    %140 = arith.mulf %138, %139 : vector<16x32xf32>
    %c0_54 = arith.constant 0 : index
    %c0_55 = arith.constant 0 : index
    %c0_56 = arith.constant 0 : index
    %141 = vector.load %arg9[%c0_54, %c0_55, %c0_56] : memref<2x32x192xf32, #tpu.memory_space<vmem>>, vector<1x32x192xf32>
    %142 = vector.shape_cast %141 : vector<1x32x192xf32> to vector<32x192xf32>
    %cst_57 = arith.constant dense<0.000000e+00> : vector<16x192xf32>
    %143 = tpu.matmul %140, %142, %cst_57 {dimension_numbers = #tpu.dot_dimension_numbers<[1], [0], [0], [1], [0, 0, 1, 1], [], []>} : vector<16x32xf32>, vector<32x192xf32>, vector<16x192xf32> -> vector<16x192xf32>
    %144 = vector.extract_strided_slice %143 {offsets = [0, 0], sizes = [16, 96], strides = [1, 1]} : vector<16x192xf32> to vector<16x96xf32>
    %145 = vector.extract_strided_slice %143 {offsets = [0, 96], sizes = [16, 96], strides = [1, 1]} : vector<16x192xf32> to vector<16x96xf32>
    %146 = arith.negf %144 : vector<16x96xf32>
    %147 = math.exp %146 : vector<16x96xf32>
    %cst_58 = arith.constant 1.000000e+00 : f32
    %148 = vector.broadcast %cst_58 : f32 to vector<16x96xf32>
    %149 = arith.addf %148, %147 : vector<16x96xf32>
    %150 = arith.divf %148, %149 : vector<16x96xf32>
    %151 = arith.mulf %144, %150 : vector<16x96xf32>
    %152 = arith.mulf %151, %145 : vector<16x96xf32>
    %c0_59 = arith.constant 0 : index
    %c0_60 = arith.constant 0 : index
    %c0_61 = arith.constant 0 : index
    %153 = vector.load %arg10[%c0_59, %c0_60, %c0_61] : memref<2x96x32xf32, #tpu.memory_space<vmem>>, vector<1x96x32xf32>
    %154 = vector.shape_cast %153 : vector<1x96x32xf32> to vector<96x32xf32>
    %cst_62 = arith.constant dense<0.000000e+00> : vector<16x32xf32>
    %155 = tpu.matmul %152, %154, %cst_62 {dimension_numbers = #tpu.dot_dimension_numbers<[1], [0], [0], [1], [0, 0, 1, 1], [], []>} : vector<16x96xf32>, vector<96x32xf32>, vector<16x32xf32> -> vector<16x32xf32>
    %156 = arith.addf %126, %155 : vector<16x32xf32>
    %c1 = arith.constant 1 : index
    %c0_63 = arith.constant 0 : index
    %c0_64 = arith.constant 0 : index
    %157 = vector.load %arg5[%c1, %c0_63, %c0_64] : memref<2x1x32xf32, #tpu.memory_space<vmem>>, vector<1x1x32xf32>
    %158 = vector.shape_cast %157 : vector<1x1x32xf32> to vector<1x32xf32>
    %159 = arith.mulf %156, %156 : vector<16x32xf32>
    %cst_65 = arith.constant dense<0.000000e+00> : vector<16xf32>
    %160 = vector.multi_reduction <add>, %159, %cst_65 [1] : vector<16x32xf32> to vector<16xf32>
    %161 = vector.shape_cast %160 : vector<16xf32> to vector<16x1xf32>
    %cst_66 = arith.constant 3.200000e+01 : f32
    %162 = vector.broadcast %cst_66 : f32 to vector<16x1xf32>
    %163 = arith.divf %161, %162 : vector<16x1xf32>
    %cst_67 = arith.constant 9.99999974E-6 : f32
    %164 = vector.broadcast %cst_67 : f32 to vector<16x1xf32>
    %165 = arith.addf %163, %164 : vector<16x1xf32>
    %166 = math.rsqrt %165 : vector<16x1xf32>
    %167 = vector.broadcast %166 : vector<16x1xf32> to vector<16x32xf32>
    %168 = arith.mulf %156, %167 : vector<16x32xf32>
    %169 = vector.broadcast %158 : vector<1x32xf32> to vector<16x32xf32>
    %170 = arith.mulf %168, %169 : vector<16x32xf32>
    %c1_68 = arith.constant 1 : index
    %c0_69 = arith.constant 0 : index
    %c0_70 = arith.constant 0 : index
    %171 = vector.load %arg6[%c1_68, %c0_69, %c0_70] : memref<2x32x96xf32, #tpu.memory_space<vmem>>, vector<1x32x96xf32>
    %172 = vector.shape_cast %171 : vector<1x32x96xf32> to vector<32x96xf32>
    %cst_71 = arith.constant dense<0.000000e+00> : vector<16x96xf32>
    %173 = tpu.matmul %170, %172, %cst_71 {dimension_numbers = #tpu.dot_dimension_numbers<[1], [0], [0], [1], [0, 0, 1, 1], [], []>} : vector<16x32xf32>, vector<32x96xf32>, vector<16x96xf32> -> vector<16x96xf32>
    %174 = vector.extract_strided_slice %173 {offsets = [0, 0], sizes = [16, 32], strides = [1, 1]} : vector<16x96xf32> to vector<16x32xf32>
    %175 = vector.extract_strided_slice %173 {offsets = [0, 32], sizes = [16, 32], strides = [1, 1]} : vector<16x96xf32> to vector<16x32xf32>
    %176 = vector.extract_strided_slice %173 {offsets = [0, 64], sizes = [16, 32], strides = [1, 1]} : vector<16x96xf32> to vector<16x32xf32>
    %cst_72 = arith.constant dense<0.000000e+00> : vector<16x32xf32>
    %177 = tpu.matmul %174, %3, %cst_72 {dimension_numbers = #tpu.dot_dimension_numbers<[1], [0], [0], [1], [0, 0, 1, 1], [], []>} : vector<16x32xf32>, vector<32x32xf32>, vector<16x32xf32> -> vector<16x32xf32>
    %cst_73 = arith.constant dense<0.000000e+00> : vector<16x32xf32>
    %178 = tpu.matmul %175, %3, %cst_73 {dimension_numbers = #tpu.dot_dimension_numbers<[1], [0], [0], [1], [0, 0, 1, 1], [], []>} : vector<16x32xf32>, vector<32x32xf32>, vector<16x32xf32> -> vector<16x32xf32>
    %179 = arith.mulf %174, %1 : vector<16x32xf32>
    %180 = arith.mulf %177, %2 : vector<16x32xf32>
    %181 = arith.addf %179, %180 : vector<16x32xf32>
    %182 = arith.mulf %175, %1 : vector<16x32xf32>
    %183 = arith.mulf %178, %2 : vector<16x32xf32>
    %184 = arith.addf %182, %183 : vector<16x32xf32>
    %185 = arith.select %9, %181, %184 : vector<16x32xi1>, vector<16x32xf32>
    %c1_74 = arith.constant 1 : index
    %c0_75 = arith.constant 0 : index
    %c0_76 = arith.constant 0 : index
    %186 = vector.load %arg7[%c1_74, %c0_75, %c0_76] : memref<2x32x32xf32, #tpu.memory_space<vmem>>, vector<1x32x32xf32>
    %187 = vector.shape_cast %186 : vector<1x32x32xf32> to vector<32x32xf32>
    %cst_77 = arith.constant 0.000000e+00 : f32
    %188 = vector.broadcast %cst_77 : f32 to vector<16x32xf32>
    %189 = vector.extract_strided_slice %181 {offsets = [0, 0], sizes = [16, 8], strides = [1, 1]} : vector<16x32xf32> to vector<16x8xf32>
    %190 = vector.extract_strided_slice %185 {offsets = [0, 0], sizes = [16, 8], strides = [1, 1]} : vector<16x32xf32> to vector<16x8xf32>
    %191 = vector.extract_strided_slice %176 {offsets = [0, 0], sizes = [16, 8], strides = [1, 1]} : vector<16x32xf32> to vector<16x8xf32>
    %cst_78 = arith.constant dense<0.000000e+00> : vector<16x16xf32>
    %192 = tpu.matmul %189, %190, %cst_78 {dimension_numbers = #tpu.dot_dimension_numbers<[1], [1], [0], [0], [0, 0, 1, 0], [], []>} : vector<16x8xf32>, vector<16x8xf32>, vector<16x16xf32> -> vector<16x16xf32>
    %cst_79 = arith.constant 0.353553385 : f32
    %193 = vector.broadcast %cst_79 : f32 to vector<16x16xf32>
    %194 = arith.mulf %192, %193 : vector<16x16xf32>
    %195 = arith.addf %194, %4 : vector<16x16xf32>
    %cst_80 = arith.constant dense<0xFF800000> : vector<16xf32>
    %196 = vector.multi_reduction <maximumf>, %195, %cst_80 [1] : vector<16x16xf32> to vector<16xf32>
    %197 = vector.shape_cast %196 : vector<16xf32> to vector<16x1xf32>
    %198 = vector.broadcast %197 : vector<16x1xf32> to vector<16x16xf32>
    %199 = arith.subf %195, %198 : vector<16x16xf32>
    %200 = math.exp %199 : vector<16x16xf32>
    %cst_81 = arith.constant dense<0.000000e+00> : vector<16xf32>
    %201 = vector.multi_reduction <add>, %200, %cst_81 [1] : vector<16x16xf32> to vector<16xf32>
    %202 = vector.shape_cast %201 : vector<16xf32> to vector<16x1xf32>
    %203 = tpu.reciprocal %202 {approx = true} : vector<16x1xf32> -> vector<16x1xf32>
    %204 = vector.broadcast %203 : vector<16x1xf32> to vector<16x16xf32>
    %205 = arith.mulf %200, %204 : vector<16x16xf32>
    %cst_82 = arith.constant dense<0.000000e+00> : vector<16x8xf32>
    %206 = tpu.matmul %205, %191, %cst_82 {dimension_numbers = #tpu.dot_dimension_numbers<[1], [0], [0], [1], [0, 0, 1, 1], [], []>} : vector<16x16xf32>, vector<16x8xf32>, vector<16x8xf32> -> vector<16x8xf32>
    %207 = vector.extract_strided_slice %187 {offsets = [0, 0], sizes = [8, 32], strides = [1, 1]} : vector<32x32xf32> to vector<8x32xf32>
    %cst_83 = arith.constant dense<0.000000e+00> : vector<16x32xf32>
    %208 = tpu.matmul %206, %207, %cst_83 {dimension_numbers = #tpu.dot_dimension_numbers<[1], [0], [0], [1], [0, 0, 1, 1], [], []>} : vector<16x8xf32>, vector<8x32xf32>, vector<16x32xf32> -> vector<16x32xf32>
    %209 = arith.addf %188, %208 : vector<16x32xf32>
    %210 = vector.extract_strided_slice %181 {offsets = [0, 8], sizes = [16, 8], strides = [1, 1]} : vector<16x32xf32> to vector<16x8xf32>
    %211 = vector.extract_strided_slice %185 {offsets = [0, 8], sizes = [16, 8], strides = [1, 1]} : vector<16x32xf32> to vector<16x8xf32>
    %212 = vector.extract_strided_slice %176 {offsets = [0, 8], sizes = [16, 8], strides = [1, 1]} : vector<16x32xf32> to vector<16x8xf32>
    %cst_84 = arith.constant dense<0.000000e+00> : vector<16x16xf32>
    %213 = tpu.matmul %210, %211, %cst_84 {dimension_numbers = #tpu.dot_dimension_numbers<[1], [1], [0], [0], [0, 0, 1, 0], [], []>} : vector<16x8xf32>, vector<16x8xf32>, vector<16x16xf32> -> vector<16x16xf32>
    %cst_85 = arith.constant 0.353553385 : f32
    %214 = vector.broadcast %cst_85 : f32 to vector<16x16xf32>
    %215 = arith.mulf %213, %214 : vector<16x16xf32>
    %216 = arith.addf %215, %4 : vector<16x16xf32>
    %cst_86 = arith.constant dense<0xFF800000> : vector<16xf32>
    %217 = vector.multi_reduction <maximumf>, %216, %cst_86 [1] : vector<16x16xf32> to vector<16xf32>
    %218 = vector.shape_cast %217 : vector<16xf32> to vector<16x1xf32>
    %219 = vector.broadcast %218 : vector<16x1xf32> to vector<16x16xf32>
    %220 = arith.subf %216, %219 : vector<16x16xf32>
    %221 = math.exp %220 : vector<16x16xf32>
    %cst_87 = arith.constant dense<0.000000e+00> : vector<16xf32>
    %222 = vector.multi_reduction <add>, %221, %cst_87 [1] : vector<16x16xf32> to vector<16xf32>
    %223 = vector.shape_cast %222 : vector<16xf32> to vector<16x1xf32>
    %224 = tpu.reciprocal %223 {approx = true} : vector<16x1xf32> -> vector<16x1xf32>
    %225 = vector.broadcast %224 : vector<16x1xf32> to vector<16x16xf32>
    %226 = arith.mulf %221, %225 : vector<16x16xf32>
    %cst_88 = arith.constant dense<0.000000e+00> : vector<16x8xf32>
    %227 = tpu.matmul %226, %212, %cst_88 {dimension_numbers = #tpu.dot_dimension_numbers<[1], [0], [0], [1], [0, 0, 1, 1], [], []>} : vector<16x16xf32>, vector<16x8xf32>, vector<16x8xf32> -> vector<16x8xf32>
    %228 = vector.extract_strided_slice %187 {offsets = [8, 0], sizes = [8, 32], strides = [1, 1]} : vector<32x32xf32> to vector<8x32xf32>
    %cst_89 = arith.constant dense<0.000000e+00> : vector<16x32xf32>
    %229 = tpu.matmul %227, %228, %cst_89 {dimension_numbers = #tpu.dot_dimension_numbers<[1], [0], [0], [1], [0, 0, 1, 1], [], []>} : vector<16x8xf32>, vector<8x32xf32>, vector<16x32xf32> -> vector<16x32xf32>
    %230 = arith.addf %209, %229 : vector<16x32xf32>
    %231 = vector.extract_strided_slice %181 {offsets = [0, 16], sizes = [16, 8], strides = [1, 1]} : vector<16x32xf32> to vector<16x8xf32>
    %232 = vector.extract_strided_slice %185 {offsets = [0, 16], sizes = [16, 8], strides = [1, 1]} : vector<16x32xf32> to vector<16x8xf32>
    %233 = vector.extract_strided_slice %176 {offsets = [0, 16], sizes = [16, 8], strides = [1, 1]} : vector<16x32xf32> to vector<16x8xf32>
    %cst_90 = arith.constant dense<0.000000e+00> : vector<16x16xf32>
    %234 = tpu.matmul %231, %232, %cst_90 {dimension_numbers = #tpu.dot_dimension_numbers<[1], [1], [0], [0], [0, 0, 1, 0], [], []>} : vector<16x8xf32>, vector<16x8xf32>, vector<16x16xf32> -> vector<16x16xf32>
    %cst_91 = arith.constant 0.353553385 : f32
    %235 = vector.broadcast %cst_91 : f32 to vector<16x16xf32>
    %236 = arith.mulf %234, %235 : vector<16x16xf32>
    %237 = arith.addf %236, %4 : vector<16x16xf32>
    %cst_92 = arith.constant dense<0xFF800000> : vector<16xf32>
    %238 = vector.multi_reduction <maximumf>, %237, %cst_92 [1] : vector<16x16xf32> to vector<16xf32>
    %239 = vector.shape_cast %238 : vector<16xf32> to vector<16x1xf32>
    %240 = vector.broadcast %239 : vector<16x1xf32> to vector<16x16xf32>
    %241 = arith.subf %237, %240 : vector<16x16xf32>
    %242 = math.exp %241 : vector<16x16xf32>
    %cst_93 = arith.constant dense<0.000000e+00> : vector<16xf32>
    %243 = vector.multi_reduction <add>, %242, %cst_93 [1] : vector<16x16xf32> to vector<16xf32>
    %244 = vector.shape_cast %243 : vector<16xf32> to vector<16x1xf32>
    %245 = tpu.reciprocal %244 {approx = true} : vector<16x1xf32> -> vector<16x1xf32>
    %246 = vector.broadcast %245 : vector<16x1xf32> to vector<16x16xf32>
    %247 = arith.mulf %242, %246 : vector<16x16xf32>
    %cst_94 = arith.constant dense<0.000000e+00> : vector<16x8xf32>
    %248 = tpu.matmul %247, %233, %cst_94 {dimension_numbers = #tpu.dot_dimension_numbers<[1], [0], [0], [1], [0, 0, 1, 1], [], []>} : vector<16x16xf32>, vector<16x8xf32>, vector<16x8xf32> -> vector<16x8xf32>
    %249 = vector.extract_strided_slice %187 {offsets = [16, 0], sizes = [8, 32], strides = [1, 1]} : vector<32x32xf32> to vector<8x32xf32>
    %cst_95 = arith.constant dense<0.000000e+00> : vector<16x32xf32>
    %250 = tpu.matmul %248, %249, %cst_95 {dimension_numbers = #tpu.dot_dimension_numbers<[1], [0], [0], [1], [0, 0, 1, 1], [], []>} : vector<16x8xf32>, vector<8x32xf32>, vector<16x32xf32> -> vector<16x32xf32>
    %251 = arith.addf %230, %250 : vector<16x32xf32>
    %252 = vector.extract_strided_slice %181 {offsets = [0, 24], sizes = [16, 8], strides = [1, 1]} : vector<16x32xf32> to vector<16x8xf32>
    %253 = vector.extract_strided_slice %185 {offsets = [0, 24], sizes = [16, 8], strides = [1, 1]} : vector<16x32xf32> to vector<16x8xf32>
    %254 = vector.extract_strided_slice %176 {offsets = [0, 24], sizes = [16, 8], strides = [1, 1]} : vector<16x32xf32> to vector<16x8xf32>
    %cst_96 = arith.constant dense<0.000000e+00> : vector<16x16xf32>
    %255 = tpu.matmul %252, %253, %cst_96 {dimension_numbers = #tpu.dot_dimension_numbers<[1], [1], [0], [0], [0, 0, 1, 0], [], []>} : vector<16x8xf32>, vector<16x8xf32>, vector<16x16xf32> -> vector<16x16xf32>
    %cst_97 = arith.constant 0.353553385 : f32
    %256 = vector.broadcast %cst_97 : f32 to vector<16x16xf32>
    %257 = arith.mulf %255, %256 : vector<16x16xf32>
    %258 = arith.addf %257, %4 : vector<16x16xf32>
    %cst_98 = arith.constant dense<0xFF800000> : vector<16xf32>
    %259 = vector.multi_reduction <maximumf>, %258, %cst_98 [1] : vector<16x16xf32> to vector<16xf32>
    %260 = vector.shape_cast %259 : vector<16xf32> to vector<16x1xf32>
    %261 = vector.broadcast %260 : vector<16x1xf32> to vector<16x16xf32>
    %262 = arith.subf %258, %261 : vector<16x16xf32>
    %263 = math.exp %262 : vector<16x16xf32>
    %cst_99 = arith.constant dense<0.000000e+00> : vector<16xf32>
    %264 = vector.multi_reduction <add>, %263, %cst_99 [1] : vector<16x16xf32> to vector<16xf32>
    %265 = vector.shape_cast %264 : vector<16xf32> to vector<16x1xf32>
    %266 = tpu.reciprocal %265 {approx = true} : vector<16x1xf32> -> vector<16x1xf32>
    %267 = vector.broadcast %266 : vector<16x1xf32> to vector<16x16xf32>
    %268 = arith.mulf %263, %267 : vector<16x16xf32>
    %cst_100 = arith.constant dense<0.000000e+00> : vector<16x8xf32>
    %269 = tpu.matmul %268, %254, %cst_100 {dimension_numbers = #tpu.dot_dimension_numbers<[1], [0], [0], [1], [0, 0, 1, 1], [], []>} : vector<16x16xf32>, vector<16x8xf32>, vector<16x8xf32> -> vector<16x8xf32>
    %270 = vector.extract_strided_slice %187 {offsets = [24, 0], sizes = [8, 32], strides = [1, 1]} : vector<32x32xf32> to vector<8x32xf32>
    %cst_101 = arith.constant dense<0.000000e+00> : vector<16x32xf32>
    %271 = tpu.matmul %269, %270, %cst_101 {dimension_numbers = #tpu.dot_dimension_numbers<[1], [0], [0], [1], [0, 0, 1, 1], [], []>} : vector<16x8xf32>, vector<8x32xf32>, vector<16x32xf32> -> vector<16x32xf32>
    %272 = arith.addf %251, %271 : vector<16x32xf32>
    %273 = arith.addf %156, %272 : vector<16x32xf32>
    %c1_102 = arith.constant 1 : index
    %c0_103 = arith.constant 0 : index
    %c0_104 = arith.constant 0 : index
    %274 = vector.load %arg8[%c1_102, %c0_103, %c0_104] : memref<2x1x32xf32, #tpu.memory_space<vmem>>, vector<1x1x32xf32>
    %275 = vector.shape_cast %274 : vector<1x1x32xf32> to vector<1x32xf32>
    %276 = arith.mulf %273, %273 : vector<16x32xf32>
    %cst_105 = arith.constant dense<0.000000e+00> : vector<16xf32>
    %277 = vector.multi_reduction <add>, %276, %cst_105 [1] : vector<16x32xf32> to vector<16xf32>
    %278 = vector.shape_cast %277 : vector<16xf32> to vector<16x1xf32>
    %cst_106 = arith.constant 3.200000e+01 : f32
    %279 = vector.broadcast %cst_106 : f32 to vector<16x1xf32>
    %280 = arith.divf %278, %279 : vector<16x1xf32>
    %cst_107 = arith.constant 9.99999974E-6 : f32
    %281 = vector.broadcast %cst_107 : f32 to vector<16x1xf32>
    %282 = arith.addf %280, %281 : vector<16x1xf32>
    %283 = math.rsqrt %282 : vector<16x1xf32>
    %284 = vector.broadcast %283 : vector<16x1xf32> to vector<16x32xf32>
    %285 = arith.mulf %273, %284 : vector<16x32xf32>
    %286 = vector.broadcast %275 : vector<1x32xf32> to vector<16x32xf32>
    %287 = arith.mulf %285, %286 : vector<16x32xf32>
    %c1_108 = arith.constant 1 : index
    %c0_109 = arith.constant 0 : index
    %c0_110 = arith.constant 0 : index
    %288 = vector.load %arg9[%c1_108, %c0_109, %c0_110] : memref<2x32x192xf32, #tpu.memory_space<vmem>>, vector<1x32x192xf32>
    %289 = vector.shape_cast %288 : vector<1x32x192xf32> to vector<32x192xf32>
    %cst_111 = arith.constant dense<0.000000e+00> : vector<16x192xf32>
    %290 = tpu.matmul %287, %289, %cst_111 {dimension_numbers = #tpu.dot_dimension_numbers<[1], [0], [0], [1], [0, 0, 1, 1], [], []>} : vector<16x32xf32>, vector<32x192xf32>, vector<16x192xf32> -> vector<16x192xf32>
    %291 = vector.extract_strided_slice %290 {offsets = [0, 0], sizes = [16, 96], strides = [1, 1]} : vector<16x192xf32> to vector<16x96xf32>
    %292 = vector.extract_strided_slice %290 {offsets = [0, 96], sizes = [16, 96], strides = [1, 1]} : vector<16x192xf32> to vector<16x96xf32>
    %293 = arith.negf %291 : vector<16x96xf32>
    %294 = math.exp %293 : vector<16x96xf32>
    %cst_112 = arith.constant 1.000000e+00 : f32
    %295 = vector.broadcast %cst_112 : f32 to vector<16x96xf32>
    %296 = arith.addf %295, %294 : vector<16x96xf32>
    %297 = arith.divf %295, %296 : vector<16x96xf32>
    %298 = arith.mulf %291, %297 : vector<16x96xf32>
    %299 = arith.mulf %298, %292 : vector<16x96xf32>
    %c1_113 = arith.constant 1 : index
    %c0_114 = arith.constant 0 : index
    %c0_115 = arith.constant 0 : index
    %300 = vector.load %arg10[%c1_113, %c0_114, %c0_115] : memref<2x96x32xf32, #tpu.memory_space<vmem>>, vector<1x96x32xf32>
    %301 = vector.shape_cast %300 : vector<1x96x32xf32> to vector<96x32xf32>
    %cst_116 = arith.constant dense<0.000000e+00> : vector<16x32xf32>
    %302 = tpu.matmul %299, %301, %cst_116 {dimension_numbers = #tpu.dot_dimension_numbers<[1], [0], [0], [1], [0, 0, 1, 1], [], []>} : vector<16x96xf32>, vector<96x32xf32>, vector<16x32xf32> -> vector<16x32xf32>
    %303 = arith.addf %273, %302 : vector<16x32xf32>
    %c0_117 = arith.constant 0 : index
    %c0_118 = arith.constant 0 : index
    %304 = vector.load %arg11[%c0_117, %c0_118] : memref<1x32xf32, #tpu.memory_space<vmem>>, vector<1x32xf32>
    %305 = arith.mulf %303, %303 : vector<16x32xf32>
    %cst_119 = arith.constant dense<0.000000e+00> : vector<16xf32>
    %306 = vector.multi_reduction <add>, %305, %cst_119 [1] : vector<16x32xf32> to vector<16xf32>
    %307 = vector.shape_cast %306 : vector<16xf32> to vector<16x1xf32>
    %cst_120 = arith.constant 3.200000e+01 : f32
    %308 = vector.broadcast %cst_120 : f32 to vector<16x1xf32>
    %309 = arith.divf %307, %308 : vector<16x1xf32>
    %cst_121 = arith.constant 9.99999974E-6 : f32
    %310 = vector.broadcast %cst_121 : f32 to vector<16x1xf32>
    %311 = arith.addf %309, %310 : vector<16x1xf32>
    %312 = math.rsqrt %311 : vector<16x1xf32>
    %313 = vector.broadcast %312 : vector<16x1xf32> to vector<16x32xf32>
    %314 = arith.mulf %303, %313 : vector<16x32xf32>
    %315 = vector.broadcast %304 : vector<1x32xf32> to vector<16x32xf32>
    %316 = arith.mulf %314, %315 : vector<16x32xf32>
    %c0_122 = arith.constant 0 : index
    %c0_123 = arith.constant 0 : index
    %317 = vector.load %arg12[%c0_122, %c0_123] : memref<32x128xf32, #tpu.memory_space<vmem>>, vector<32x128xf32>
    %cst_124 = arith.constant dense<0.000000e+00> : vector<16x128xf32>
    %318 = tpu.matmul %316, %317, %cst_124 {dimension_numbers = #tpu.dot_dimension_numbers<[1], [0], [0], [1], [0, 0, 1, 1], [], []>} : vector<16x32xf32>, vector<32x128xf32>, vector<16x128xf32> -> vector<16x128xf32>
    %c0_125 = arith.constant 0 : index
    %c0_126 = arith.constant 0 : index
    %319 = vector.load %arg13[%c0_125, %c0_126] : memref<16x128xf32, #tpu.memory_space<vmem>>, vector<16x128xf32>
    tpu.vector_store %arg13[%c0_125, %c0_126], %318 {strides = array<i32>} : memref<16x128xf32, #tpu.memory_space<vmem>>, vector<16x128xf32>,
    return
  }
}

</mosaic_0001>

<llo_original>
// kernel: transformer_forward.1
$region0: #{transformer_forward.1}
  #allocation0 [shape = 'u32[]', space=smem, size = 0x4, offset = 0x4, fixed_abs, tag = 'smem constant byte address 0x4 - core index']
  #allocation1 [shape = 'u32[144,128]{1,0:T(1,128)}', space=vmem, size = 0x12000, scoped, tag = 'internal scratch']
  %s0 = inlined_call_operand.vmem [shape: f32[16,32], index: 0, kind: input, shape index: {}]
  %s1 = inlined_call_operand.vmem [shape: f32[16,32], index: 1, kind: input, shape index: {}]
  %s2 = inlined_call_operand.vmem [shape: f32[16,32], index: 2, kind: input, shape index: {}]
  %s3 = inlined_call_operand.vmem [shape: f32[32,32], index: 3, kind: input, shape index: {}]
  %s4 = inlined_call_operand.vmem [shape: f32[16,16], index: 4, kind: input, shape index: {}]
  %s5 = inlined_call_operand.vmem [shape: f32[2,1,32], index: 5, kind: input, shape index: {}]
  %s6 = inlined_call_operand.vmem [shape: f32[2,32,96], index: 6, kind: input, shape index: {}]
  %s7 = inlined_call_operand.vmem [shape: f32[2,32,32], index: 7, kind: input, shape index: {}]
  %s8 = inlined_call_operand.vmem [shape: f32[2,1,32], index: 8, kind: input, shape index: {}]
  %s9 = inlined_call_operand.vmem [shape: f32[2,32,192], index: 9, kind: input, shape index: {}]
  %s10 = inlined_call_operand.vmem [shape: f32[2,96,32], index: 10, kind: input, shape index: {}]
  %s11 = inlined_call_operand.vmem [shape: f32[1,32], index: 11, kind: input, shape index: {}]
  %s12 = inlined_call_operand.vmem [shape: f32[32,128], index: 12, kind: input, shape index: {}]
  %s13 = inlined_call_operand.vmem [shape: f32[16,128], index: 13, kind: output, shape index: {}]
  %s14 = sld [smem:[#allocation0]]
  $region62: #{transformer_forward.1} parent=0
    _
  %s16 = ssub.s32 1, %s14
  %s17 = scalar_select 0, %s16, %s14
  // Predicated region
  $region2: #{transformer_forward.1} parent=0 // pred_check
    _
  $region3: #{transformer_forward.1} parent=0 // pred_check_branch
    %19 = sbr.rel (0) target = $region5
  $region4: #{transformer_forward.1} parent=0 // pred_region
    _
  $region5: #{transformer_forward.1} parent=0 // pred_fallthru
    _
  // Predicated region
  $region6: #{transformer_forward.1} parent=0 // pred_check
    _
  $region7: #{transformer_forward.1} parent=0 // pred_check_branch
    %21 = sbr.rel (0) target = $region9
  $region8: #{transformer_forward.1} parent=0 // pred_region
    _
  $region9: #{transformer_forward.1} parent=0 // pred_fallthru
    _
  // Predicated region
  $region10: #{transformer_forward.1} parent=0 // pred_check
    _
  $region11: #{transformer_forward.1} parent=0 // pred_check_branch
    %23 = sbr.rel (0) target = $region13
  $region12: #{transformer_forward.1} parent=0 // pred_region
    _
  $region13: #{transformer_forward.1} parent=0 // pred_fallthru
    _
  // Predicated region
  $region14: #{transformer_forward.1} parent=0 // pred_check
    _
  $region15: #{transformer_forward.1} parent=0 // pred_check_branch
    %25 = sbr.rel (0) target = $region17
  $region16: #{transformer_forward.1} parent=0 // pred_region
    _
  $region17: #{transformer_forward.1} parent=0 // pred_fallthru
    _
  // Predicated region
  $region18: #{transformer_forward.1} parent=0 // pred_check
    _
  $region19: #{transformer_forward.1} parent=0 // pred_check_branch
    %27 = sbr.rel (0) target = $region21
  $region20: #{transformer_forward.1} parent=0 // pred_region
    _
  $region21: #{transformer_forward.1} parent=0 // pred_fallthru
    _
  // Predicated region
  $region22: #{transformer_forward.1} parent=0 // pred_check
    _
  $region23: #{transformer_forward.1} parent=0 // pred_check_branch
    %29 = sbr.rel (0) target = $region25
  $region24: #{transformer_forward.1} parent=0 // pred_region
    _
  $region25: #{transformer_forward.1} parent=0 // pred_fallthru
    _
  // Predicated region
  $region26: #{transformer_forward.1} parent=0 // pred_check
    _
  $region27: #{transformer_forward.1} parent=0 // pred_check_branch
    %31 = sbr.rel (0) target = $region29
  $region28: #{transformer_forward.1} parent=0 // pred_region
    _
  $region29: #{transformer_forward.1} parent=0 // pred_fallthru
    _
  // Predicated region
  $region30: #{transformer_forward.1} parent=0 // pred_check
    _
  $region31: #{transformer_forward.1} parent=0 // pred_check_branch
    %33 = sbr.rel (0) target = $region33
  $region32: #{transformer_forward.1} parent=0 // pred_region
    _
  $region33: #{transformer_forward.1} parent=0 // pred_fallthru
    _
  // Predicated region
  $region34: #{transformer_forward.1} parent=0 // pred_check
    _
  $region35: #{transformer_forward.1} parent=0 // pred_check_branch
    %35 = sbr.rel (0) target = $region37
  $region36: #{transformer_forward.1} parent=0 // pred_region
    _
  $region37: #{transformer_forward.1} parent=0 // pred_fallthru
    _
  // Predicated region
  $region38: #{transformer_forward.1} parent=0 // pred_check
    _
  $region39: #{transformer_forward.1} parent=0 // pred_check_branch
    %37 = sbr.rel (0) target = $region41
  $region40: #{transformer_forward.1} parent=0 // pred_region
    _
  $region41: #{transformer_forward.1} parent=0 // pred_fallthru
    _
  // Predicated region
  $region42: #{transformer_forward.1} parent=0 // pred_check
    _
  $region43: #{transformer_forward.1} parent=0 // pred_check_branch
    %39 = sbr.rel (0) target = $region45
  $region44: #{transformer_forward.1} parent=0 // pred_region
    _
  $region45: #{transformer_forward.1} parent=0 // pred_fallthru
    _
  // Predicated region
  $region46: #{transformer_forward.1} parent=0 // pred_check
    _
  $region47: #{transformer_forward.1} parent=0 // pred_check_branch
    %41 = sbr.rel (0) target = $region49
  $region48: #{transformer_forward.1} parent=0 // pred_region
    _
  $region49: #{transformer_forward.1} parent=0 // pred_fallthru
    _
  // Predicated region
  $region50: #{transformer_forward.1} parent=0 // pred_check
    _
  $region51: #{transformer_forward.1} parent=0 // pred_check_branch
    %43 = sbr.rel (0) target = $region53
  $region52: #{transformer_forward.1} parent=0 // pred_region
    _
  $region53: #{transformer_forward.1} parent=0 // pred_fallthru
    _
  %v44 = vld [vmem:[%s0] sm:$0xff]
  %v45 = vld [vmem:[%s0 + $0x8] sm:$0xff]
  %v46 = vld [vmem:[%s1] sm:$0xff]
  %v47 = vld [vmem:[%s1 + $0x8] sm:$0xff]
  %v48 = vld [vmem:[%s2] sm:$0xff]
  %v49 = vld [vmem:[%s2 + $0x8] sm:$0xff]
  %v50 = vld [vmem:[%s3] sm:$0xff]
  %v51 = vld [vmem:[%s3 + $0x8] sm:$0xff]
  %v52 = vld [vmem:[%s3 + $0x10] sm:$0xff]
  %v53 = vld [vmem:[%s3 + $0x18] sm:$0xff]
  %v54 = vld [vmem:[%s4] sm:$0xff]
  %v55 = vld [vmem:[%s4 + $0x8] sm:$0xff]
  %v56 = vlaneseq
  %v57 = vand.u32 %v56, 127
  %v58 = vand.u32 %v57, 1
  %vm59 = vcmp.eq.s32.totalorder %v58, 0
  %v60 = vld [vmem:[%s5] sm:$0x1]
  %v61 = vmul.f32 %v44, %v44
  %v62 = vmul.f32 %v45, %v45
  %vm63 = vcmask 261120
  %v64 = vsel %vm63, %v61, 0.0
  %65 = vadd.xlane.f32.xlu0 %v64
  %v66 = vpop.xlane.xlu0 %65
  %v67 = vsel %vm63, %v62, 0.0
  %68 = vadd.xlane.f32.xlu0 %v67
  %v69 = vpop.xlane.xlu0 %68
  %v70 = vrcp.pop 32.0
  %v71 = vmul.f32 %v66, %v70
  %v72 = vmul.f32 %v69, %v70
  %v73 = vadd.f32 %v71, 1e-05
  %v74 = vadd.f32 %v72, 1e-05
  %v75 = vrsqrt.pop %v73
  %v76 = vrsqrt.pop %v74
  %v77 = vmul.f32 %v44, %v75
  %v78 = vmul.f32 %v45, %v76
  %v80 = vlaneseq
  %v81 = vshrl.u32 %v80, 7
  %v82 = vsub.s32 0, %v81
  %v83 = vrot.slane %v60, %v82
  %v85 = vmul.f32 %v77, %v83
  %v86 = vmul.f32 %v78, %v83
  %v87 = vld [vmem:[%s6] sm:$0xff]
  %v88 = vld [vmem:[%s6 + $0x8] sm:$0xff]
  %v89 = vld [vmem:[%s6 + $0x10] sm:$0xff]
  %v90 = vld [vmem:[%s6 + $0x18] sm:$0xff]
  %v92 = vsel %vm63, %v85, 0
  %v95 = vsel %vm63, %v86, 0
  %97 = vmatprep.subr.mxu0 0.0
  %98 = vmatpush1.msra.mxu0 %v87
  %99 = vmatprep.subr.mxu0 0.0
  %100 = vmatpush1.msra.mxu0 %v88
  %101 = vmatprep.subr.mxu0 0.0
  %102 = vmatpush1.msra.mxu0 %v89
  %103 = vmatprep.subr.mxu0 0.0
  %104 = vmatpush1.msra.mxu0 %v90
  %105 = vmatprep.subr.mxu0 0.0
  %106 = vmatpush1.msra.mxu0 0.0
  %107 = vmatprep.subr.mxu0 0.0
  %108 = vmatpush1.msra.mxu0 0.0
  %109 = vmatprep.subr.mxu0 0.0
  %110 = vmatpush1.msra.mxu0 0.0
  %111 = vmatprep.subr.mxu0 0.0
  %112 = vmatpush1.msra.mxu0 0.0
  %113 = vmatprep.subr.mxu0 0.0
  %114 = vmatpush1.msra.mxu0 0.0
  %115 = vmatprep.subr.mxu0 0.0
  %116 = vmatpush1.msra.mxu0 0.0
  %117 = vmatprep.subr.mxu0 0.0
  %118 = vmatpush1.msra.mxu0 0.0
  %119 = vmatprep.subr.mxu0 0.0
  %120 = vmatpush1.msra.mxu0 0.0
  %121 = vmatprep.subr.mxu0 0.0
  %122 = vmatpush1.msra.mxu0 0.0
  %123 = vmatprep.subr.mxu0 0.0
  %124 = vmatpush1.msra.mxu0 0.0
  %125 = vmatprep.subr.mxu0 0.0
  %126 = vmatpush1.msra.mxu0 0.0
  %127 = vmatprep.subr.mxu0 0.0
  %128 = vmatpush1.msra.mxu0 0.0
  %129 = vmatprep.subr.mxu0 0.0
  %130 = vmatpush1.msra.mxu0 0.0
  %131 = vmatprep.subr.mxu0 0.0
  %132 = vmatpush1.msra.mxu0 0.0
  %133 = vmatprep.subr.mxu0 0.0
  %134 = vmatpush1.msra.mxu0 0.0
  %135 = vmatprep.subr.mxu0 0.0
  %136 = vmatpush1.msra.mxu0 0.0
  %137 = vmatprep.subr.mxu0 0.0
  %138 = vmatpush1.msra.mxu0 0.0
  %139 = vmatprep.subr.mxu0 0.0
  %140 = vmatpush1.msra.mxu0 0.0
  %141 = vmatprep.subr.mxu0 0.0
  %142 = vmatpush1.msra.mxu0 0.0
  %143 = vmatprep.subr.mxu0 0.0
  %144 = vmatpush1.msra.mxu0 0.0
  %145 = vmatprep.subr.mxu0 0.0
  %146 = vmatpush1.msra.mxu0 0.0
  %147 = vmatprep.subr.mxu0 0.0
  %148 = vmatpush1.msra.mxu0 0.0
  %149 = vmatprep.subr.mxu0 0.0
  %150 = vmatpush1.msra.mxu0 0.0
  %151 = vmatprep.subr.mxu0 0.0
  %152 = vmatpush1.msra.mxu0 0.0
  %153 = vmatprep.subr.mxu0 0.0
  %154 = vmatpush1.msra.mxu0 0.0
  %155 = vmatprep.subr.mxu0 0.0
  %156 = vmatpush1.msra.mxu0 0.0
  %157 = vmatprep.subr.mxu0 0.0
  %158 = vmatpush1.msra.mxu0 0.0
  %159 = vmatprep.subr.mxu0 0.0
  %160 = vmatpush1.msra.mxu0 0.0
  %161 = vmatprep.mubr.f32.mxu0 0.0
  %162 = vmatmul.mubr.f32.gmra.mrb[0].mxu0 %v92
  %v163 = vpop.f32.mrb[0].mxu0
  %v164 = vadd.f32 0.0, %v163
  %v165 = vpop.f32.mrb[0].mxu0
  %166 = vmatprep.mubr.f32.mxu0 0.0
  %167 = vmatmul.mubr.f32.gmra.mrb[0].mxu0 %v95
  %v168 = vpop.f32.mrb[0].mxu0
  %v169 = vadd.f32 0.0, %v168
  %v170 = vpop.f32.mrb[0].mxu0
  %171 = vdwg.mxu0
  %v173 = vsel %vm63, %v164, 0
  %v176 = vsel %vm63, %v169, 0
  %178 = vmatprep.subr.mxu0 0.0
  %179 = vmatpush1.msra.mxu0 %v50
  %180 = vmatprep.subr.mxu0 0.0
  %181 = vmatpush1.msra.mxu0 %v51
  %182 = vmatprep.subr.mxu0 0.0
  %183 = vmatpush1.msra.mxu0 %v52
  %184 = vmatprep.subr.mxu0 0.0
  %185 = vmatpush1.msra.mxu0 %v53
  %186 = vmatprep.subr.mxu0 0.0
  %187 = vmatpush1.msra.mxu0 0.0
  %188 = vmatprep.subr.mxu0 0.0
  %189 = vmatpush1.msra.mxu0 0.0
  %190 = vmatprep.subr.mxu0 0.0
  %191 = vmatpush1.msra.mxu0 0.0
  %192 = vmatprep.subr.mxu0 0.0
  %193 = vmatpush1.msra.mxu0 0.0
  %194 = vmatprep.subr.mxu0 0.0
  %195 = vmatpush1.msra.mxu0 0.0
  %196 = vmatprep.subr.mxu0 0.0
  %197 = vmatpush1.msra.mxu0 0.0
  %198 = vmatprep.subr.mxu0 0.0
  %199 = vmatpush1.msra.mxu0 0.0
  %200 = vmatprep.subr.mxu0 0.0
  %201 = vmatpush1.msra.mxu0 0.0
  %202 = vmatprep.subr.mxu0 0.0
  %203 = vmatpush1.msra.mxu0 0.0
  %204 = vmatprep.subr.mxu0 0.0
  %205 = vmatpush1.msra.mxu0 0.0
  %206 = vmatprep.subr.mxu0 0.0
  %207 = vmatpush1.msra.mxu0 0.0
  %208 = vmatprep.subr.mxu0 0.0
  %209 = vmatpush1.msra.mxu0 0.0
  %210 = vmatprep.subr.mxu0 0.0
  %211 = vmatpush1.msra.mxu0 0.0
  %212 = vmatprep.subr.mxu0 0.0
  %213 = vmatpush1.msra.mxu0 0.0
  %214 = vmatprep.subr.mxu0 0.0
  %215 = vmatpush1.msra.mxu0 0.0
  %216 = vmatprep.subr.mxu0 0.0
  %217 = vmatpush1.msra.mxu0 0.0
  %218 = vmatprep.subr.mxu0 0.0
  %219 = vmatpush1.msra.mxu0 0.0
  %220 = vmatprep.subr.mxu0 0.0
  %221 = vmatpush1.msra.mxu0 0.0
  %222 = vmatprep.subr.mxu0 0.0
  %223 = vmatpush1.msra.mxu0 0.0
  %224 = vmatprep.subr.mxu0 0.0
  %225 = vmatpush1.msra.mxu0 0.0
  %226 = vmatprep.subr.mxu0 0.0
  %227 = vmatpush1.msra.mxu0 0.0
  %228 = vmatprep.subr.mxu0 0.0
  %229 = vmatpush1.msra.mxu0 0.0
  %230 = vmatprep.subr.mxu0 0.0
  %231 = vmatpush1.msra.mxu0 0.0
  %232 = vmatprep.subr.mxu0 0.0
  %233 = vmatpush1.msra.mxu0 0.0
  %234 = vmatprep.subr.mxu0 0.0
  %235 = vmatpush1.msra.mxu0 0.0
  %236 = vmatprep.subr.mxu0 0.0
  %237 = vmatpush1.msra.mxu0 0.0
  %238 = vmatprep.subr.mxu0 0.0
  %239 = vmatpush1.msra.mxu0 0.0
  %240 = vmatprep.subr.mxu0 0.0
  %241 = vmatpush1.msra.mxu0 0.0
  %242 = vmatprep.mubr.f32.mxu0 0.0
  %243 = vmatmul.mubr.f32.gmra.mrb[0].mxu0 %v173
  %v244 = vpop.f32.mrb[0].mxu0
  %v245 = vadd.f32 0.0, %v244
  %v246 = vpop.f32.mrb[0].mxu0
  %247 = vmatprep.mubr.f32.mxu0 0.0
  %248 = vmatmul.mubr.f32.gmra.mrb[0].mxu0 %v176
  %v249 = vpop.f32.mrb[0].mxu0
  %v250 = vadd.f32 0.0, %v249
  %v251 = vpop.f32.mrb[0].mxu0
  %252 = vdwg.mxu0
  %253 = vrot.lane.b32.xlu0 %v164, 96
  %v254 = vpop.permute.xlu0 %253
  %255 = vrot.lane.b32.xlu0 %v169, 96
  %v256 = vpop.permute.xlu0 %255
  %v257 = vsel %vm63, %v254, 0
  %v259 = vsel %vm63, %v256, 0
  %261 = vmatprep.subr.mxu0 0.0
  %262 = vmatpush1.msra.mxu0 %v50
  %263 = vmatprep.subr.mxu0 0.0
  %264 = vmatpush1.msra.mxu0 %v51
  %265 = vmatprep.subr.mxu0 0.0
  %266 = vmatpush1.msra.mxu0 %v52
  %267 = vmatprep.subr.mxu0 0.0
  %268 = vmatpush1.msra.mxu0 %v53
  %269 = vmatprep.subr.mxu0 0.0
  %270 = vmatpush1.msra.mxu0 0.0
  %271 = vmatprep.subr.mxu0 0.0
  %272 = vmatpush1.msra.mxu0 0.0
  %273 = vmatprep.subr.mxu0 0.0
  %274 = vmatpush1.msra.mxu0 0.0
  %275 = vmatprep.subr.mxu0 0.0
  %276 = vmatpush1.msra.mxu0 0.0
  %277 = vmatprep.subr.mxu0 0.0
  %278 = vmatpush1.msra.mxu0 0.0
  %279 = vmatprep.subr.mxu0 0.0
  %280 = vmatpush1.msra.mxu0 0.0
  %281 = vmatprep.subr.mxu0 0.0
  %282 = vmatpush1.msra.mxu0 0.0
  %283 = vmatprep.subr.mxu0 0.0
  %284 = vmatpush1.msra.mxu0 0.0
  %285 = vmatprep.subr.mxu0 0.0
  %286 = vmatpush1.msra.mxu0 0.0
  %287 = vmatprep.subr.mxu0 0.0
  %288 = vmatpush1.msra.mxu0 0.0
  %289 = vmatprep.subr.mxu0 0.0
  %290 = vmatpush1.msra.mxu0 0.0
  %291 = vmatprep.subr.mxu0 0.0
  %292 = vmatpush1.msra.mxu0 0.0
  %293 = vmatprep.subr.mxu0 0.0
  %294 = vmatpush1.msra.mxu0 0.0
  %295 = vmatprep.subr.mxu0 0.0
  %296 = vmatpush1.msra.mxu0 0.0
  %297 = vmatprep.subr.mxu0 0.0
  %298 = vmatpush1.msra.mxu0 0.0
  %299 = vmatprep.subr.mxu0 0.0
  %300 = vmatpush1.msra.mxu0 0.0
  %301 = vmatprep.subr.mxu0 0.0
  %302 = vmatpush1.msra.mxu0 0.0
  %303 = vmatprep.subr.mxu0 0.0
  %304 = vmatpush1.msra.mxu0 0.0
  %305 = vmatprep.subr.mxu0 0.0
  %306 = vmatpush1.msra.mxu0 0.0
  %307 = vmatprep.subr.mxu0 0.0
  %308 = vmatpush1.msra.mxu0 0.0
  %309 = vmatprep.subr.mxu0 0.0
  %310 = vmatpush1.msra.mxu0 0.0
  %311 = vmatprep.subr.mxu0 0.0
  %312 = vmatpush1.msra.mxu0 0.0
  %313 = vmatprep.subr.mxu0 0.0
  %314 = vmatpush1.msra.mxu0 0.0
  %315 = vmatprep.subr.mxu0 0.0
  %316 = vmatpush1.msra.mxu0 0.0
  %317 = vmatprep.subr.mxu0 0.0
  %318 = vmatpush1.msra.mxu0 0.0
  %319 = vmatprep.subr.mxu0 0.0
  %320 = vmatpush1.msra.mxu0 0.0
  %321 = vmatprep.subr.mxu0 0.0
  %322 = vmatpush1.msra.mxu0 0.0
  %323 = vmatprep.subr.mxu0 0.0
  %324 = vmatpush1.msra.mxu0 0.0
  %325 = vmatprep.mubr.f32.mxu0 0.0
  %326 = vmatmul.mubr.f32.gmra.mrb[0].mxu0 %v257
  %v327 = vpop.f32.mrb[0].mxu0
  %v328 = vadd.f32 0.0, %v327
  %v329 = vpop.f32.mrb[0].mxu0
  %330 = vmatprep.mubr.f32.mxu0 0.0
  %331 = vmatmul.mubr.f32.gmra.mrb[0].mxu0 %v259
  %v332 = vpop.f32.mrb[0].mxu0
  %v333 = vadd.f32 0.0, %v332
  %v334 = vpop.f32.mrb[0].mxu0
  %335 = vdwg.mxu0
  %v336 = vmul.f32 %v164, %v46
  %v337 = vmul.f32 %v169, %v47
  %v338 = vmul.f32 %v245, %v48
  %v339 = vmul.f32 %v250, %v49
  %v340 = vadd.f32 %v336, %v338
  %v341 = vadd.f32 %v337, %v339
  %344 = vrot.lane.b32.xlu0 %v46, 32
  %v345 = vpop.permute.xlu0 %344
  %346 = vrot.lane.b32.xlu0 %v47, 32
  %v347 = vpop.permute.xlu0 %346
  %v350 = vmul.f32 %v164, %v345
  %v351 = vmul.f32 %v169, %v347
  %v352 = vmul.f32 %v328, %v48
  %v353 = vmul.f32 %v333, %v49
  %356 = vrot.lane.b32.xlu0 %v352, 32
  %v357 = vpop.permute.xlu0 %356
  %358 = vrot.lane.b32.xlu0 %v353, 32
  %v359 = vpop.permute.xlu0 %358
  %v362 = vadd.f32 %v350, %v357
  %v363 = vadd.f32 %v351, %v359
  %366 = vrot.lane.b32.xlu0 %v362, 96
  %v367 = vpop.permute.xlu0 %366
  %368 = vrot.lane.b32.xlu0 %v363, 96
  %v369 = vpop.permute.xlu0 %368
  %v372 = vsel %vm59, %v340, %v367
  %v373 = vsel %vm59, %v341, %v369
  %v374 = vld [vmem:[%s7] sm:$0xff]
  %v375 = vld [vmem:[%s7 + $0x8] sm:$0xff]
  %v376 = vld [vmem:[%s7 + $0x10] sm:$0xff]
  %v377 = vld [vmem:[%s7 + $0x18] sm:$0xff]
  %vm378 = vcmask 64512
  %v380 = vsel %vm378, %v340, 0
  %v383 = vsel %vm378, %v341, 0
  %v386 = vsel %vm378, %v372, 0
  %v389 = vsel %vm378, %v373, 0
  %391 = vmatprep.subr.mxu0 0.0
  %392 = vmatpush1.xpose.msra.mxu0 %v386
  %393 = vmatprep.subr.mxu0 0.0
  %394 = vmatpush1.xpose.msra.mxu0 %v389
  %395 = vmatprep.subr.mxu0 0.0
  %396 = vmatpush1.xpose.msra.mxu0 0.0
  %397 = vmatprep.subr.mxu0 0.0
  %398 = vmatpush1.xpose.msra.mxu0 0.0
  %399 = vmatprep.subr.mxu0 0.0
  %400 = vmatpush1.xpose.msra.mxu0 0.0
  %401 = vmatprep.subr.mxu0 0.0
  %402 = vmatpush1.xpose.msra.mxu0 0.0
  %403 = vmatprep.subr.mxu0 0.0
  %404 = vmatpush1.xpose.msra.mxu0 0.0
  %405 = vmatprep.subr.mxu0 0.0
  %406 = vmatpush1.xpose.msra.mxu0 0.0
  %407 = vmatprep.subr.mxu0 0.0
  %408 = vmatpush1.xpose.msra.mxu0 0.0
  %409 = vmatprep.subr.mxu0 0.0
  %410 = vmatpush1.xpose.msra.mxu0 0.0
  %411 = vmatprep.subr.mxu0 0.0
  %412 = vmatpush1.xpose.msra.mxu0 0.0
  %413 = vmatprep.subr.mxu0 0.0
  %414 = vmatpush1.xpose.msra.mxu0 0.0
  %415 = vmatprep.subr.mxu0 0.0
  %416 = vmatpush1.xpose.msra.mxu0 0.0
  %417 = vmatprep.subr.mxu0 0.0
  %418 = vmatpush1.xpose.msra.mxu0 0.0
  %419 = vmatprep.subr.mxu0 0.0
  %420 = vmatpush1.xpose.msra.mxu0 0.0
  %421 = vmatprep.subr.mxu0 0.0
  %422 = vmatpush1.xpose.msra.mxu0 0.0
  %423 = vmatprep.subr.mxu0 0.0
  %424 = vmatpush1.xpose.msra.mxu0 0.0
  %425 = vmatprep.subr.mxu0 0.0
  %426 = vmatpush1.xpose.msra.mxu0 0.0
  %427 = vmatprep.subr.mxu0 0.0
  %428 = vmatpush1.xpose.msra.mxu0 0.0
  %429 = vmatprep.subr.mxu0 0.0
  %430 = vmatpush1.xpose.msra.mxu0 0.0
  %431 = vmatprep.subr.mxu0 0.0
  %432 = vmatpush1.xpose.msra.mxu0 0.0
  %433 = vmatprep.subr.mxu0 0.0
  %434 = vmatpush1.xpose.msra.mxu0 0.0
  %435 = vmatprep.subr.mxu0 0.0
  %436 = vmatpush1.xpose.msra.mxu0 0.0
  %437 = vmatprep.subr.mxu0 0.0
  %438 = vmatpush1.xpose.msra.mxu0 0.0
  %439 = vmatprep.subr.mxu0 0.0
  %440 = vmatpush1.xpose.msra.mxu0 0.0
  %441 = vmatprep.subr.mxu0 0.0
  %442 = vmatpush1.xpose.msra.mxu0 0.0
  %443 = vmatprep.subr.mxu0 0.0
  %444 = vmatpush1.xpose.msra.mxu0 0.0
  %445 = vmatprep.subr.mxu0 0.0
  %446 = vmatpush1.xpose.msra.mxu0 0.0
  %447 = vmatprep.subr.mxu0 0.0
  %448 = vmatpush1.xpose.msra.mxu0 0.0
  %449 = vmatprep.subr.mxu0 0.0
  %450 = vmatpush1.xpose.msra.mxu0 0.0
  %451 = vmatprep.subr.mxu0 0.0
  %452 = vmatpush1.xpose.msra.mxu0 0.0
  %453 = vmatprep.subr.mxu0 0.0
  %454 = vmatpush1.xpose.msra.mxu0 0.0
  %455 = vmatprep.mubr.f32.mxu0 0.0
  %456 = vmatmul.mubr.f32.gmra.mrb[0].mxu0 %v380
  %v457 = vpop.f32.mrb[0].mxu0
  %v458 = vadd.f32 0.0, %v457
  %v459 = vpop.f32.mrb[0].mxu0
  %460 = vmatprep.mubr.f32.mxu0 0.0
  %461 = vmatmul.mubr.f32.gmra.mrb[0].mxu0 %v383
  %v462 = vpop.f32.mrb[0].mxu0
  %v463 = vadd.f32 0.0, %v462
  %v464 = vpop.f32.mrb[0].mxu0
  %465 = vdwg.mxu0
  %v466 = vmul.f32 %v458, 0.35355338
  %v467 = vmul.f32 %v463, 0.35355338
  %v468 = vadd.f32 %v466, %v54
  %v469 = vadd.f32 %v467, %v55
  %vm470 = vcmask 130048
  %v471 = vsel %vm470, %v468, -inf
  %472 = vmax.xlane.f32.xlu0 %v471
  %v473 = vpop.xlane.xlu0 %472
  %v474 = vsel %vm470, %v469, -inf
  %475 = vmax.xlane.f32.xlu0 %v474
  %v476 = vpop.xlane.xlu0 %475
  %v477 = vsub.f32 %v468, %v473
  %v478 = vsub.f32 %v469, %v476
  %v479 = vmul.f32 %v477, 1.442695
  %v480 = vpow.pop %v479
  %v481 = vmul.f32 %v478, 1.442695
  %v482 = vpow.pop %v481
  %v483 = vsel %vm470, %v480, 0.0
  %484 = vadd.xlane.f32.xlu0 %v483
  %v485 = vpop.xlane.xlu0 %484
  %v486 = vsel %vm470, %v482, 0.0
  %487 = vadd.xlane.f32.xlu0 %v486
  %v488 = vpop.xlane.xlu0 %487
  %v489 = vrcp.pop %v485
  %v490 = vrcp.pop %v488
  %v491 = vmul.f32 %v480, %v489
  %v492 = vmul.f32 %v482, %v490
  %493 = vrot.lane.b32.xlu0 %v164, 64
  %v494 = vpop.permute.xlu0 %493
  %495 = vrot.lane.b32.xlu0 %v169, 64
  %v496 = vpop.permute.xlu0 %495
  %v500 = vsel %vm470, %v491, 0
  %v503 = vsel %vm470, %v492, 0
  %505 = vmatprep.subr.mxu0 0.0
  %506 = vmatpush1.msra.mxu0 %v494
  %507 = vmatprep.subr.mxu0 0.0
  %508 = vmatpush1.msra.mxu0 %v496
  %509 = vmatprep.subr.mxu0 0.0
  %510 = vmatpush1.msra.mxu0 0.0
  %511 = vmatprep.subr.mxu0 0.0
  %512 = vmatpush1.msra.mxu0 0.0
  %513 = vmatprep.subr.mxu0 0.0
  %514 = vmatpush1.msra.mxu0 0.0
  %515 = vmatprep.subr.mxu0 0.0
  %516 = vmatpush1.msra.mxu0 0.0
  %517 = vmatprep.subr.mxu0 0.0
  %518 = vmatpush1.msra.mxu0 0.0
  %519 = vmatprep.subr.mxu0 0.0
  %520 = vmatpush1.msra.mxu0 0.0
  %521 = vmatprep.subr.mxu0 0.0
  %522 = vmatpush1.msra.mxu0 0.0
  %523 = vmatprep.subr.mxu0 0.0
  %524 = vmatpush1.msra.mxu0 0.0
  %525 = vmatprep.subr.mxu0 0.0
  %526 = vmatpush1.msra.mxu0 0.0
  %527 = vmatprep.subr.mxu0 0.0
  %528 = vmatpush1.msra.mxu0 0.0
  %529 = vmatprep.subr.mxu0 0.0
  %530 = vmatpush1.msra.mxu0 0.0
  %531 = vmatprep.subr.mxu0 0.0
  %532 = vmatpush1.msra.mxu0 0.0
  %533 = vmatprep.subr.mxu0 0.0
  %534 = vmatpush1.msra.mxu0 0.0
  %535 = vmatprep.subr.mxu0 0.0
  %536 = vmatpush1.msra.mxu0 0.0
  %537 = vmatprep.subr.mxu0 0.0
  %538 = vmatpush1.msra.mxu0 0.0
  %539 = vmatprep.subr.mxu0 0.0
  %540 = vmatpush1.msra.mxu0 0.0
  %541 = vmatprep.subr.mxu0 0.0
  %542 = vmatpush1.msra.mxu0 0.0
  %543 = vmatprep.subr.mxu0 0.0
  %544 = vmatpush1.msra.mxu0 0.0
  %545 = vmatprep.subr.mxu0 0.0
  %546 = vmatpush1.msra.mxu0 0.0
  %547 = vmatprep.subr.mxu0 0.0
  %548 = vmatpush1.msra.mxu0 0.0
  %549 = vmatprep.subr.mxu0 0.0
  %550 = vmatpush1.msra.mxu0 0.0
  %551 = vmatprep.subr.mxu0 0.0
  %552 = vmatpush1.msra.mxu0 0.0
  %553 = vmatprep.subr.mxu0 0.0
  %554 = vmatpush1.msra.mxu0 0.0
  %555 = vmatprep.subr.mxu0 0.0
  %556 = vmatpush1.msra.mxu0 0.0
  %557 = vmatprep.subr.mxu0 0.0
  %558 = vmatpush1.msra.mxu0 0.0
  %559 = vmatprep.subr.mxu0 0.0
  %560 = vmatpush1.msra.mxu0 0.0
  %561 = vmatprep.subr.mxu0 0.0
  %562 = vmatpush1.msra.mxu0 0.0
  %563 = vmatprep.subr.mxu0 0.0
  %564 = vmatpush1.msra.mxu0 0.0
  %565 = vmatprep.subr.mxu0 0.0
  %566 = vmatpush1.msra.mxu0 0.0
  %567 = vmatprep.subr.mxu0 0.0
  %568 = vmatpush1.msra.mxu0 0.0
  %569 = vmatprep.mubr.f32.mxu0 0.0
  %570 = vmatmul.mubr.f32.gmra.mrb[0].mxu0 %v500
  %v571 = vpop.f32.mrb[0].mxu0
  %v572 = vadd.f32 0.0, %v571
  %v573 = vpop.f32.mrb[0].mxu0
  %574 = vmatprep.mubr.f32.mxu0 0.0
  %575 = vmatmul.mubr.f32.gmra.mrb[0].mxu0 %v503
  %v576 = vpop.f32.mrb[0].mxu0
  %v577 = vadd.f32 0.0, %v576
  %v578 = vpop.f32.mrb[0].mxu0
  %579 = vdwg.mxu0
  %580 = vrot.lane.b32.xlu0 %v340, 120
  %v581 = vpop.permute.xlu0 %580
  %582 = vrot.lane.b32.xlu0 %v341, 120
  %v583 = vpop.permute.xlu0 %582
  %584 = vrot.lane.b32.xlu0 %v372, 120
  %v585 = vpop.permute.xlu0 %584
  %586 = vrot.lane.b32.xlu0 %v373, 120
  %v587 = vpop.permute.xlu0 %586
  %v588 = vsel %vm378, %v581, 0
  %v590 = vsel %vm378, %v583, 0
  %v592 = vsel %vm378, %v585, 0
  %v594 = vsel %vm378, %v587, 0
  %596 = vmatprep.subr.mxu0 0.0
  %597 = vmatpush1.xpose.msra.mxu0 %v592
  %598 = vmatprep.subr.mxu0 0.0
  %599 = vmatpush1.xpose.msra.mxu0 %v594
  %600 = vmatprep.subr.mxu0 0.0
  %601 = vmatpush1.xpose.msra.mxu0 0.0
  %602 = vmatprep.subr.mxu0 0.0
  %603 = vmatpush1.xpose.msra.mxu0 0.0
  %604 = vmatprep.subr.mxu0 0.0
  %605 = vmatpush1.xpose.msra.mxu0 0.0
  %606 = vmatprep.subr.mxu0 0.0
  %607 = vmatpush1.xpose.msra.mxu0 0.0
  %608 = vmatprep.subr.mxu0 0.0
  %609 = vmatpush1.xpose.msra.mxu0 0.0
  %610 = vmatprep.subr.mxu0 0.0
  %611 = vmatpush1.xpose.msra.mxu0 0.0
  %612 = vmatprep.subr.mxu0 0.0
  %613 = vmatpush1.xpose.msra.mxu0 0.0
  %614 = vmatprep.subr.mxu0 0.0
  %615 = vmatpush1.xpose.msra.mxu0 0.0
  %616 = vmatprep.subr.mxu0 0.0
  %617 = vmatpush1.xpose.msra.mxu0 0.0
  %618 = vmatprep.subr.mxu0 0.0
  %619 = vmatpush1.xpose.msra.mxu0 0.0
  %620 = vmatprep.subr.mxu0 0.0
  %621 = vmatpush1.xpose.msra.mxu0 0.0
  %622 = vmatprep.subr.mxu0 0.0
  %623 = vmatpush1.xpose.msra.mxu0 0.0
  %624 = vmatprep.subr.mxu0 0.0
  %625 = vmatpush1.xpose.msra.mxu0 0.0
  %626 = vmatprep.subr.mxu0 0.0
  %627 = vmatpush1.xpose.msra.mxu0 0.0
  %628 = vmatprep.subr.mxu0 0.0
  %629 = vmatpush1.xpose.msra.mxu0 0.0
  %630 = vmatprep.subr.mxu0 0.0
  %631 = vmatpush1.xpose.msra.mxu0 0.0
  %632 = vmatprep.subr.mxu0 0.0
  %633 = vmatpush1.xpose.msra.mxu0 0.0
  %634 = vmatprep.subr.mxu0 0.0
  %635 = vmatpush1.xpose.msra.mxu0 0.0
  %636 = vmatprep.subr.mxu0 0.0
  %637 = vmatpush1.xpose.msra.mxu0 0.0
  %638 = vmatprep.subr.mxu0 0.0
  %639 = vmatpush1.xpose.msra.mxu0 0.0
  %640 = vmatprep.subr.mxu0 0.0
  %641 = vmatpush1.xpose.msra.mxu0 0.0
  %642 = vmatprep.subr.mxu0 0.0
  %643 = vmatpush1.xpose.msra.mxu0 0.0
  %644 = vmatprep.subr.mxu0 0.0
  %645 = vmatpush1.xpose.msra.mxu0 0.0
  %646 = vmatprep.subr.mxu0 0.0
  %647 = vmatpush1.xpose.msra.mxu0 0.0
  %648 = vmatprep.subr.mxu0 0.0
  %649 = vmatpush1.xpose.msra.mxu0 0.0
  %650 = vmatprep.subr.mxu0 0.0
  %651 = vmatpush1.xpose.msra.mxu0 0.0
  %652 = vmatprep.subr.mxu0 0.0
  %653 = vmatpush1.xpose.msra.mxu0 0.0
  %654 = vmatprep.subr.mxu0 0.0
  %655 = vmatpush1.xpose.msra.mxu0 0.0
  %656 = vmatprep.subr.mxu0 0.0
  %657 = vmatpush1.xpose.msra.mxu0 0.0
  %658 = vmatprep.subr.mxu0 0.0
  %659 = vmatpush1.xpose.msra.mxu0 0.0
  %660 = vmatprep.mubr.f32.mxu0 0.0
  %661 = vmatmul.mubr.f32.gmra.mrb[0].mxu0 %v588
  %v662 = vpop.f32.mrb[0].mxu0
  %v663 = vadd.f32 0.0, %v662
  %v664 = vpop.f32.mrb[0].mxu0
  %665 = vmatprep.mubr.f32.mxu0 0.0
  %666 = vmatmul.mubr.f32.gmra.mrb[0].mxu0 %v590
  %v667 = vpop.f32.mrb[0].mxu0
  %v668 = vadd.f32 0.0, %v667
  %v669 = vpop.f32.mrb[0].mxu0
  %670 = vdwg.mxu0
  %v671 = vmul.f32 %v663, 0.35355338
  %v672 = vmul.f32 %v668, 0.35355338
  %v673 = vadd.f32 %v671, %v54
  %v674 = vadd.f32 %v672, %v55
  %v675 = vsel %vm470, %v673, -inf
  %676 = vmax.xlane.f32.xlu0 %v675
  %v677 = vpop.xlane.xlu0 %676
  %v678 = vsel %vm470, %v674, -inf
  %679 = vmax.xlane.f32.xlu0 %v678
  %v680 = vpop.xlane.xlu0 %679
  %v681 = vsub.f32 %v673, %v677
  %v682 = vsub.f32 %v674, %v680
  %v683 = vmul.f32 %v681, 1.442695
  %v684 = vpow.pop %v683
  %v685 = vmul.f32 %v682, 1.442695
  %v686 = vpow.pop %v685
  %v687 = vsel %vm470, %v684, 0.0
  %688 = vadd.xlane.f32.xlu0 %v687
  %v689 = vpop.xlane.xlu0 %688
  %v690 = vsel %vm470, %v686, 0.0
  %691 = vadd.xlane.f32.xlu0 %v690
  %v692 = vpop.xlane.xlu0 %691
  %v693 = vrcp.pop %v689
  %v694 = vrcp.pop %v692
  %v695 = vmul.f32 %v684, %v693
  %v696 = vmul.f32 %v686, %v694
  %697 = vrot.lane.b32.xlu0 %v164, 56
  %v698 = vpop.permute.xlu0 %697
  %699 = vrot.lane.b32.xlu0 %v169, 56
  %v700 = vpop.permute.xlu0 %699
  %v704 = vsel %vm470, %v695, 0
  %v707 = vsel %vm470, %v696, 0
  %709 = vmatprep.subr.mxu0 0.0
  %710 = vmatpush1.msra.mxu0 %v698
  %711 = vmatprep.subr.mxu0 0.0
  %712 = vmatpush1.msra.mxu0 %v700
  %713 = vmatprep.subr.mxu0 0.0
  %714 = vmatpush1.msra.mxu0 0.0
  %715 = vmatprep.subr.mxu0 0.0
  %716 = vmatpush1.msra.mxu0 0.0
  %717 = vmatprep.subr.mxu0 0.0
  %718 = vmatpush1.msra.mxu0 0.0
  %719 = vmatprep.subr.mxu0 0.0
  %720 = vmatpush1.msra.mxu0 0.0
  %721 = vmatprep.subr.mxu0 0.0
  %722 = vmatpush1.msra.mxu0 0.0
  %723 = vmatprep.subr.mxu0 0.0
  %724 = vmatpush1.msra.mxu0 0.0
  %725 = vmatprep.subr.mxu0 0.0
  %726 = vmatpush1.msra.mxu0 0.0
  %727 = vmatprep.subr.mxu0 0.0
  %728 = vmatpush1.msra.mxu0 0.0
  %729 = vmatprep.subr.mxu0 0.0
  %730 = vmatpush1.msra.mxu0 0.0
  %731 = vmatprep.subr.mxu0 0.0
  %732 = vmatpush1.msra.mxu0 0.0
  %733 = vmatprep.subr.mxu0 0.0
  %734 = vmatpush1.msra.mxu0 0.0
  %735 = vmatprep.subr.mxu0 0.0
  %736 = vmatpush1.msra.mxu0 0.0
  %737 = vmatprep.subr.mxu0 0.0
  %738 = vmatpush1.msra.mxu0 0.0
  %739 = vmatprep.subr.mxu0 0.0
  %740 = vmatpush1.msra.mxu0 0.0
  %741 = vmatprep.subr.mxu0 0.0
  %742 = vmatpush1.msra.mxu0 0.0
  %743 = vmatprep.subr.mxu0 0.0
  %744 = vmatpush1.msra.mxu0 0.0
  %745 = vmatprep.subr.mxu0 0.0
  %746 = vmatpush1.msra.mxu0 0.0
  %747 = vmatprep.subr.mxu0 0.0
  %748 = vmatpush1.msra.mxu0 0.0
  %749 = vmatprep.subr.mxu0 0.0
  %750 = vmatpush1.msra.mxu0 0.0
  %751 = vmatprep.subr.mxu0 0.0
  %752 = vmatpush1.msra.mxu0 0.0
  %753 = vmatprep.subr.mxu0 0.0
  %754 = vmatpush1.msra.mxu0 0.0
  %755 = vmatprep.subr.mxu0 0.0
  %756 = vmatpush1.msra.mxu0 0.0
  %757 = vmatprep.subr.mxu0 0.0
  %758 = vmatpush1.msra.mxu0 0.0
  %759 = vmatprep.subr.mxu0 0.0
  %760 = vmatpush1.msra.mxu0 0.0
  %761 = vmatprep.subr.mxu0 0.0
  %762 = vmatpush1.msra.mxu0 0.0
  %763 = vmatprep.subr.mxu0 0.0
  %764 = vmatpush1.msra.mxu0 0.0
  %765 = vmatprep.subr.mxu0 0.0
  %766 = vmatpush1.msra.mxu0 0.0
  %767 = vmatprep.subr.mxu0 0.0
  %768 = vmatpush1.msra.mxu0 0.0
  %769 = vmatprep.subr.mxu0 0.0
  %770 = vmatpush1.msra.mxu0 0.0
  %771 = vmatprep.subr.mxu0 0.0
  %772 = vmatpush1.msra.mxu0 0.0
  %773 = vmatprep.mubr.f32.mxu0 0.0
  %774 = vmatmul.mubr.f32.gmra.mrb[0].mxu0 %v704
  %v775 = vpop.f32.mrb[0].mxu0
  %v776 = vadd.f32 0.0, %v775
  %v777 = vpop.f32.mrb[0].mxu0
  %778 = vmatprep.mubr.f32.mxu0 0.0
  %779 = vmatmul.mubr.f32.gmra.mrb[0].mxu0 %v707
  %v780 = vpop.f32.mrb[0].mxu0
  %v781 = vadd.f32 0.0, %v780
  %v782 = vpop.f32.mrb[0].mxu0
  %783 = vdwg.mxu0
  %v785 = vsel %vm378, %v776, 0
  %v788 = vsel %vm378, %v781, 0
  %790 = vmatprep.subr.mxu0 0.0
  %791 = vmatpush1.msra.mxu0 %v375
  %792 = vmatprep.subr.mxu0 0.0
  %793 = vmatpush1.msra.mxu0 0.0
  %794 = vmatprep.subr.mxu0 0.0
  %795 = vmatpush1.msra.mxu0 0.0
  %796 = vmatprep.subr.mxu0 0.0
  %797 = vmatpush1.msra.mxu0 0.0
  %798 = vmatprep.subr.mxu0 0.0
  %799 = vmatpush1.msra.mxu0 0.0
  %800 = vmatprep.subr.mxu0 0.0
  %801 = vmatpush1.msra.mxu0 0.0
  %802 = vmatprep.subr.mxu0 0.0
  %803 = vmatpush1.msra.mxu0 0.0
  %804 = vmatprep.subr.mxu0 0.0
  %805 = vmatpush1.msra.mxu0 0.0
  %806 = vmatprep.subr.mxu0 0.0
  %807 = vmatpush1.msra.mxu0 0.0
  %808 = vmatprep.subr.mxu0 0.0
  %809 = vmatpush1.msra.mxu0 0.0
  %810 = vmatprep.subr.mxu0 0.0
  %811 = vmatpush1.msra.mxu0 0.0
  %812 = vmatprep.subr.mxu0 0.0
  %813 = vmatpush1.msra.mxu0 0.0
  %814 = vmatprep.subr.mxu0 0.0
  %815 = vmatpush1.msra.mxu0 0.0
  %816 = vmatprep.subr.mxu0 0.0
  %817 = vmatpush1.msra.mxu0 0.0
  %818 = vmatprep.subr.mxu0 0.0
  %819 = vmatpush1.msra.mxu0 0.0
  %820 = vmatprep.subr.mxu0 0.0
  %821 = vmatpush1.msra.mxu0 0.0
  %822 = vmatprep.subr.mxu0 0.0
  %823 = vmatpush1.msra.mxu0 0.0
  %824 = vmatprep.subr.mxu0 0.0
  %825 = vmatpush1.msra.mxu0 0.0
  %826 = vmatprep.subr.mxu0 0.0
  %827 = vmatpush1.msra.mxu0 0.0
  %828 = vmatprep.subr.mxu0 0.0
  %829 = vmatpush1.msra.mxu0 0.0
  %830 = vmatprep.subr.mxu0 0.0
  %831 = vmatpush1.msra.mxu0 0.0
  %832 = vmatprep.subr.mxu0 0.0
  %833 = vmatpush1.msra.mxu0 0.0
  %834 = vmatprep.subr.mxu0 0.0
  %835 = vmatpush1.msra.mxu0 0.0
  %836 = vmatprep.subr.mxu0 0.0
  %837 = vmatpush1.msra.mxu0 0.0
  %838 = vmatprep.subr.mxu0 0.0
  %839 = vmatpush1.msra.mxu0 0.0
  %840 = vmatprep.subr.mxu0 0.0
  %841 = vmatpush1.msra.mxu0 0.0
  %842 = vmatprep.subr.mxu0 0.0
  %843 = vmatpush1.msra.mxu0 0.0
  %844 = vmatprep.subr.mxu0 0.0
  %845 = vmatpush1.msra.mxu0 0.0
  %846 = vmatprep.subr.mxu0 0.0
  %847 = vmatpush1.msra.mxu0 0.0
  %848 = vmatprep.subr.mxu0 0.0
  %849 = vmatpush1.msra.mxu0 0.0
  %850 = vmatprep.subr.mxu0 0.0
  %851 = vmatpush1.msra.mxu0 0.0
  %852 = vmatprep.subr.mxu0 0.0
  %853 = vmatpush1.msra.mxu0 0.0
  %854 = vmatprep.mubr.f32.mxu0 0.0
  %855 = vmatmul.mubr.f32.gmra.mrb[0].mxu0 %v785
  %v856 = vpop.f32.mrb[0].mxu0
  %v857 = vadd.f32 0.0, %v856
  %v858 = vpop.f32.mrb[0].mxu0
  %859 = vmatprep.mubr.f32.mxu0 0.0
  %860 = vmatmul.mubr.f32.gmra.mrb[0].mxu0 %v788
  %v861 = vpop.f32.mrb[0].mxu0
  %v862 = vadd.f32 0.0, %v861
  %v863 = vpop.f32.mrb[0].mxu0
  %864 = vdwg.mxu0
  %v866 = vsel %vm378, %v572, 0
  %v869 = vsel %vm378, %v577, 0
  %871 = vmatprep.subr.mxu0 0.0
  %872 = vmatpush1.msra.mxu0 %v374
  %873 = vmatprep.subr.mxu0 0.0
  %874 = vmatpush1.msra.mxu0 0.0
  %875 = vmatprep.subr.mxu0 0.0
  %876 = vmatpush1.msra.mxu0 0.0
  %877 = vmatprep.subr.mxu0 0.0
  %878 = vmatpush1.msra.mxu0 0.0
  %879 = vmatprep.subr.mxu0 0.0
  %880 = vmatpush1.msra.mxu0 0.0
  %881 = vmatprep.subr.mxu0 0.0
  %882 = vmatpush1.msra.mxu0 0.0
  %883 = vmatprep.subr.mxu0 0.0
  %884 = vmatpush1.msra.mxu0 0.0
  %885 = vmatprep.subr.mxu0 0.0
  %886 = vmatpush1.msra.mxu0 0.0
  %887 = vmatprep.subr.mxu0 0.0
  %888 = vmatpush1.msra.mxu0 0.0
  %889 = vmatprep.subr.mxu0 0.0
  %890 = vmatpush1.msra.mxu0 0.0
  %891 = vmatprep.subr.mxu0 0.0
  %892 = vmatpush1.msra.mxu0 0.0
  %893 = vmatprep.subr.mxu0 0.0
  %894 = vmatpush1.msra.mxu0 0.0
  %895 = vmatprep.subr.mxu0 0.0
  %896 = vmatpush1.msra.mxu0 0.0
  %897 = vmatprep.subr.mxu0 0.0
  %898 = vmatpush1.msra.mxu0 0.0
  %899 = vmatprep.subr.mxu0 0.0
  %900 = vmatpush1.msra.mxu0 0.0
  %901 = vmatprep.subr.mxu0 0.0
  %902 = vmatpush1.msra.mxu0 0.0
  %903 = vmatprep.subr.mxu0 0.0
  %904 = vmatpush1.msra.mxu0 0.0
  %905 = vmatprep.subr.mxu0 0.0
  %906 = vmatpush1.msra.mxu0 0.0
  %907 = vmatprep.subr.mxu0 0.0
  %908 = vmatpush1.msra.mxu0 0.0
  %909 = vmatprep.subr.mxu0 0.0
  %910 = vmatpush1.msra.mxu0 0.0
  %911 = vmatprep.subr.mxu0 0.0
  %912 = vmatpush1.msra.mxu0 0.0
  %913 = vmatprep.subr.mxu0 0.0
  %914 = vmatpush1.msra.mxu0 0.0
  %915 = vmatprep.subr.mxu0 0.0
  %916 = vmatpush1.msra.mxu0 0.0
  %917 = vmatprep.subr.mxu0 0.0
  %918 = vmatpush1.msra.mxu0 0.0
  %919 = vmatprep.subr.mxu0 0.0
  %920 = vmatpush1.msra.mxu0 0.0
  %921 = vmatprep.subr.mxu0 0.0
  %922 = vmatpush1.msra.mxu0 0.0
  %923 = vmatprep.subr.mxu0 0.0
  %924 = vmatpush1.msra.mxu0 0.0
  %925 = vmatprep.subr.mxu0 0.0
  %926 = vmatpush1.msra.mxu0 0.0
  %927 = vmatprep.subr.mxu0 0.0
  %928 = vmatpush1.msra.mxu0 0.0
  %929 = vmatprep.subr.mxu0 0.0
  %930 = vmatpush1.msra.mxu0 0.0
  %931 = vmatprep.subr.mxu0 0.0
  %932 = vmatpush1.msra.mxu0 0.0
  %933 = vmatprep.subr.mxu0 0.0
  %934 = vmatpush1.msra.mxu0 0.0
  %935 = vmatprep.mubr.f32.mxu0 0.0
  %936 = vmatmul.mubr.f32.gmra.mrb[0].mxu0 %v866
  %v937 = vpop.f32.mrb[0].mxu0
  %v938 = vadd.f32 %v857, %v937
  %v939 = vpop.f32.mrb[0].mxu0
  %940 = vmatprep.mubr.f32.mxu0 0.0
  %941 = vmatmul.mubr.f32.gmra.mrb[0].mxu0 %v869
  %v942 = vpop.f32.mrb[0].mxu0
  %v943 = vadd.f32 %v862, %v942
  %v944 = vpop.f32.mrb[0].mxu0
  %945 = vdwg.mxu0
  %946 = vrot.lane.b32.xlu0 %v340, 112
  %v947 = vpop.permute.xlu0 %946
  %948 = vrot.lane.b32.xlu0 %v341, 112
  %v949 = vpop.permute.xlu0 %948
  %950 = vrot.lane.b32.xlu0 %v372, 112
  %v951 = vpop.permute.xlu0 %950
  %952 = vrot.lane.b32.xlu0 %v373, 112
  %v953 = vpop.permute.xlu0 %952
  %v954 = vsel %vm378, %v947, 0
  %v956 = vsel %vm378, %v949, 0
  %v958 = vsel %vm378, %v951, 0
  %v960 = vsel %vm378, %v953, 0
  %962 = vmatprep.subr.mxu0 0.0
  %963 = vmatpush1.xpose.msra.mxu0 %v958
  %964 = vmatprep.subr.mxu0 0.0
  %965 = vmatpush1.xpose.msra.mxu0 %v960
  %966 = vmatprep.subr.mxu0 0.0
  %967 = vmatpush1.xpose.msra.mxu0 0.0
  %968 = vmatprep.subr.mxu0 0.0
  %969 = vmatpush1.xpose.msra.mxu0 0.0
  %970 = vmatprep.subr.mxu0 0.0
  %971 = vmatpush1.xpose.msra.mxu0 0.0
  %972 = vmatprep.subr.mxu0 0.0
  %973 = vmatpush1.xpose.msra.mxu0 0.0
  %974 = vmatprep.subr.mxu0 0.0
  %975 = vmatpush1.xpose.msra.mxu0 0.0
  %976 = vmatprep.subr.mxu0 0.0
  %977 = vmatpush1.xpose.msra.mxu0 0.0
  %978 = vmatprep.subr.mxu0 0.0
  %979 = vmatpush1.xpose.msra.mxu0 0.0
  %980 = vmatprep.subr.mxu0 0.0
  %981 = vmatpush1.xpose.msra.mxu0 0.0
  %982 = vmatprep.subr.mxu0 0.0
  %983 = vmatpush1.xpose.msra.mxu0 0.0
  %984 = vmatprep.subr.mxu0 0.0
  %985 = vmatpush1.xpose.msra.mxu0 0.0
  %986 = vmatprep.subr.mxu0 0.0
  %987 = vmatpush1.xpose.msra.mxu0 0.0
  %988 = vmatprep.subr.mxu0 0.0
  %989 = vmatpush1.xpose.msra.mxu0 0.0
  %990 = vmatprep.subr.mxu0 0.0
  %991 = vmatpush1.xpose.msra.mxu0 0.0
  %992 = vmatprep.subr.mxu0 0.0
  %993 = vmatpush1.xpose.msra.mxu0 0.0
  %994 = vmatprep.subr.mxu0 0.0
  %995 = vmatpush1.xpose.msra.mxu0 0.0
  %996 = vmatprep.subr.mxu0 0.0
  %997 = vmatpush1.xpose.msra.mxu0 0.0
  %998 = vmatprep.subr.mxu0 0.0
  %999 = vmatpush1.xpose.msra.mxu0 0.0
  %1000 = vmatprep.subr.mxu0 0.0
  %1001 = vmatpush1.xpose.msra.mxu0 0.0
  %1002 = vmatprep.subr.mxu0 0.0
  %1003 = vmatpush1.xpose.msra.mxu0 0.0
  %1004 = vmatprep.subr.mxu0 0.0
  %1005 = vmatpush1.xpose.msra.mxu0 0.0
  %1006 = vmatprep.subr.mxu0 0.0
  %1007 = vmatpush1.xpose.msra.mxu0 0.0
  %1008 = vmatprep.subr.mxu0 0.0
  %1009 = vmatpush1.xpose.msra.mxu0 0.0
  %1010 = vmatprep.subr.mxu0 0.0
  %1011 = vmatpush1.xpose.msra.mxu0 0.0
  %1012 = vmatprep.subr.mxu0 0.0
  %1013 = vmatpush1.xpose.msra.mxu0 0.0
  %1014 = vmatprep.subr.mxu0 0.0
  %1015 = vmatpush1.xpose.msra.mxu0 0.0
  %1016 = vmatprep.subr.mxu0 0.0
  %1017 = vmatpush1.xpose.msra.mxu0 0.0
  %1018 = vmatprep.subr.mxu0 0.0
  %1019 = vmatpush1.xpose.msra.mxu0 0.0
  %1020 = vmatprep.subr.mxu0 0.0
  %1021 = vmatpush1.xpose.msra.mxu0 0.0
  %1022 = vmatprep.subr.mxu0 0.0
  %1023 = vmatpush1.xpose.msra.mxu0 0.0
  %1024 = vmatprep.subr.mxu0 0.0
  %1025 = vmatpush1.xpose.msra.mxu0 0.0
  %1026 = vmatprep.mubr.f32.mxu0 0.0
  %1027 = vmatmul.mubr.f32.gmra.mrb[0].mxu0 %v954
  %v1028 = vpop.f32.mrb[0].mxu0
  %v1029 = vadd.f32 0.0, %v1028
  %v1030 = vpop.f32.mrb[0].mxu0
  %1031 = vmatprep.mubr.f32.mxu0 0.0
  %1032 = vmatmul.mubr.f32.gmra.mrb[0].mxu0 %v956
  %v1033 = vpop.f32.mrb[0].mxu0
  %v1034 = vadd.f32 0.0, %v1033
  %v1035 = vpop.f32.mrb[0].mxu0
  %1036 = vdwg.mxu0
  %v1037 = vmul.f32 %v1029, 0.35355338
  %v1038 = vmul.f32 %v1034, 0.35355338
  %v1039 = vadd.f32 %v1037, %v54
  %v1040 = vadd.f32 %v1038, %v55
  %v1041 = vsel %vm470, %v1039, -inf
  %1042 = vmax.xlane.f32.xlu0 %v1041
  %v1043 = vpop.xlane.xlu0 %1042
  %v1044 = vsel %vm470, %v1040, -inf
  %1045 = vmax.xlane.f32.xlu0 %v1044
  %v1046 = vpop.xlane.xlu0 %1045
  %v1047 = vsub.f32 %v1039, %v1043
  %v1048 = vsub.f32 %v1040, %v1046
  %v1049 = vmul.f32 %v1047, 1.442695
  %v1050 = vpow.pop %v1049
  %v1051 = vmul.f32 %v1048, 1.442695
  %v1052 = vpow.pop %v1051
  %v1053 = vsel %vm470, %v1050, 0.0
  %1054 = vadd.xlane.f32.xlu0 %v1053
  %v1055 = vpop.xlane.xlu0 %1054
  %v1056 = vsel %vm470, %v1052, 0.0
  %1057 = vadd.xlane.f32.xlu0 %v1056
  %v1058 = vpop.xlane.xlu0 %1057
  %v1059 = vrcp.pop %v1055
  %v1060 = vrcp.pop %v1058
  %v1061 = vmul.f32 %v1050, %v1059
  %v1062 = vmul.f32 %v1052, %v1060
  %1063 = vrot.lane.b32.xlu0 %v164, 48
  %v1064 = vpop.permute.xlu0 %1063
  %1065 = vrot.lane.b32.xlu0 %v169, 48
  %v1066 = vpop.permute.xlu0 %1065
  %v1070 = vsel %vm470, %v1061, 0
  %v1073 = vsel %vm470, %v1062, 0
  %1075 = vmatprep.subr.mxu0 0.0
  %1076 = vmatpush1.msra.mxu0 %v1064
  %1077 = vmatprep.subr.mxu0 0.0
  %1078 = vmatpush1.msra.mxu0 %v1066
  %1079 = vmatprep.subr.mxu0 0.0
  %1080 = vmatpush1.msra.mxu0 0.0
  %1081 = vmatprep.subr.mxu0 0.0
  %1082 = vmatpush1.msra.mxu0 0.0
  %1083 = vmatprep.subr.mxu0 0.0
  %1084 = vmatpush1.msra.mxu0 0.0
  %1085 = vmatprep.subr.mxu0 0.0
  %1086 = vmatpush1.msra.mxu0 0.0
  %1087 = vmatprep.subr.mxu0 0.0
  %1088 = vmatpush1.msra.mxu0 0.0
  %1089 = vmatprep.subr.mxu0 0.0
  %1090 = vmatpush1.msra.mxu0 0.0
  %1091 = vmatprep.subr.mxu0 0.0
  %1092 = vmatpush1.msra.mxu0 0.0
  %1093 = vmatprep.subr.mxu0 0.0
  %1094 = vmatpush1.msra.mxu0 0.0
  %1095 = vmatprep.subr.mxu0 0.0
  %1096 = vmatpush1.msra.mxu0 0.0
  %1097 = vmatprep.subr.mxu0 0.0
  %1098 = vmatpush1.msra.mxu0 0.0
  %1099 = vmatprep.subr.mxu0 0.0
  %1100 = vmatpush1.msra.mxu0 0.0
  %1101 = vmatprep.subr.mxu0 0.0
  %1102 = vmatpush1.msra.mxu0 0.0
  %1103 = vmatprep.subr.mxu0 0.0
  %1104 = vmatpush1.msra.mxu0 0.0
  %1105 = vmatprep.subr.mxu0 0.0
  %1106 = vmatpush1.msra.mxu0 0.0
  %1107 = vmatprep.subr.mxu0 0.0
  %1108 = vmatpush1.msra.mxu0 0.0
  %1109 = vmatprep.subr.mxu0 0.0
  %1110 = vmatpush1.msra.mxu0 0.0
  %1111 = vmatprep.subr.mxu0 0.0
  %1112 = vmatpush1.msra.mxu0 0.0
  %1113 = vmatprep.subr.mxu0 0.0
  %1114 = vmatpush1.msra.mxu0 0.0
  %1115 = vmatprep.subr.mxu0 0.0
  %1116 = vmatpush1.msra.mxu0 0.0
  %1117 = vmatprep.subr.mxu0 0.0
  %1118 = vmatpush1.msra.mxu0 0.0
  %1119 = vmatprep.subr.mxu0 0.0
  %1120 = vmatpush1.msra.mxu0 0.0
  %1121 = vmatprep.subr.mxu0 0.0
  %1122 = vmatpush1.msra.mxu0 0.0
  %1123 = vmatprep.subr.mxu0 0.0
  %1124 = vmatpush1.msra.mxu0 0.0
  %1125 = vmatprep.subr.mxu0 0.0
  %1126 = vmatpush1.msra.mxu0 0.0
  %1127 = vmatprep.subr.mxu0 0.0
  %1128 = vmatpush1.msra.mxu0 0.0
  %1129 = vmatprep.subr.mxu0 0.0
  %1130 = vmatpush1.msra.mxu0 0.0
  %1131 = vmatprep.subr.mxu0 0.0
  %1132 = vmatpush1.msra.mxu0 0.0
  %1133 = vmatprep.subr.mxu0 0.0
  %1134 = vmatpush1.msra.mxu0 0.0
  %1135 = vmatprep.subr.mxu0 0.0
  %1136 = vmatpush1.msra.mxu0 0.0
  %1137 = vmatprep.subr.mxu0 0.0
  %1138 = vmatpush1.msra.mxu0 0.0
  %1139 = vmatprep.mubr.f32.mxu0 0.0
  %1140 = vmatmul.mubr.f32.gmra.mrb[0].mxu0 %v1070
  %v1141 = vpop.f32.mrb[0].mxu0
  %v1142 = vadd.f32 0.0, %v1141
  %v1143 = vpop.f32.mrb[0].mxu0
  %1144 = vmatprep.mubr.f32.mxu0 0.0
  %1145 = vmatmul.mubr.f32.gmra.mrb[0].mxu0 %v1073
  %v1146 = vpop.f32.mrb[0].mxu0
  %v1147 = vadd.f32 0.0, %v1146
  %v1148 = vpop.f32.mrb[0].mxu0
  %1149 = vdwg.mxu0
  %v1151 = vsel %vm378, %v1142, 0
  %v1154 = vsel %vm378, %v1147, 0
  %1156 = vmatprep.subr.mxu0 0.0
  %1157 = vmatpush1.msra.mxu0 %v376
  %1158 = vmatprep.subr.mxu0 0.0
  %1159 = vmatpush1.msra.mxu0 0.0
  %1160 = vmatprep.subr.mxu0 0.0
  %1161 = vmatpush1.msra.mxu0 0.0
  %1162 = vmatprep.subr.mxu0 0.0
  %1163 = vmatpush1.msra.mxu0 0.0
  %1164 = vmatprep.subr.mxu0 0.0
  %1165 = vmatpush1.msra.mxu0 0.0
  %1166 = vmatprep.subr.mxu0 0.0
  %1167 = vmatpush1.msra.mxu0 0.0
  %1168 = vmatprep.subr.mxu0 0.0
  %1169 = vmatpush1.msra.mxu0 0.0
  %1170 = vmatprep.subr.mxu0 0.0
  %1171 = vmatpush1.msra.mxu0 0.0
  %1172 = vmatprep.subr.mxu0 0.0
  %1173 = vmatpush1.msra.mxu0 0.0
  %1174 = vmatprep.subr.mxu0 0.0
  %1175 = vmatpush1.msra.mxu0 0.0
  %1176 = vmatprep.subr.mxu0 0.0
  %1177 = vmatpush1.msra.mxu0 0.0
  %1178 = vmatprep.subr.mxu0 0.0
  %1179 = vmatpush1.msra.mxu0 0.0
  %1180 = vmatprep.subr.mxu0 0.0
  %1181 = vmatpush1.msra.mxu0 0.0
  %1182 = vmatprep.subr.mxu0 0.0
  %1183 = vmatpush1.msra.mxu0 0.0
  %1184 = vmatprep.subr.mxu0 0.0
  %1185 = vmatpush1.msra.mxu0 0.0
  %1186 = vmatprep.subr.mxu0 0.0
  %1187 = vmatpush1.msra.mxu0 0.0
  %1188 = vmatprep.subr.mxu0 0.0
  %1189 = vmatpush1.msra.mxu0 0.0
  %1190 = vmatprep.subr.mxu0 0.0
  %1191 = vmatpush1.msra.mxu0 0.0
  %1192 = vmatprep.subr.mxu0 0.0
  %1193 = vmatpush1.msra.mxu0 0.0
  %1194 = vmatprep.subr.mxu0 0.0
  %1195 = vmatpush1.msra.mxu0 0.0
  %1196 = vmatprep.subr.mxu0 0.0
  %1197 = vmatpush1.msra.mxu0 0.0
  %1198 = vmatprep.subr.mxu0 0.0
  %1199 = vmatpush1.msra.mxu0 0.0
  %1200 = vmatprep.subr.mxu0 0.0
  %1201 = vmatpush1.msra.mxu0 0.0
  %1202 = vmatprep.subr.mxu0 0.0
  %1203 = vmatpush1.msra.mxu0 0.0
  %1204 = vmatprep.subr.mxu0 0.0
  %1205 = vmatpush1.msra.mxu0 0.0
  %1206 = vmatprep.subr.mxu0 0.0
  %1207 = vmatpush1.msra.mxu0 0.0
  %1208 = vmatprep.subr.mxu0 0.0
  %1209 = vmatpush1.msra.mxu0 0.0
  %1210 = vmatprep.subr.mxu0 0.0
  %1211 = vmatpush1.msra.mxu0 0.0
  %1212 = vmatprep.subr.mxu0 0.0
  %1213 = vmatpush1.msra.mxu0 0.0
  %1214 = vmatprep.subr.mxu0 0.0
  %1215 = vmatpush1.msra.mxu0 0.0
  %1216 = vmatprep.subr.mxu0 0.0
  %1217 = vmatpush1.msra.mxu0 0.0
  %1218 = vmatprep.subr.mxu0 0.0
  %1219 = vmatpush1.msra.mxu0 0.0
  %1220 = vmatprep.mubr.f32.mxu0 0.0
  %1221 = vmatmul.mubr.f32.gmra.mrb[0].mxu0 %v1151
  %v1222 = vpop.f32.mrb[0].mxu0
  %v1223 = vadd.f32 0.0, %v1222
  %v1224 = vpop.f32.mrb[0].mxu0
  %1225 = vmatprep.mubr.f32.mxu0 0.0
  %1226 = vmatmul.mubr.f32.gmra.mrb[0].mxu0 %v1154
  %v1227 = vpop.f32.mrb[0].mxu0
  %v1228 = vadd.f32 0.0, %v1227
  %v1229 = vpop.f32.mrb[0].mxu0
  %1230 = vdwg.mxu0
  %v1231 = vadd.f32 %v938, %v1223
  %v1232 = vadd.f32 %v943, %v1228
  %1233 = vrot.lane.b32.xlu0 %v340, 104
  %v1234 = vpop.permute.xlu0 %1233
  %1235 = vrot.lane.b32.xlu0 %v341, 104
  %v1236 = vpop.permute.xlu0 %1235
  %1237 = vrot.lane.b32.xlu0 %v372, 104
  %v1238 = vpop.permute.xlu0 %1237
  %1239 = vrot.lane.b32.xlu0 %v373, 104
  %v1240 = vpop.permute.xlu0 %1239
  %v1241 = vsel %vm378, %v1234, 0
  %v1243 = vsel %vm378, %v1236, 0
  %v1245 = vsel %vm378, %v1238, 0
  %v1247 = vsel %vm378, %v1240, 0
  %1249 = vmatprep.subr.mxu0 0.0
  %1250 = vmatpush1.xpose.msra.mxu0 %v1245
  %1251 = vmatprep.subr.mxu0 0.0
  %1252 = vmatpush1.xpose.msra.mxu0 %v1247
  %1253 = vmatprep.subr.mxu0 0.0
  %1254 = vmatpush1.xpose.msra.mxu0 0.0
  %1255 = vmatprep.subr.mxu0 0.0
  %1256 = vmatpush1.xpose.msra.mxu0 0.0
  %1257 = vmatprep.subr.mxu0 0.0
  %1258 = vmatpush1.xpose.msra.mxu0 0.0
  %1259 = vmatprep.subr.mxu0 0.0
  %1260 = vmatpush1.xpose.msra.mxu0 0.0
  %1261 = vmatprep.subr.mxu0 0.0
  %1262 = vmatpush1.xpose.msra.mxu0 0.0
  %1263 = vmatprep.subr.mxu0 0.0
  %1264 = vmatpush1.xpose.msra.mxu0 0.0
  %1265 = vmatprep.subr.mxu0 0.0
  %1266 = vmatpush1.xpose.msra.mxu0 0.0
  %1267 = vmatprep.subr.mxu0 0.0
  %1268 = vmatpush1.xpose.msra.mxu0 0.0
  %1269 = vmatprep.subr.mxu0 0.0
  %1270 = vmatpush1.xpose.msra.mxu0 0.0
  %1271 = vmatprep.subr.mxu0 0.0
  %1272 = vmatpush1.xpose.msra.mxu0 0.0
  %1273 = vmatprep.subr.mxu0 0.0
  %1274 = vmatpush1.xpose.msra.mxu0 0.0
  %1275 = vmatprep.subr.mxu0 0.0
  %1276 = vmatpush1.xpose.msra.mxu0 0.0
  %1277 = vmatprep.subr.mxu0 0.0
  %1278 = vmatpush1.xpose.msra.mxu0 0.0
  %1279 = vmatprep.subr.mxu0 0.0
  %1280 = vmatpush1.xpose.msra.mxu0 0.0
  %1281 = vmatprep.subr.mxu0 0.0
  %1282 = vmatpush1.xpose.msra.mxu0 0.0
  %1283 = vmatprep.subr.mxu0 0.0
  %1284 = vmatpush1.xpose.msra.mxu0 0.0
  %1285 = vmatprep.subr.mxu0 0.0
  %1286 = vmatpush1.xpose.msra.mxu0 0.0
  %1287 = vmatprep.subr.mxu0 0.0
  %1288 = vmatpush1.xpose.msra.mxu0 0.0
  %1289 = vmatprep.subr.mxu0 0.0
  %1290 = vmatpush1.xpose.msra.mxu0 0.0
  %1291 = vmatprep.subr.mxu0 0.0
  %1292 = vmatpush1.xpose.msra.mxu0 0.0
  %1293 = vmatprep.subr.mxu0 0.0
  %1294 = vmatpush1.xpose.msra.mxu0 0.0
  %1295 = vmatprep.subr.mxu0 0.0
  %1296 = vmatpush1.xpose.msra.mxu0 0.0
  %1297 = vmatprep.subr.mxu0 0.0
  %1298 = vmatpush1.xpose.msra.mxu0 0.0
  %1299 = vmatprep.subr.mxu0 0.0
  %1300 = vmatpush1.xpose.msra.mxu0 0.0
  %1301 = vmatprep.subr.mxu0 0.0
  %1302 = vmatpush1.xpose.msra.mxu0 0.0
  %1303 = vmatprep.subr.mxu0 0.0
  %1304 = vmatpush1.xpose.msra.mxu0 0.0
  %1305 = vmatprep.subr.mxu0 0.0
  %1306 = vmatpush1.xpose.msra.mxu0 0.0
  %1307 = vmatprep.subr.mxu0 0.0
  %1308 = vmatpush1.xpose.msra.mxu0 0.0
  %1309 = vmatprep.subr.mxu0 0.0
  %1310 = vmatpush1.xpose.msra.mxu0 0.0
  %1311 = vmatprep.subr.mxu0 0.0
  %1312 = vmatpush1.xpose.msra.mxu0 0.0
  %1313 = vmatprep.mubr.f32.mxu0 0.0
  %1314 = vmatmul.mubr.f32.gmra.mrb[0].mxu0 %v1241
  %v1315 = vpop.f32.mrb[0].mxu0
  %v1316 = vadd.f32 0.0, %v1315
  %v1317 = vpop.f32.mrb[0].mxu0
  %1318 = vmatprep.mubr.f32.mxu0 0.0
  %1319 = vmatmul.mubr.f32.gmra.mrb[0].mxu0 %v1243
  %v1320 = vpop.f32.mrb[0].mxu0
  %v1321 = vadd.f32 0.0, %v1320
  %v1322 = vpop.f32.mrb[0].mxu0
  %1323 = vdwg.mxu0
  %v1324 = vmul.f32 %v1316, 0.35355338
  %v1325 = vmul.f32 %v1321, 0.35355338
  %v1326 = vadd.f32 %v1324, %v54
  %v1327 = vadd.f32 %v1325, %v55
  %v1328 = vsel %vm470, %v1326, -inf
  %1329 = vmax.xlane.f32.xlu0 %v1328
  %v1330 = vpop.xlane.xlu0 %1329
  %v1331 = vsel %vm470, %v1327, -inf
  %1332 = vmax.xlane.f32.xlu0 %v1331
  %v1333 = vpop.xlane.xlu0 %1332
  %v1334 = vsub.f32 %v1326, %v1330
  %v1335 = vsub.f32 %v1327, %v1333
  %v1336 = vmul.f32 %v1334, 1.442695
  %v1337 = vpow.pop %v1336
  %v1338 = vmul.f32 %v1335, 1.442695
  %v1339 = vpow.pop %v1338
  %v1340 = vsel %vm470, %v1337, 0.0
  %1341 = vadd.xlane.f32.xlu0 %v1340
  %v1342 = vpop.xlane.xlu0 %1341
  %v1343 = vsel %vm470, %v1339, 0.0
  %1344 = vadd.xlane.f32.xlu0 %v1343
  %v1345 = vpop.xlane.xlu0 %1344
  %v1346 = vrcp.pop %v1342
  %v1347 = vrcp.pop %v1345
  %v1348 = vmul.f32 %v1337, %v1346
  %v1349 = vmul.f32 %v1339, %v1347
  %1350 = vrot.lane.b32.xlu0 %v164, 40
  %v1351 = vpop.permute.xlu0 %1350
  %1352 = vrot.lane.b32.xlu0 %v169, 40
  %v1353 = vpop.permute.xlu0 %1352
  %v1357 = vsel %vm470, %v1348, 0
  %v1360 = vsel %vm470, %v1349, 0
  %1362 = vmatprep.subr.mxu0 0.0
  %1363 = vmatpush1.msra.mxu0 %v1351
  %1364 = vmatprep.subr.mxu0 0.0
  %1365 = vmatpush1.msra.mxu0 %v1353
  %1366 = vmatprep.subr.mxu0 0.0
  %1367 = vmatpush1.msra.mxu0 0.0
  %1368 = vmatprep.subr.mxu0 0.0
  %1369 = vmatpush1.msra.mxu0 0.0
  %1370 = vmatprep.subr.mxu0 0.0
  %1371 = vmatpush1.msra.mxu0 0.0
  %1372 = vmatprep.subr.mxu0 0.0
  %1373 = vmatpush1.msra.mxu0 0.0
  %1374 = vmatprep.subr.mxu0 0.0
  %1375 = vmatpush1.msra.mxu0 0.0
  %1376 = vmatprep.subr.mxu0 0.0
  %1377 = vmatpush1.msra.mxu0 0.0
  %1378 = vmatprep.subr.mxu0 0.0
  %1379 = vmatpush1.msra.mxu0 0.0
  %1380 = vmatprep.subr.mxu0 0.0
  %1381 = vmatpush1.msra.mxu0 0.0
  %1382 = vmatprep.subr.mxu0 0.0
  %1383 = vmatpush1.msra.mxu0 0.0
  %1384 = vmatprep.subr.mxu0 0.0
  %1385 = vmatpush1.msra.mxu0 0.0
  %1386 = vmatprep.subr.mxu0 0.0
  %1387 = vmatpush1.msra.mxu0 0.0
  %1388 = vmatprep.subr.mxu0 0.0
  %1389 = vmatpush1.msra.mxu0 0.0
  %1390 = vmatprep.subr.mxu0 0.0
  %1391 = vmatpush1.msra.mxu0 0.0
  %1392 = vmatprep.subr.mxu0 0.0
  %1393 = vmatpush1.msra.mxu0 0.0
  %1394 = vmatprep.subr.mxu0 0.0
  %1395 = vmatpush1.msra.mxu0 0.0
  %1396 = vmatprep.subr.mxu0 0.0
  %1397 = vmatpush1.msra.mxu0 0.0
  %1398 = vmatprep.subr.mxu0 0.0
  %1399 = vmatpush1.msra.mxu0 0.0
  %1400 = vmatprep.subr.mxu0 0.0
  %1401 = vmatpush1.msra.mxu0 0.0
  %1402 = vmatprep.subr.mxu0 0.0
  %1403 = vmatpush1.msra.mxu0 0.0
  %1404 = vmatprep.subr.mxu0 0.0
  %1405 = vmatpush1.msra.mxu0 0.0
  %1406 = vmatprep.subr.mxu0 0.0
  %1407 = vmatpush1.msra.mxu0 0.0
  %1408 = vmatprep.subr.mxu0 0.0
  %1409 = vmatpush1.msra.mxu0 0.0
  %1410 = vmatprep.subr.mxu0 0.0
  %1411 = vmatpush1.msra.mxu0 0.0
  %1412 = vmatprep.subr.mxu0 0.0
  %1413 = vmatpush1.msra.mxu0 0.0
  %1414 = vmatprep.subr.mxu0 0.0
  %1415 = vmatpush1.msra.mxu0 0.0
  %1416 = vmatprep.subr.mxu0 0.0
  %1417 = vmatpush1.msra.mxu0 0.0
  %1418 = vmatprep.subr.mxu0 0.0
  %1419 = vmatpush1.msra.mxu0 0.0
  %1420 = vmatprep.subr.mxu0 0.0
  %1421 = vmatpush1.msra.mxu0 0.0
  %1422 = vmatprep.subr.mxu0 0.0
  %1423 = vmatpush1.msra.mxu0 0.0
  %1424 = vmatprep.subr.mxu0 0.0
  %1425 = vmatpush1.msra.mxu0 0.0
  %1426 = vmatprep.mubr.f32.mxu0 0.0
  %1427 = vmatmul.mubr.f32.gmra.mrb[0].mxu0 %v1357
  %v1428 = vpop.f32.mrb[0].mxu0
  %v1429 = vadd.f32 0.0, %v1428
  %v1430 = vpop.f32.mrb[0].mxu0
  %1431 = vmatprep.mubr.f32.mxu0 0.0
  %1432 = vmatmul.mubr.f32.gmra.mrb[0].mxu0 %v1360
  %v1433 = vpop.f32.mrb[0].mxu0
  %v1434 = vadd.f32 0.0, %v1433
  %v1435 = vpop.f32.mrb[0].mxu0
  %1436 = vdwg.mxu0
  %v1438 = vsel %vm378, %v1429, 0
  %v1441 = vsel %vm378, %v1434, 0
  %1443 = vmatprep.subr.mxu0 0.0
  %1444 = vmatpush1.msra.mxu0 %v377
  %1445 = vmatprep.subr.mxu0 0.0
  %1446 = vmatpush1.msra.mxu0 0.0
  %1447 = vmatprep.subr.mxu0 0.0
  %1448 = vmatpush1.msra.mxu0 0.0
  %1449 = vmatprep.subr.mxu0 0.0
  %1450 = vmatpush1.msra.mxu0 0.0
  %1451 = vmatprep.subr.mxu0 0.0
  %1452 = vmatpush1.msra.mxu0 0.0
  %1453 = vmatprep.subr.mxu0 0.0
  %1454 = vmatpush1.msra.mxu0 0.0
  %1455 = vmatprep.subr.mxu0 0.0
  %1456 = vmatpush1.msra.mxu0 0.0
  %1457 = vmatprep.subr.mxu0 0.0
  %1458 = vmatpush1.msra.mxu0 0.0
  %1459 = vmatprep.subr.mxu0 0.0
  %1460 = vmatpush1.msra.mxu0 0.0
  %1461 = vmatprep.subr.mxu0 0.0
  %1462 = vmatpush1.msra.mxu0 0.0
  %1463 = vmatprep.subr.mxu0 0.0
  %1464 = vmatpush1.msra.mxu0 0.0
  %1465 = vmatprep.subr.mxu0 0.0
  %1466 = vmatpush1.msra.mxu0 0.0
  %1467 = vmatprep.subr.mxu0 0.0
  %1468 = vmatpush1.msra.mxu0 0.0
  %1469 = vmatprep.subr.mxu0 0.0
  %1470 = vmatpush1.msra.mxu0 0.0
  %1471 = vmatprep.subr.mxu0 0.0
  %1472 = vmatpush1.msra.mxu0 0.0
  %1473 = vmatprep.subr.mxu0 0.0
  %1474 = vmatpush1.msra.mxu0 0.0
  %1475 = vmatprep.subr.mxu0 0.0
  %1476 = vmatpush1.msra.mxu0 0.0
  %1477 = vmatprep.subr.mxu0 0.0
  %1478 = vmatpush1.msra.mxu0 0.0
  %1479 = vmatprep.subr.mxu0 0.0
  %1480 = vmatpush1.msra.mxu0 0.0
  %1481 = vmatprep.subr.mxu0 0.0
  %1482 = vmatpush1.msra.mxu0 0.0
  %1483 = vmatprep.subr.mxu0 0.0
  %1484 = vmatpush1.msra.mxu0 0.0
  %1485 = vmatprep.subr.mxu0 0.0
  %1486 = vmatpush1.msra.mxu0 0.0
  %1487 = vmatprep.subr.mxu0 0.0
  %1488 = vmatpush1.msra.mxu0 0.0
  %1489 = vmatprep.subr.mxu0 0.0
  %1490 = vmatpush1.msra.mxu0 0.0
  %1491 = vmatprep.subr.mxu0 0.0
  %1492 = vmatpush1.msra.mxu0 0.0
  %1493 = vmatprep.subr.mxu0 0.0
  %1494 = vmatpush1.msra.mxu0 0.0
  %1495 = vmatprep.subr.mxu0 0.0
  %1496 = vmatpush1.msra.mxu0 0.0
  %1497 = vmatprep.subr.mxu0 0.0
  %1498 = vmatpush1.msra.mxu0 0.0
  %1499 = vmatprep.subr.mxu0 0.0
  %1500 = vmatpush1.msra.mxu0 0.0
  %1501 = vmatprep.subr.mxu0 0.0
  %1502 = vmatpush1.msra.mxu0 0.0
  %1503 = vmatprep.subr.mxu0 0.0
  %1504 = vmatpush1.msra.mxu0 0.0
  %1505 = vmatprep.subr.mxu0 0.0
  %1506 = vmatpush1.msra.mxu0 0.0
  %1507 = vmatprep.mubr.f32.mxu0 0.0
  %1508 = vmatmul.mubr.f32.gmra.mrb[0].mxu0 %v1438
  %v1509 = vpop.f32.mrb[0].mxu0
  %v1510 = vadd.f32 0.0, %v1509
  %v1511 = vpop.f32.mrb[0].mxu0
  %1512 = vmatprep.mubr.f32.mxu0 0.0
  %1513 = vmatmul.mubr.f32.gmra.mrb[0].mxu0 %v1441
  %v1514 = vpop.f32.mrb[0].mxu0
  %v1515 = vadd.f32 0.0, %v1514
  %v1516 = vpop.f32.mrb[0].mxu0
  %1517 = vdwg.mxu0
  %v1518 = vadd.f32 %v1231, %v1510
  %v1519 = vadd.f32 %v1232, %v1515
  %v1520 = vadd.f32 %v44, %v1518
  %v1521 = vadd.f32 %v45, %v1519
  %v1522 = vld [vmem:[%s8] sm:$0x1]
  %v1523 = vmul.f32 %v1520, %v1520
  %v1524 = vmul.f32 %v1521, %v1521
  %v1525 = vsel %vm63, %v1523, 0.0
  %1526 = vadd.xlane.f32.xlu0 %v1525
  %v1527 = vpop.xlane.xlu0 %1526
  %v1528 = vsel %vm63, %v1524, 0.0
  %1529 = vadd.xlane.f32.xlu0 %v1528
  %v1530 = vpop.xlane.xlu0 %1529
  %v1531 = vmul.f32 %v1527, %v70
  %v1532 = vmul.f32 %v1530, %v70
  %v1533 = vadd.f32 %v1531, 1e-05
  %v1534 = vadd.f32 %v1532, 1e-05
  %v1535 = vrsqrt.pop %v1533
  %v1536 = vrsqrt.pop %v1534
  %v1537 = vmul.f32 %v1520, %v1535
  %v1538 = vmul.f32 %v1521, %v1536
  %v1540 = vlaneseq
  %v1541 = vshrl.u32 %v1540, 7
  %v1542 = vsub.s32 0, %v1541
  %v1543 = vrot.slane %v1522, %v1542
  %v1545 = vmul.f32 %v1537, %v1543
  %v1546 = vmul.f32 %v1538, %v1543
  %v1547 = vld [vmem:[%s9] sm:$0xff]
  %v1548 = vld [vmem:[%s9 + $0x8] sm:$0xff]
  %v1549 = vld [vmem:[%s9 + $0x10] sm:$0xff]
  %v1550 = vld [vmem:[%s9 + $0x18] sm:$0xff]
  %v1551 = vld [vmem:[%s9 + $0x20] sm:$0xff]
  %v1552 = vld [vmem:[%s9 + $0x28] sm:$0xff]
  %v1553 = vld [vmem:[%s9 + $0x30] sm:$0xff]
  %v1554 = vld [vmem:[%s9 + $0x38] sm:$0xff]
  %v1556 = vsel %vm63, %v1545, 0
  %v1559 = vsel %vm63, %v1546, 0
  %1561 = vmatprep.subr.mxu0 %v1548
  %1562 = vmatpush1.msra.mxu0 %v1547
  %1563 = vmatprep.subr.mxu0 %v1550
  %1564 = vmatpush1.msra.mxu0 %v1549
  %1565 = vmatprep.subr.mxu0 %v1552
  %1566 = vmatpush1.msra.mxu0 %v1551
  %1567 = vmatprep.subr.mxu0 %v1554
  %1568 = vmatpush1.msra.mxu0 %v1553
  %1569 = vmatprep.subr.mxu0 0.0
  %1570 = vmatpush1.msra.mxu0 0.0
  %1571 = vmatprep.subr.mxu0 0.0
  %1572 = vmatpush1.msra.mxu0 0.0
  %1573 = vmatprep.subr.mxu0 0.0
  %1574 = vmatpush1.msra.mxu0 0.0
  %1575 = vmatprep.subr.mxu0 0.0
  %1576 = vmatpush1.msra.mxu0 0.0
  %1577 = vmatprep.subr.mxu0 0.0
  %1578 = vmatpush1.msra.mxu0 0.0
  %1579 = vmatprep.subr.mxu0 0.0
  %1580 = vmatpush1.msra.mxu0 0.0
  %1581 = vmatprep.subr.mxu0 0.0
  %1582 = vmatpush1.msra.mxu0 0.0
  %1583 = vmatprep.subr.mxu0 0.0
  %1584 = vmatpush1.msra.mxu0 0.0
  %1585 = vmatprep.subr.mxu0 0.0
  %1586 = vmatpush1.msra.mxu0 0.0
  %1587 = vmatprep.subr.mxu0 0.0
  %1588 = vmatpush1.msra.mxu0 0.0
  %1589 = vmatprep.subr.mxu0 0.0
  %1590 = vmatpush1.msra.mxu0 0.0
  %1591 = vmatprep.subr.mxu0 0.0
  %1592 = vmatpush1.msra.mxu0 0.0
  %1593 = vmatprep.subr.mxu0 0.0
  %1594 = vmatpush1.msra.mxu0 0.0
  %1595 = vmatprep.subr.mxu0 0.0
  %1596 = vmatpush1.msra.mxu0 0.0
  %1597 = vmatprep.subr.mxu0 0.0
  %1598 = vmatpush1.msra.mxu0 0.0
  %1599 = vmatprep.subr.mxu0 0.0
  %1600 = vmatpush1.msra.mxu0 0.0
  %1601 = vmatprep.subr.mxu0 0.0
  %1602 = vmatpush1.msra.mxu0 0.0
  %1603 = vmatprep.subr.mxu0 0.0
  %1604 = vmatpush1.msra.mxu0 0.0
  %1605 = vmatprep.subr.mxu0 0.0
  %1606 = vmatpush1.msra.mxu0 0.0
  %1607 = vmatprep.subr.mxu0 0.0
  %1608 = vmatpush1.msra.mxu0 0.0
  %1609 = vmatprep.subr.mxu0 0.0
  %1610 = vmatpush1.msra.mxu0 0.0
  %1611 = vmatprep.subr.mxu0 0.0
  %1612 = vmatpush1.msra.mxu0 0.0
  %1613 = vmatprep.subr.mxu0 0.0
  %1614 = vmatpush1.msra.mxu0 0.0
  %1615 = vmatprep.subr.mxu0 0.0
  %1616 = vmatpush1.msra.mxu0 0.0
  %1617 = vmatprep.subr.mxu0 0.0
  %1618 = vmatpush1.msra.mxu0 0.0
  %1619 = vmatprep.subr.mxu0 0.0
  %1620 = vmatpush1.msra.mxu0 0.0
  %1621 = vmatprep.subr.mxu0 0.0
  %1622 = vmatpush1.msra.mxu0 0.0
  %1623 = vmatprep.subr.mxu0 0.0
  %1624 = vmatpush1.msra.mxu0 0.0
  %1625 = vmatprep.mubr.f32.mxu0 0.0
  %1626 = vmatmul.mubr.f32.gmra.mrb[0].mxu0 %v1556
  %v1627 = vpop.f32.mrb[0].mxu0
  %v1628 = vadd.f32 0.0, %v1627
  %v1629 = vpop.f32.mrb[0].mxu0
  %v1630 = vadd.f32 0.0, %v1629
  %1631 = vmatprep.mubr.f32.mxu0 0.0
  %1632 = vmatmul.mubr.f32.gmra.mrb[0].mxu0 %v1559
  %v1633 = vpop.f32.mrb[0].mxu0
  %v1634 = vadd.f32 0.0, %v1633
  %v1635 = vpop.f32.mrb[0].mxu0
  %v1636 = vadd.f32 0.0, %v1635
  %1637 = vdwg.mxu0
  %v1638 = vxor.u32 %v1628, 2147483648
  %v1639 = vxor.u32 %v1634, 2147483648
  %v1640 = vmul.f32 %v1638, 1.442695
  %v1641 = vpow.pop %v1640
  %v1642 = vmul.f32 %v1639, 1.442695
  %v1643 = vpow.pop %v1642
  %v1644 = vadd.f32 %v1641, 1.0
  %v1645 = vadd.f32 %v1643, 1.0
  %v1646 = vrcp.pop %v1644
  %v1647 = vmul.f32 1.0, %v1646
  %v1648 = vrcp.pop %v1645
  %v1649 = vmul.f32 1.0, %v1648
  %v1650 = vmul.f32 %v1628, %v1647
  %v1651 = vmul.f32 %v1634, %v1649
  %1656 = vrot.lane.b32.xlu0 %v1628, 32
  %v1657 = vpop.permute.xlu0 %1656
  %1658 = vrot.lane.b32.xlu0 %v1630, 32
  %v1659 = vpop.permute.xlu0 %1658
  %1660 = vrot.lane.b32.xlu0 %v1634, 32
  %v1661 = vpop.permute.xlu0 %1660
  %1662 = vrot.lane.b32.xlu0 %v1636, 32
  %v1663 = vpop.permute.xlu0 %1662
  %v1664 = vsel %vm63, %v1657, %v1659
  %v1665 = vsel %vm63, %v1661, %v1663
  %v1668 = vmul.f32 %v1650, %v1664
  %v1669 = vmul.f32 %v1651, %v1665
  %v1670 = vld [vmem:[%s10] sm:$0xff]
  %v1671 = vld [vmem:[%s10 + $0x8] sm:$0xff]
  %v1672 = vld [vmem:[%s10 + $0x10] sm:$0xff]
  %v1673 = vld [vmem:[%s10 + $0x18] sm:$0xff]
  %v1674 = vld [vmem:[%s10 + $0x20] sm:$0xff]
  %v1675 = vld [vmem:[%s10 + $0x28] sm:$0xff]
  %v1676 = vld [vmem:[%s10 + $0x30] sm:$0xff]
  %v1677 = vld [vmem:[%s10 + $0x38] sm:$0xff]
  %v1678 = vld [vmem:[%s10 + $0x40] sm:$0xff]
  %v1679 = vld [vmem:[%s10 + $0x48] sm:$0xff]
  %v1680 = vld [vmem:[%s10 + $0x50] sm:$0xff]
  %v1681 = vld [vmem:[%s10 + $0x58] sm:$0xff]
  %vm1682 = vcmask 785408
  %v1684 = vsel %vm1682, %v1668, 0
  %v1687 = vsel %vm1682, %v1669, 0
  %1689 = vmatprep.subr.mxu0 0.0
  %1690 = vmatpush1.msra.mxu0 %v1670
  %1691 = vmatprep.subr.mxu0 0.0
  %1692 = vmatpush1.msra.mxu0 %v1671
  %1693 = vmatprep.subr.mxu0 0.0
  %1694 = vmatpush1.msra.mxu0 %v1672
  %1695 = vmatprep.subr.mxu0 0.0
  %1696 = vmatpush1.msra.mxu0 %v1673
  %1697 = vmatprep.subr.mxu0 0.0
  %1698 = vmatpush1.msra.mxu0 %v1674
  %1699 = vmatprep.subr.mxu0 0.0
  %1700 = vmatpush1.msra.mxu0 %v1675
  %1701 = vmatprep.subr.mxu0 0.0
  %1702 = vmatpush1.msra.mxu0 %v1676
  %1703 = vmatprep.subr.mxu0 0.0
  %1704 = vmatpush1.msra.mxu0 %v1677
  %1705 = vmatprep.subr.mxu0 0.0
  %1706 = vmatpush1.msra.mxu0 %v1678
  %1707 = vmatprep.subr.mxu0 0.0
  %1708 = vmatpush1.msra.mxu0 %v1679
  %1709 = vmatprep.subr.mxu0 0.0
  %1710 = vmatpush1.msra.mxu0 %v1680
  %1711 = vmatprep.subr.mxu0 0.0
  %1712 = vmatpush1.msra.mxu0 %v1681
  %1713 = vmatprep.subr.mxu0 0.0
  %1714 = vmatpush1.msra.mxu0 0.0
  %1715 = vmatprep.subr.mxu0 0.0
  %1716 = vmatpush1.msra.mxu0 0.0
  %1717 = vmatprep.subr.mxu0 0.0
  %1718 = vmatpush1.msra.mxu0 0.0
  %1719 = vmatprep.subr.mxu0 0.0
  %1720 = vmatpush1.msra.mxu0 0.0
  %1721 = vmatprep.subr.mxu0 0.0
  %1722 = vmatpush1.msra.mxu0 0.0
  %1723 = vmatprep.subr.mxu0 0.0
  %1724 = vmatpush1.msra.mxu0 0.0
  %1725 = vmatprep.subr.mxu0 0.0
  %1726 = vmatpush1.msra.mxu0 0.0
  %1727 = vmatprep.subr.mxu0 0.0
  %1728 = vmatpush1.msra.mxu0 0.0
  %1729 = vmatprep.subr.mxu0 0.0
  %1730 = vmatpush1.msra.mxu0 0.0
  %1731 = vmatprep.subr.mxu0 0.0
  %1732 = vmatpush1.msra.mxu0 0.0
  %1733 = vmatprep.subr.mxu0 0.0
  %1734 = vmatpush1.msra.mxu0 0.0
  %1735 = vmatprep.subr.mxu0 0.0
  %1736 = vmatpush1.msra.mxu0 0.0
  %1737 = vmatprep.subr.mxu0 0.0
  %1738 = vmatpush1.msra.mxu0 0.0
  %1739 = vmatprep.subr.mxu0 0.0
  %1740 = vmatpush1.msra.mxu0 0.0
  %1741 = vmatprep.subr.mxu0 0.0
  %1742 = vmatpush1.msra.mxu0 0.0
  %1743 = vmatprep.subr.mxu0 0.0
  %1744 = vmatpush1.msra.mxu0 0.0
  %1745 = vmatprep.subr.mxu0 0.0
  %1746 = vmatpush1.msra.mxu0 0.0
  %1747 = vmatprep.subr.mxu0 0.0
  %1748 = vmatpush1.msra.mxu0 0.0
  %1749 = vmatprep.subr.mxu0 0.0
  %1750 = vmatpush1.msra.mxu0 0.0
  %1751 = vmatprep.subr.mxu0 0.0
  %1752 = vmatpush1.msra.mxu0 0.0
  %1753 = vmatprep.mubr.f32.mxu0 0.0
  %1754 = vmatmul.mubr.f32.gmra.mrb[0].mxu0 %v1684
  %v1755 = vpop.f32.mrb[0].mxu0
  %v1756 = vadd.f32 0.0, %v1755
  %v1757 = vpop.f32.mrb[0].mxu0
  %1758 = vmatprep.mubr.f32.mxu0 0.0
  %1759 = vmatmul.mubr.f32.gmra.mrb[0].mxu0 %v1687
  %v1760 = vpop.f32.mrb[0].mxu0
  %v1761 = vadd.f32 0.0, %v1760
  %v1762 = vpop.f32.mrb[0].mxu0
  %1763 = vdwg.mxu0
  %v1764 = vadd.f32 %v1520, %v1756
  %v1765 = vadd.f32 %v1521, %v1761
  %s1766 = scalar_lea.vmem %s5, 1
  %v1767 = vld [vmem:[%s1766] sm:$0x1]
  %v1768 = vmul.f32 %v1764, %v1764
  %v1769 = vmul.f32 %v1765, %v1765
  %v1770 = vsel %vm63, %v1768, 0.0
  %1771 = vadd.xlane.f32.xlu0 %v1770
  %v1772 = vpop.xlane.xlu0 %1771
  %v1773 = vsel %vm63, %v1769, 0.0
  %1774 = vadd.xlane.f32.xlu0 %v1773
  %v1775 = vpop.xlane.xlu0 %1774
  %v1776 = vmul.f32 %v1772, %v70
  %v1777 = vmul.f32 %v1775, %v70
  %v1778 = vadd.f32 %v1776, 1e-05
  %v1779 = vadd.f32 %v1777, 1e-05
  %v1780 = vrsqrt.pop %v1778
  %v1781 = vrsqrt.pop %v1779
  %v1782 = vmul.f32 %v1764, %v1780
  %v1783 = vmul.f32 %v1765, %v1781
  %v1785 = vlaneseq
  %v1786 = vshrl.u32 %v1785, 7
  %v1787 = vsub.s32 0, %v1786
  %v1788 = vrot.slane %v1767, %v1787
  %v1790 = vmul.f32 %v1782, %v1788
  %v1791 = vmul.f32 %v1783, %v1788
  %s1792 = scalar_lea.vmem %s6, 32
  %v1793 = vld [vmem:[%s1792] sm:$0xff]
  %v1794 = vld [vmem:[%s1792 + $0x8] sm:$0xff]
  %v1795 = vld [vmem:[%s1792 + $0x10] sm:$0xff]
  %v1796 = vld [vmem:[%s1792 + $0x18] sm:$0xff]
  %v1798 = vsel %vm63, %v1790, 0
  %v1801 = vsel %vm63, %v1791, 0
  %1803 = vmatprep.subr.mxu0 0.0
  %1804 = vmatpush1.msra.mxu0 %v1793
  %1805 = vmatprep.subr.mxu0 0.0
  %1806 = vmatpush1.msra.mxu0 %v1794
  %1807 = vmatprep.subr.mxu0 0.0
  %1808 = vmatpush1.msra.mxu0 %v1795
  %1809 = vmatprep.subr.mxu0 0.0
  %1810 = vmatpush1.msra.mxu0 %v1796
  %1811 = vmatprep.subr.mxu0 0.0
  %1812 = vmatpush1.msra.mxu0 0.0
  %1813 = vmatprep.subr.mxu0 0.0
  %1814 = vmatpush1.msra.mxu0 0.0
  %1815 = vmatprep.subr.mxu0 0.0
  %1816 = vmatpush1.msra.mxu0 0.0
  %1817 = vmatprep.subr.mxu0 0.0
  %1818 = vmatpush1.msra.mxu0 0.0
  %1819 = vmatprep.subr.mxu0 0.0
  %1820 = vmatpush1.msra.mxu0 0.0
  %1821 = vmatprep.subr.mxu0 0.0
  %1822 = vmatpush1.msra.mxu0 0.0
  %1823 = vmatprep.subr.mxu0 0.0
  %1824 = vmatpush1.msra.mxu0 0.0
  %1825 = vmatprep.subr.mxu0 0.0
  %1826 = vmatpush1.msra.mxu0 0.0
  %1827 = vmatprep.subr.mxu0 0.0
  %1828 = vmatpush1.msra.mxu0 0.0
  %1829 = vmatprep.subr.mxu0 0.0
  %1830 = vmatpush1.msra.mxu0 0.0
  %1831 = vmatprep.subr.mxu0 0.0
  %1832 = vmatpush1.msra.mxu0 0.0
  %1833 = vmatprep.subr.mxu0 0.0
  %1834 = vmatpush1.msra.mxu0 0.0
  %1835 = vmatprep.subr.mxu0 0.0
  %1836 = vmatpush1.msra.mxu0 0.0
  %1837 = vmatprep.subr.mxu0 0.0
  %1838 = vmatpush1.msra.mxu0 0.0
  %1839 = vmatprep.subr.mxu0 0.0
  %1840 = vmatpush1.msra.mxu0 0.0
  %1841 = vmatprep.subr.mxu0 0.0
  %1842 = vmatpush1.msra.mxu0 0.0
  %1843 = vmatprep.subr.mxu0 0.0
  %1844 = vmatpush1.msra.mxu0 0.0
  %1845 = vmatprep.subr.mxu0 0.0
  %1846 = vmatpush1.msra.mxu0 0.0
  %1847 = vmatprep.subr.mxu0 0.0
  %1848 = vmatpush1.msra.mxu0 0.0
  %1849 = vmatprep.subr.mxu0 0.0
  %1850 = vmatpush1.msra.mxu0 0.0
  %1851 = vmatprep.subr.mxu0 0.0
  %1852 = vmatpush1.msra.mxu0 0.0
  %1853 = vmatprep.subr.mxu0 0.0
  %1854 = vmatpush1.msra.mxu0 0.0
  %1855 = vmatprep.subr.mxu0 0.0
  %1856 = vmatpush1.msra.mxu0 0.0
  %1857 = vmatprep.subr.mxu0 0.0
  %1858 = vmatpush1.msra.mxu0 0.0
  %1859 = vmatprep.subr.mxu0 0.0
  %1860 = vmatpush1.msra.mxu0 0.0
  %1861 = vmatprep.subr.mxu0 0.0
  %1862 = vmatpush1.msra.mxu0 0.0
  %1863 = vmatprep.subr.mxu0 0.0
  %1864 = vmatpush1.msra.mxu0 0.0
  %1865 = vmatprep.subr.mxu0 0.0
  %1866 = vmatpush1.msra.mxu0 0.0
  %1867 = vmatprep.mubr.f32.mxu0 0.0
  %1868 = vmatmul.mubr.f32.gmra.mrb[0].mxu0 %v1798
  %v1869 = vpop.f32.mrb[0].mxu0
  %v1870 = vadd.f32 0.0, %v1869
  %v1871 = vpop.f32.mrb[0].mxu0
  %1872 = vmatprep.mubr.f32.mxu0 0.0
  %1873 = vmatmul.mubr.f32.gmra.mrb[0].mxu0 %v1801
  %v1874 = vpop.f32.mrb[0].mxu0
  %v1875 = vadd.f32 0.0, %v1874
  %v1876 = vpop.f32.mrb[0].mxu0
  %1877 = vdwg.mxu0
  %v1879 = vsel %vm63, %v1870, 0
  %v1882 = vsel %vm63, %v1875, 0
  %1884 = vmatprep.subr.mxu0 0.0
  %1885 = vmatpush1.msra.mxu0 %v50
  %1886 = vmatprep.subr.mxu0 0.0
  %1887 = vmatpush1.msra.mxu0 %v51
  %1888 = vmatprep.subr.mxu0 0.0
  %1889 = vmatpush1.msra.mxu0 %v52
  %1890 = vmatprep.subr.mxu0 0.0
  %1891 = vmatpush1.msra.mxu0 %v53
  %1892 = vmatprep.subr.mxu0 0.0
  %1893 = vmatpush1.msra.mxu0 0.0
  %1894 = vmatprep.subr.mxu0 0.0
  %1895 = vmatpush1.msra.mxu0 0.0
  %1896 = vmatprep.subr.mxu0 0.0
  %1897 = vmatpush1.msra.mxu0 0.0
  %1898 = vmatprep.subr.mxu0 0.0
  %1899 = vmatpush1.msra.mxu0 0.0
  %1900 = vmatprep.subr.mxu0 0.0
  %1901 = vmatpush1.msra.mxu0 0.0
  %1902 = vmatprep.subr.mxu0 0.0
  %1903 = vmatpush1.msra.mxu0 0.0
  %1904 = vmatprep.subr.mxu0 0.0
  %1905 = vmatpush1.msra.mxu0 0.0
  %1906 = vmatprep.subr.mxu0 0.0
  %1907 = vmatpush1.msra.mxu0 0.0
  %1908 = vmatprep.subr.mxu0 0.0
  %1909 = vmatpush1.msra.mxu0 0.0
  %1910 = vmatprep.subr.mxu0 0.0
  %1911 = vmatpush1.msra.mxu0 0.0
  %1912 = vmatprep.subr.mxu0 0.0
  %1913 = vmatpush1.msra.mxu0 0.0
  %1914 = vmatprep.subr.mxu0 0.0
  %1915 = vmatpush1.msra.mxu0 0.0
  %1916 = vmatprep.subr.mxu0 0.0
  %1917 = vmatpush1.msra.mxu0 0.0
  %1918 = vmatprep.subr.mxu0 0.0
  %1919 = vmatpush1.msra.mxu0 0.0
  %1920 = vmatprep.subr.mxu0 0.0
  %1921 = vmatpush1.msra.mxu0 0.0
  %1922 = vmatprep.subr.mxu0 0.0
  %1923 = vmatpush1.msra.mxu0 0.0
  %1924 = vmatprep.subr.mxu0 0.0
  %1925 = vmatpush1.msra.mxu0 0.0
  %1926 = vmatprep.subr.mxu0 0.0
  %1927 = vmatpush1.msra.mxu0 0.0
  %1928 = vmatprep.subr.mxu0 0.0
  %1929 = vmatpush1.msra.mxu0 0.0
  %1930 = vmatprep.subr.mxu0 0.0
  %1931 = vmatpush1.msra.mxu0 0.0
  %1932 = vmatprep.subr.mxu0 0.0
  %1933 = vmatpush1.msra.mxu0 0.0
  %1934 = vmatprep.subr.mxu0 0.0
  %1935 = vmatpush1.msra.mxu0 0.0
  %1936 = vmatprep.subr.mxu0 0.0
  %1937 = vmatpush1.msra.mxu0 0.0
  %1938 = vmatprep.subr.mxu0 0.0
  %1939 = vmatpush1.msra.mxu0 0.0
  %1940 = vmatprep.subr.mxu0 0.0
  %1941 = vmatpush1.msra.mxu0 0.0
  %1942 = vmatprep.subr.mxu0 0.0
  %1943 = vmatpush1.msra.mxu0 0.0
  %1944 = vmatprep.subr.mxu0 0.0
  %1945 = vmatpush1.msra.mxu0 0.0
  %1946 = vmatprep.subr.mxu0 0.0
  %1947 = vmatpush1.msra.mxu0 0.0
  %1948 = vmatprep.mubr.f32.mxu0 0.0
  %1949 = vmatmul.mubr.f32.gmra.mrb[0].mxu0 %v1879
  %v1950 = vpop.f32.mrb[0].mxu0
  %v1951 = vadd.f32 0.0, %v1950
  %v1952 = vpop.f32.mrb[0].mxu0
  %1953 = vmatprep.mubr.f32.mxu0 0.0
  %1954 = vmatmul.mubr.f32.gmra.mrb[0].mxu0 %v1882
  %v1955 = vpop.f32.mrb[0].mxu0
  %v1956 = vadd.f32 0.0, %v1955
  %v1957 = vpop.f32.mrb[0].mxu0
  %1958 = vdwg.mxu0
  %1959 = vrot.lane.b32.xlu0 %v1870, 96
  %v1960 = vpop.permute.xlu0 %1959
  %1961 = vrot.lane.b32.xlu0 %v1875, 96
  %v1962 = vpop.permute.xlu0 %1961
  %v1963 = vsel %vm63, %v1960, 0
  %v1965 = vsel %vm63, %v1962, 0
  %1967 = vmatprep.subr.mxu0 0.0
  %1968 = vmatpush1.msra.mxu0 %v50
  %1969 = vmatprep.subr.mxu0 0.0
  %1970 = vmatpush1.msra.mxu0 %v51
  %1971 = vmatprep.subr.mxu0 0.0
  %1972 = vmatpush1.msra.mxu0 %v52
  %1973 = vmatprep.subr.mxu0 0.0
  %1974 = vmatpush1.msra.mxu0 %v53
  %1975 = vmatprep.subr.mxu0 0.0
  %1976 = vmatpush1.msra.mxu0 0.0
  %1977 = vmatprep.subr.mxu0 0.0
  %1978 = vmatpush1.msra.mxu0 0.0
  %1979 = vmatprep.subr.mxu0 0.0
  %1980 = vmatpush1.msra.mxu0 0.0
  %1981 = vmatprep.subr.mxu0 0.0
  %1982 = vmatpush1.msra.mxu0 0.0
  %1983 = vmatprep.subr.mxu0 0.0
  %1984 = vmatpush1.msra.mxu0 0.0
  %1985 = vmatprep.subr.mxu0 0.0
  %1986 = vmatpush1.msra.mxu0 0.0
  %1987 = vmatprep.subr.mxu0 0.0
  %1988 = vmatpush1.msra.mxu0 0.0
  %1989 = vmatprep.subr.mxu0 0.0
  %1990 = vmatpush1.msra.mxu0 0.0
  %1991 = vmatprep.subr.mxu0 0.0
  %1992 = vmatpush1.msra.mxu0 0.0
  %1993 = vmatprep.subr.mxu0 0.0
  %1994 = vmatpush1.msra.mxu0 0.0
  %1995 = vmatprep.subr.mxu0 0.0
  %1996 = vmatpush1.msra.mxu0 0.0
  %1997 = vmatprep.subr.mxu0 0.0
  %1998 = vmatpush1.msra.mxu0 0.0
  %1999 = vmatprep.subr.mxu0 0.0
  %2000 = vmatpush1.msra.mxu0 0.0
  %2001 = vmatprep.subr.mxu0 0.0
  %2002 = vmatpush1.msra.mxu0 0.0
  %2003 = vmatprep.subr.mxu0 0.0
  %2004 = vmatpush1.msra.mxu0 0.0
  %2005 = vmatprep.subr.mxu0 0.0
  %2006 = vmatpush1.msra.mxu0 0.0
  %2007 = vmatprep.subr.mxu0 0.0
  %2008 = vmatpush1.msra.mxu0 0.0
  %2009 = vmatprep.subr.mxu0 0.0
  %2010 = vmatpush1.msra.mxu0 0.0
  %2011 = vmatprep.subr.mxu0 0.0
  %2012 = vmatpush1.msra.mxu0 0.0
  %2013 = vmatprep.subr.mxu0 0.0
  %2014 = vmatpush1.msra.mxu0 0.0
  %2015 = vmatprep.subr.mxu0 0.0
  %2016 = vmatpush1.msra.mxu0 0.0
  %2017 = vmatprep.subr.mxu0 0.0
  %2018 = vmatpush1.msra.mxu0 0.0
  %2019 = vmatprep.subr.mxu0 0.0
  %2020 = vmatpush1.msra.mxu0 0.0
  %2021 = vmatprep.subr.mxu0 0.0
  %2022 = vmatpush1.msra.mxu0 0.0
  %2023 = vmatprep.subr.mxu0 0.0
  %2024 = vmatpush1.msra.mxu0 0.0
  %2025 = vmatprep.subr.mxu0 0.0
  %2026 = vmatpush1.msra.mxu0 0.0
  %2027 = vmatprep.subr.mxu0 0.0
  %2028 = vmatpush1.msra.mxu0 0.0
  %2029 = vmatprep.subr.mxu0 0.0
  %2030 = vmatpush1.msra.mxu0 0.0
  %2031 = vmatprep.mubr.f32.mxu0 0.0
  %2032 = vmatmul.mubr.f32.gmra.mrb[0].mxu0 %v1963
  %v2033 = vpop.f32.mrb[0].mxu0
  %v2034 = vadd.f32 0.0, %v2033
  %v2035 = vpop.f32.mrb[0].mxu0
  %2036 = vmatprep.mubr.f32.mxu0 0.0
  %2037 = vmatmul.mubr.f32.gmra.mrb[0].mxu0 %v1965
  %v2038 = vpop.f32.mrb[0].mxu0
  %v2039 = vadd.f32 0.0, %v2038
  %v2040 = vpop.f32.mrb[0].mxu0
  %2041 = vdwg.mxu0
  %v2042 = vmul.f32 %v1870, %v46
  %v2043 = vmul.f32 %v1875, %v47
  %v2044 = vmul.f32 %v1951, %v48
  %v2045 = vmul.f32 %v1956, %v49
  %v2046 = vadd.f32 %v2042, %v2044
  %v2047 = vadd.f32 %v2043, %v2045
  %v2048 = vmul.f32 %v1870, %v345
  %v2049 = vmul.f32 %v1875, %v347
  %v2050 = vmul.f32 %v2034, %v48
  %v2051 = vmul.f32 %v2039, %v49
  %2054 = vrot.lane.b32.xlu0 %v2050, 32
  %v2055 = vpop.permute.xlu0 %2054
  %2056 = vrot.lane.b32.xlu0 %v2051, 32
  %v2057 = vpop.permute.xlu0 %2056
  %v2060 = vadd.f32 %v2048, %v2055
  %v2061 = vadd.f32 %v2049, %v2057
  %2064 = vrot.lane.b32.xlu0 %v2060, 96
  %v2065 = vpop.permute.xlu0 %2064
  %2066 = vrot.lane.b32.xlu0 %v2061, 96
  %v2067 = vpop.permute.xlu0 %2066
  %v2070 = vsel %vm59, %v2046, %v2065
  %v2071 = vsel %vm59, %v2047, %v2067
  %s2072 = scalar_lea.vmem %s7, 32
  %v2073 = vld [vmem:[%s2072] sm:$0xff]
  %v2074 = vld [vmem:[%s2072 + $0x8] sm:$0xff]
  %v2075 = vld [vmem:[%s2072 + $0x10] sm:$0xff]
  %v2076 = vld [vmem:[%s2072 + $0x18] sm:$0xff]
  %v2078 = vsel %vm378, %v2046, 0
  %v2081 = vsel %vm378, %v2047, 0
  %v2084 = vsel %vm378, %v2070, 0
  %v2087 = vsel %vm378, %v2071, 0
  %2089 = vmatprep.subr.mxu0 0.0
  %2090 = vmatpush1.xpose.msra.mxu0 %v2084
  %2091 = vmatprep.subr.mxu0 0.0
  %2092 = vmatpush1.xpose.msra.mxu0 %v2087
  %2093 = vmatprep.subr.mxu0 0.0
  %2094 = vmatpush1.xpose.msra.mxu0 0.0
  %2095 = vmatprep.subr.mxu0 0.0
  %2096 = vmatpush1.xpose.msra.mxu0 0.0
  %2097 = vmatprep.subr.mxu0 0.0
  %2098 = vmatpush1.xpose.msra.mxu0 0.0
  %2099 = vmatprep.subr.mxu0 0.0
  %2100 = vmatpush1.xpose.msra.mxu0 0.0
  %2101 = vmatprep.subr.mxu0 0.0
  %2102 = vmatpush1.xpose.msra.mxu0 0.0
  %2103 = vmatprep.subr.mxu0 0.0
  %2104 = vmatpush1.xpose.msra.mxu0 0.0
  %2105 = vmatprep.subr.mxu0 0.0
  %2106 = vmatpush1.xpose.msra.mxu0 0.0
  %2107 = vmatprep.subr.mxu0 0.0
  %2108 = vmatpush1.xpose.msra.mxu0 0.0
  %2109 = vmatprep.subr.mxu0 0.0
  %2110 = vmatpush1.xpose.msra.mxu0 0.0
  %2111 = vmatprep.subr.mxu0 0.0
  %2112 = vmatpush1.xpose.msra.mxu0 0.0
  %2113 = vmatprep.subr.mxu0 0.0
  %2114 = vmatpush1.xpose.msra.mxu0 0.0
  %2115 = vmatprep.subr.mxu0 0.0
  %2116 = vmatpush1.xpose.msra.mxu0 0.0
  %2117 = vmatprep.subr.mxu0 0.0
  %2118 = vmatpush1.xpose.msra.mxu0 0.0
  %2119 = vmatprep.subr.mxu0 0.0
  %2120 = vmatpush1.xpose.msra.mxu0 0.0
  %2121 = vmatprep.subr.mxu0 0.0
  %2122 = vmatpush1.xpose.msra.mxu0 0.0
  %2123 = vmatprep.subr.mxu0 0.0
  %2124 = vmatpush1.xpose.msra.mxu0 0.0
  %2125 = vmatprep.subr.mxu0 0.0
  %2126 = vmatpush1.xpose.msra.mxu0 0.0
  %2127 = vmatprep.subr.mxu0 0.0
  %2128 = vmatpush1.xpose.msra.mxu0 0.0
  %2129 = vmatprep.subr.mxu0 0.0
  %2130 = vmatpush1.xpose.msra.mxu0 0.0
  %2131 = vmatprep.subr.mxu0 0.0
  %2132 = vmatpush1.xpose.msra.mxu0 0.0
  %2133 = vmatprep.subr.mxu0 0.0
  %2134 = vmatpush1.xpose.msra.mxu0 0.0
  %2135 = vmatprep.subr.mxu0 0.0
  %2136 = vmatpush1.xpose.msra.mxu0 0.0
  %2137 = vmatprep.subr.mxu0 0.0
  %2138 = vmatpush1.xpose.msra.mxu0 0.0
  %2139 = vmatprep.subr.mxu0 0.0
  %2140 = vmatpush1.xpose.msra.mxu0 0.0
  %2141 = vmatprep.subr.mxu0 0.0
  %2142 = vmatpush1.xpose.msra.mxu0 0.0
  %2143 = vmatprep.subr.mxu0 0.0
  %2144 = vmatpush1.xpose.msra.mxu0 0.0
  %2145 = vmatprep.subr.mxu0 0.0
  %2146 = vmatpush1.xpose.msra.mxu0 0.0
  %2147 = vmatprep.subr.mxu0 0.0
  %2148 = vmatpush1.xpose.msra.mxu0 0.0
  %2149 = vmatprep.subr.mxu0 0.0
  %2150 = vmatpush1.xpose.msra.mxu0 0.0
  %2151 = vmatprep.subr.mxu0 0.0
  %2152 = vmatpush1.xpose.msra.mxu0 0.0
  %2153 = vmatprep.mubr.f32.mxu0 0.0
  %2154 = vmatmul.mubr.f32.gmra.mrb[0].mxu0 %v2078
  %v2155 = vpop.f32.mrb[0].mxu0
  %v2156 = vadd.f32 0.0, %v2155
  %v2157 = vpop.f32.mrb[0].mxu0
  %2158 = vmatprep.mubr.f32.mxu0 0.0
  %2159 = vmatmul.mubr.f32.gmra.mrb[0].mxu0 %v2081
  %v2160 = vpop.f32.mrb[0].mxu0
  %v2161 = vadd.f32 0.0, %v2160
  %v2162 = vpop.f32.mrb[0].mxu0
  %2163 = vdwg.mxu0
  %v2164 = vmul.f32 %v2156, 0.35355338
  %v2165 = vmul.f32 %v2161, 0.35355338
  %v2166 = vadd.f32 %v2164, %v54
  %v2167 = vadd.f32 %v2165, %v55
  %v2168 = vsel %vm470, %v2166, -inf
  %2169 = vmax.xlane.f32.xlu0 %v2168
  %v2170 = vpop.xlane.xlu0 %2169
  %v2171 = vsel %vm470, %v2167, -inf
  %2172 = vmax.xlane.f32.xlu0 %v2171
  %v2173 = vpop.xlane.xlu0 %2172
  %v2174 = vsub.f32 %v2166, %v2170
  %v2175 = vsub.f32 %v2167, %v2173
  %v2176 = vmul.f32 %v2174, 1.442695
  %v2177 = vpow.pop %v2176
  %v2178 = vmul.f32 %v2175, 1.442695
  %v2179 = vpow.pop %v2178
  %v2180 = vsel %vm470, %v2177, 0.0
  %2181 = vadd.xlane.f32.xlu0 %v2180
  %v2182 = vpop.xlane.xlu0 %2181
  %v2183 = vsel %vm470, %v2179, 0.0
  %2184 = vadd.xlane.f32.xlu0 %v2183
  %v2185 = vpop.xlane.xlu0 %2184
  %v2186 = vrcp.pop %v2182
  %v2187 = vrcp.pop %v2185
  %v2188 = vmul.f32 %v2177, %v2186
  %v2189 = vmul.f32 %v2179, %v2187
  %2190 = vrot.lane.b32.xlu0 %v1870, 64
  %v2191 = vpop.permute.xlu0 %2190
  %2192 = vrot.lane.b32.xlu0 %v1875, 64
  %v2193 = vpop.permute.xlu0 %2192
  %v2197 = vsel %vm470, %v2188, 0
  %v2200 = vsel %vm470, %v2189, 0
  %2202 = vmatprep.subr.mxu0 0.0
  %2203 = vmatpush1.msra.mxu0 %v2191
  %2204 = vmatprep.subr.mxu0 0.0
  %2205 = vmatpush1.msra.mxu0 %v2193
  %2206 = vmatprep.subr.mxu0 0.0
  %2207 = vmatpush1.msra.mxu0 0.0
  %2208 = vmatprep.subr.mxu0 0.0
  %2209 = vmatpush1.msra.mxu0 0.0
  %2210 = vmatprep.subr.mxu0 0.0
  %2211 = vmatpush1.msra.mxu0 0.0
  %2212 = vmatprep.subr.mxu0 0.0
  %2213 = vmatpush1.msra.mxu0 0.0
  %2214 = vmatprep.subr.mxu0 0.0
  %2215 = vmatpush1.msra.mxu0 0.0
  %2216 = vmatprep.subr.mxu0 0.0
  %2217 = vmatpush1.msra.mxu0 0.0
  %2218 = vmatprep.subr.mxu0 0.0
  %2219 = vmatpush1.msra.mxu0 0.0
  %2220 = vmatprep.subr.mxu0 0.0
  %2221 = vmatpush1.msra.mxu0 0.0
  %2222 = vmatprep.subr.mxu0 0.0
  %2223 = vmatpush1.msra.mxu0 0.0
  %2224 = vmatprep.subr.mxu0 0.0
  %2225 = vmatpush1.msra.mxu0 0.0
  %2226 = vmatprep.subr.mxu0 0.0
  %2227 = vmatpush1.msra.mxu0 0.0
  %2228 = vmatprep.subr.mxu0 0.0
  %2229 = vmatpush1.msra.mxu0 0.0
  %2230 = vmatprep.subr.mxu0 0.0
  %2231 = vmatpush1.msra.mxu0 0.0
  %2232 = vmatprep.subr.mxu0 0.0
  %2233 = vmatpush1.msra.mxu0 0.0
  %2234 = vmatprep.subr.mxu0 0.0
  %2235 = vmatpush1.msra.mxu0 0.0
  %2236 = vmatprep.subr.mxu0 0.0
  %2237 = vmatpush1.msra.mxu0 0.0
  %2238 = vmatprep.subr.mxu0 0.0
  %2239 = vmatpush1.msra.mxu0 0.0
  %2240 = vmatprep.subr.mxu0 0.0
  %2241 = vmatpush1.msra.mxu0 0.0
  %2242 = vmatprep.subr.mxu0 0.0
  %2243 = vmatpush1.msra.mxu0 0.0
  %2244 = vmatprep.subr.mxu0 0.0
  %2245 = vmatpush1.msra.mxu0 0.0
  %2246 = vmatprep.subr.mxu0 0.0
  %2247 = vmatpush1.msra.mxu0 0.0
  %2248 = vmatprep.subr.mxu0 0.0
  %2249 = vmatpush1.msra.mxu0 0.0
  %2250 = vmatprep.subr.mxu0 0.0
  %2251 = vmatpush1.msra.mxu0 0.0
  %2252 = vmatprep.subr.mxu0 0.0
  %2253 = vmatpush1.msra.mxu0 0.0
  %2254 = vmatprep.subr.mxu0 0.0
  %2255 = vmatpush1.msra.mxu0 0.0
  %2256 = vmatprep.subr.mxu0 0.0
  %2257 = vmatpush1.msra.mxu0 0.0
  %2258 = vmatprep.subr.mxu0 0.0
  %2259 = vmatpush1.msra.mxu0 0.0
  %2260 = vmatprep.subr.mxu0 0.0
  %2261 = vmatpush1.msra.mxu0 0.0
  %2262 = vmatprep.subr.mxu0 0.0
  %2263 = vmatpush1.msra.mxu0 0.0
  %2264 = vmatprep.subr.mxu0 0.0
  %2265 = vmatpush1.msra.mxu0 0.0
  %2266 = vmatprep.mubr.f32.mxu0 0.0
  %2267 = vmatmul.mubr.f32.gmra.mrb[0].mxu0 %v2197
  %v2268 = vpop.f32.mrb[0].mxu0
  %v2269 = vadd.f32 0.0, %v2268
  %v2270 = vpop.f32.mrb[0].mxu0
  %2271 = vmatprep.mubr.f32.mxu0 0.0
  %2272 = vmatmul.mubr.f32.gmra.mrb[0].mxu0 %v2200
  %v2273 = vpop.f32.mrb[0].mxu0
  %v2274 = vadd.f32 0.0, %v2273
  %v2275 = vpop.f32.mrb[0].mxu0
  %2276 = vdwg.mxu0
  %2277 = vrot.lane.b32.xlu0 %v2046, 120
  %v2278 = vpop.permute.xlu0 %2277
  %2279 = vrot.lane.b32.xlu0 %v2047, 120
  %v2280 = vpop.permute.xlu0 %2279
  %2281 = vrot.lane.b32.xlu0 %v2070, 120
  %v2282 = vpop.permute.xlu0 %2281
  %2283 = vrot.lane.b32.xlu0 %v2071, 120
  %v2284 = vpop.permute.xlu0 %2283
  %v2285 = vsel %vm378, %v2278, 0
  %v2287 = vsel %vm378, %v2280, 0
  %v2289 = vsel %vm378, %v2282, 0
  %v2291 = vsel %vm378, %v2284, 0
  %2293 = vmatprep.subr.mxu0 0.0
  %2294 = vmatpush1.xpose.msra.mxu0 %v2289
  %2295 = vmatprep.subr.mxu0 0.0
  %2296 = vmatpush1.xpose.msra.mxu0 %v2291
  %2297 = vmatprep.subr.mxu0 0.0
  %2298 = vmatpush1.xpose.msra.mxu0 0.0
  %2299 = vmatprep.subr.mxu0 0.0
  %2300 = vmatpush1.xpose.msra.mxu0 0.0
  %2301 = vmatprep.subr.mxu0 0.0
  %2302 = vmatpush1.xpose.msra.mxu0 0.0
  %2303 = vmatprep.subr.mxu0 0.0
  %2304 = vmatpush1.xpose.msra.mxu0 0.0
  %2305 = vmatprep.subr.mxu0 0.0
  %2306 = vmatpush1.xpose.msra.mxu0 0.0
  %2307 = vmatprep.subr.mxu0 0.0
  %2308 = vmatpush1.xpose.msra.mxu0 0.0
  %2309 = vmatprep.subr.mxu0 0.0
  %2310 = vmatpush1.xpose.msra.mxu0 0.0
  %2311 = vmatprep.subr.mxu0 0.0
  %2312 = vmatpush1.xpose.msra.mxu0 0.0
  %2313 = vmatprep.subr.mxu0 0.0
  %2314 = vmatpush1.xpose.msra.mxu0 0.0
  %2315 = vmatprep.subr.mxu0 0.0
  %2316 = vmatpush1.xpose.msra.mxu0 0.0
  %2317 = vmatprep.subr.mxu0 0.0
  %2318 = vmatpush1.xpose.msra.mxu0 0.0
  %2319 = vmatprep.subr.mxu0 0.0
  %2320 = vmatpush1.xpose.msra.mxu0 0.0
  %2321 = vmatprep.subr.mxu0 0.0
  %2322 = vmatpush1.xpose.msra.mxu0 0.0
  %2323 = vmatprep.subr.mxu0 0.0
  %2324 = vmatpush1.xpose.msra.mxu0 0.0
  %2325 = vmatprep.subr.mxu0 0.0
  %2326 = vmatpush1.xpose.msra.mxu0 0.0
  %2327 = vmatprep.subr.mxu0 0.0
  %2328 = vmatpush1.xpose.msra.mxu0 0.0
  %2329 = vmatprep.subr.mxu0 0.0
  %2330 = vmatpush1.xpose.msra.mxu0 0.0
  %2331 = vmatprep.subr.mxu0 0.0
  %2332 = vmatpush1.xpose.msra.mxu0 0.0
  %2333 = vmatprep.subr.mxu0 0.0
  %2334 = vmatpush1.xpose.msra.mxu0 0.0
  %2335 = vmatprep.subr.mxu0 0.0
  %2336 = vmatpush1.xpose.msra.mxu0 0.0
  %2337 = vmatprep.subr.mxu0 0.0
  %2338 = vmatpush1.xpose.msra.mxu0 0.0
  %2339 = vmatprep.subr.mxu0 0.0
  %2340 = vmatpush1.xpose.msra.mxu0 0.0
  %2341 = vmatprep.subr.mxu0 0.0
  %2342 = vmatpush1.xpose.msra.mxu0 0.0
  %2343 = vmatprep.subr.mxu0 0.0
  %2344 = vmatpush1.xpose.msra.mxu0 0.0
  %2345 = vmatprep.subr.mxu0 0.0
  %2346 = vmatpush1.xpose.msra.mxu0 0.0
  %2347 = vmatprep.subr.mxu0 0.0
  %2348 = vmatpush1.xpose.msra.mxu0 0.0
  %2349 = vmatprep.subr.mxu0 0.0
  %2350 = vmatpush1.xpose.msra.mxu0 0.0
  %2351 = vmatprep.subr.mxu0 0.0
  %2352 = vmatpush1.xpose.msra.mxu0 0.0
  %2353 = vmatprep.subr.mxu0 0.0
  %2354 = vmatpush1.xpose.msra.mxu0 0.0
  %2355 = vmatprep.subr.mxu0 0.0
  %2356 = vmatpush1.xpose.msra.mxu0 0.0
  %2357 = vmatprep.mubr.f32.mxu0 0.0
  %2358 = vmatmul.mubr.f32.gmra.mrb[0].mxu0 %v2285
  %v2359 = vpop.f32.mrb[0].mxu0
  %v2360 = vadd.f32 0.0, %v2359
  %v2361 = vpop.f32.mrb[0].mxu0
  %2362 = vmatprep.mubr.f32.mxu0 0.0
  %2363 = vmatmul.mubr.f32.gmra.mrb[0].mxu0 %v2287
  %v2364 = vpop.f32.mrb[0].mxu0
  %v2365 = vadd.f32 0.0, %v2364
  %v2366 = vpop.f32.mrb[0].mxu0
  %2367 = vdwg.mxu0
  %v2368 = vmul.f32 %v2360, 0.35355338
  %v2369 = vmul.f32 %v2365, 0.35355338
  %v2370 = vadd.f32 %v2368, %v54
  %v2371 = vadd.f32 %v2369, %v55
  %v2372 = vsel %vm470, %v2370, -inf
  %2373 = vmax.xlane.f32.xlu0 %v2372
  %v2374 = vpop.xlane.xlu0 %2373
  %v2375 = vsel %vm470, %v2371, -inf
  %2376 = vmax.xlane.f32.xlu0 %v2375
  %v2377 = vpop.xlane.xlu0 %2376
  %v2378 = vsub.f32 %v2370, %v2374
  %v2379 = vsub.f32 %v2371, %v2377
  %v2380 = vmul.f32 %v2378, 1.442695
  %v2381 = vpow.pop %v2380
  %v2382 = vmul.f32 %v2379, 1.442695
  %v2383 = vpow.pop %v2382
  %v2384 = vsel %vm470, %v2381, 0.0
  %2385 = vadd.xlane.f32.xlu0 %v2384
  %v2386 = vpop.xlane.xlu0 %2385
  %v2387 = vsel %vm470, %v2383, 0.0
  %2388 = vadd.xlane.f32.xlu0 %v2387
  %v2389 = vpop.xlane.xlu0 %2388
  %v2390 = vrcp.pop %v2386
  %v2391 = vrcp.pop %v2389
  %v2392 = vmul.f32 %v2381, %v2390
  %v2393 = vmul.f32 %v2383, %v2391
  %2394 = vrot.lane.b32.xlu0 %v1870, 56
  %v2395 = vpop.permute.xlu0 %2394
  %2396 = vrot.lane.b32.xlu0 %v1875, 56
  %v2397 = vpop.permute.xlu0 %2396
  %v2401 = vsel %vm470, %v2392, 0
  %v2404 = vsel %vm470, %v2393, 0
  %2406 = vmatprep.subr.mxu0 0.0
  %2407 = vmatpush1.msra.mxu0 %v2395
  %2408 = vmatprep.subr.mxu0 0.0
  %2409 = vmatpush1.msra.mxu0 %v2397
  %2410 = vmatprep.subr.mxu0 0.0
  %2411 = vmatpush1.msra.mxu0 0.0
  %2412 = vmatprep.subr.mxu0 0.0
  %2413 = vmatpush1.msra.mxu0 0.0
  %2414 = vmatprep.subr.mxu0 0.0
  %2415 = vmatpush1.msra.mxu0 0.0
  %2416 = vmatprep.subr.mxu0 0.0
  %2417 = vmatpush1.msra.mxu0 0.0
  %2418 = vmatprep.subr.mxu0 0.0
  %2419 = vmatpush1.msra.mxu0 0.0
  %2420 = vmatprep.subr.mxu0 0.0
  %2421 = vmatpush1.msra.mxu0 0.0
  %2422 = vmatprep.subr.mxu0 0.0
  %2423 = vmatpush1.msra.mxu0 0.0
  %2424 = vmatprep.subr.mxu0 0.0
  %2425 = vmatpush1.msra.mxu0 0.0
  %2426 = vmatprep.subr.mxu0 0.0
  %2427 = vmatpush1.msra.mxu0 0.0
  %2428 = vmatprep.subr.mxu0 0.0
  %2429 = vmatpush1.msra.mxu0 0.0
  %2430 = vmatprep.subr.mxu0 0.0
  %2431 = vmatpush1.msra.mxu0 0.0
  %2432 = vmatprep.subr.mxu0 0.0
  %2433 = vmatpush1.msra.mxu0 0.0
  %2434 = vmatprep.subr.mxu0 0.0
  %2435 = vmatpush1.msra.mxu0 0.0
  %2436 = vmatprep.subr.mxu0 0.0
  %2437 = vmatpush1.msra.mxu0 0.0
  %2438 = vmatprep.subr.mxu0 0.0
  %2439 = vmatpush1.msra.mxu0 0.0
  %2440 = vmatprep.subr.mxu0 0.0
  %2441 = vmatpush1.msra.mxu0 0.0
  %2442 = vmatprep.subr.mxu0 0.0
  %2443 = vmatpush1.msra.mxu0 0.0
  %2444 = vmatprep.subr.mxu0 0.0
  %2445 = vmatpush1.msra.mxu0 0.0
  %2446 = vmatprep.subr.mxu0 0.0
  %2447 = vmatpush1.msra.mxu0 0.0
  %2448 = vmatprep.subr.mxu0 0.0
  %2449 = vmatpush1.msra.mxu0 0.0
  %2450 = vmatprep.subr.mxu0 0.0
  %2451 = vmatpush1.msra.mxu0 0.0
  %2452 = vmatprep.subr.mxu0 0.0
  %2453 = vmatpush1.msra.mxu0 0.0
  %2454 = vmatprep.subr.mxu0 0.0
  %2455 = vmatpush1.msra.mxu0 0.0
  %2456 = vmatprep.subr.mxu0 0.0
  %2457 = vmatpush1.msra.mxu0 0.0
  %2458 = vmatprep.subr.mxu0 0.0
  %2459 = vmatpush1.msra.mxu0 0.0
  %2460 = vmatprep.subr.mxu0 0.0
  %2461 = vmatpush1.msra.mxu0 0.0
  %2462 = vmatprep.subr.mxu0 0.0
  %2463 = vmatpush1.msra.mxu0 0.0
  %2464 = vmatprep.subr.mxu0 0.0
  %2465 = vmatpush1.msra.mxu0 0.0
  %2466 = vmatprep.subr.mxu0 0.0
  %2467 = vmatpush1.msra.mxu0 0.0
  %2468 = vmatprep.subr.mxu0 0.0
  %2469 = vmatpush1.msra.mxu0 0.0
  %2470 = vmatprep.mubr.f32.mxu0 0.0
  %2471 = vmatmul.mubr.f32.gmra.mrb[0].mxu0 %v2401
  %v2472 = vpop.f32.mrb[0].mxu0
  %v2473 = vadd.f32 0.0, %v2472
  %v2474 = vpop.f32.mrb[0].mxu0
  %2475 = vmatprep.mubr.f32.mxu0 0.0
  %2476 = vmatmul.mubr.f32.gmra.mrb[0].mxu0 %v2404
  %v2477 = vpop.f32.mrb[0].mxu0
  %v2478 = vadd.f32 0.0, %v2477
  %v2479 = vpop.f32.mrb[0].mxu0
  %2480 = vdwg.mxu0
  %v2482 = vsel %vm378, %v2473, 0
  %v2485 = vsel %vm378, %v2478, 0
  %2487 = vmatprep.subr.mxu0 0.0
  %2488 = vmatpush1.msra.mxu0 %v2074
  %2489 = vmatprep.subr.mxu0 0.0
  %2490 = vmatpush1.msra.mxu0 0.0
  %2491 = vmatprep.subr.mxu0 0.0
  %2492 = vmatpush1.msra.mxu0 0.0
  %2493 = vmatprep.subr.mxu0 0.0
  %2494 = vmatpush1.msra.mxu0 0.0
  %2495 = vmatprep.subr.mxu0 0.0
  %2496 = vmatpush1.msra.mxu0 0.0
  %2497 = vmatprep.subr.mxu0 0.0
  %2498 = vmatpush1.msra.mxu0 0.0
  %2499 = vmatprep.subr.mxu0 0.0
  %2500 = vmatpush1.msra.mxu0 0.0
  %2501 = vmatprep.subr.mxu0 0.0
  %2502 = vmatpush1.msra.mxu0 0.0
  %2503 = vmatprep.subr.mxu0 0.0
  %2504 = vmatpush1.msra.mxu0 0.0
  %2505 = vmatprep.subr.mxu0 0.0
  %2506 = vmatpush1.msra.mxu0 0.0
  %2507 = vmatprep.subr.mxu0 0.0
  %2508 = vmatpush1.msra.mxu0 0.0
  %2509 = vmatprep.subr.mxu0 0.0
  %2510 = vmatpush1.msra.mxu0 0.0
  %2511 = vmatprep.subr.mxu0 0.0
  %2512 = vmatpush1.msra.mxu0 0.0
  %2513 = vmatprep.subr.mxu0 0.0
  %2514 = vmatpush1.msra.mxu0 0.0
  %2515 = vmatprep.subr.mxu0 0.0
  %2516 = vmatpush1.msra.mxu0 0.0
  %2517 = vmatprep.subr.mxu0 0.0
  %2518 = vmatpush1.msra.mxu0 0.0
  %2519 = vmatprep.subr.mxu0 0.0
  %2520 = vmatpush1.msra.mxu0 0.0
  %2521 = vmatprep.subr.mxu0 0.0
  %2522 = vmatpush1.msra.mxu0 0.0
  %2523 = vmatprep.subr.mxu0 0.0
  %2524 = vmatpush1.msra.mxu0 0.0
  %2525 = vmatprep.subr.mxu0 0.0
  %2526 = vmatpush1.msra.mxu0 0.0
  %2527 = vmatprep.subr.mxu0 0.0
  %2528 = vmatpush1.msra.mxu0 0.0
  %2529 = vmatprep.subr.mxu0 0.0
  %2530 = vmatpush1.msra.mxu0 0.0
  %2531 = vmatprep.subr.mxu0 0.0
  %2532 = vmatpush1.msra.mxu0 0.0
  %2533 = vmatprep.subr.mxu0 0.0
  %2534 = vmatpush1.msra.mxu0 0.0
  %2535 = vmatprep.subr.mxu0 0.0
  %2536 = vmatpush1.msra.mxu0 0.0
  %2537 = vmatprep.subr.mxu0 0.0
  %2538 = vmatpush1.msra.mxu0 0.0
  %2539 = vmatprep.subr.mxu0 0.0
  %2540 = vmatpush1.msra.mxu0 0.0
  %2541 = vmatprep.subr.mxu0 0.0
  %2542 = vmatpush1.msra.mxu0 0.0
  %2543 = vmatprep.subr.mxu0 0.0
  %2544 = vmatpush1.msra.mxu0 0.0
  %2545 = vmatprep.subr.mxu0 0.0
  %2546 = vmatpush1.msra.mxu0 0.0
  %2547 = vmatprep.subr.mxu0 0.0
  %2548 = vmatpush1.msra.mxu0 0.0
  %2549 = vmatprep.subr.mxu0 0.0
  %2550 = vmatpush1.msra.mxu0 0.0
  %2551 = vmatprep.mubr.f32.mxu0 0.0
  %2552 = vmatmul.mubr.f32.gmra.mrb[0].mxu0 %v2482
  %v2553 = vpop.f32.mrb[0].mxu0
  %v2554 = vadd.f32 0.0, %v2553
  %v2555 = vpop.f32.mrb[0].mxu0
  %2556 = vmatprep.mubr.f32.mxu0 0.0
  %2557 = vmatmul.mubr.f32.gmra.mrb[0].mxu0 %v2485
  %v2558 = vpop.f32.mrb[0].mxu0
  %v2559 = vadd.f32 0.0, %v2558
  %v2560 = vpop.f32.mrb[0].mxu0
  %2561 = vdwg.mxu0
  %v2563 = vsel %vm378, %v2269, 0
  %v2566 = vsel %vm378, %v2274, 0
  %2568 = vmatprep.subr.mxu0 0.0
  %2569 = vmatpush1.msra.mxu0 %v2073
  %2570 = vmatprep.subr.mxu0 0.0
  %2571 = vmatpush1.msra.mxu0 0.0
  %2572 = vmatprep.subr.mxu0 0.0
  %2573 = vmatpush1.msra.mxu0 0.0
  %2574 = vmatprep.subr.mxu0 0.0
  %2575 = vmatpush1.msra.mxu0 0.0
  %2576 = vmatprep.subr.mxu0 0.0
  %2577 = vmatpush1.msra.mxu0 0.0
  %2578 = vmatprep.subr.mxu0 0.0
  %2579 = vmatpush1.msra.mxu0 0.0
  %2580 = vmatprep.subr.mxu0 0.0
  %2581 = vmatpush1.msra.mxu0 0.0
  %2582 = vmatprep.subr.mxu0 0.0
  %2583 = vmatpush1.msra.mxu0 0.0
  %2584 = vmatprep.subr.mxu0 0.0
  %2585 = vmatpush1.msra.mxu0 0.0
  %2586 = vmatprep.subr.mxu0 0.0
  %2587 = vmatpush1.msra.mxu0 0.0
  %2588 = vmatprep.subr.mxu0 0.0
  %2589 = vmatpush1.msra.mxu0 0.0
  %2590 = vmatprep.subr.mxu0 0.0
  %2591 = vmatpush1.msra.mxu0 0.0
  %2592 = vmatprep.subr.mxu0 0.0
  %2593 = vmatpush1.msra.mxu0 0.0
  %2594 = vmatprep.subr.mxu0 0.0
  %2595 = vmatpush1.msra.mxu0 0.0
  %2596 = vmatprep.subr.mxu0 0.0
  %2597 = vmatpush1.msra.mxu0 0.0
  %2598 = vmatprep.subr.mxu0 0.0
  %2599 = vmatpush1.msra.mxu0 0.0
  %2600 = vmatprep.subr.mxu0 0.0
  %2601 = vmatpush1.msra.mxu0 0.0
  %2602 = vmatprep.subr.mxu0 0.0
  %2603 = vmatpush1.msra.mxu0 0.0
  %2604 = vmatprep.subr.mxu0 0.0
  %2605 = vmatpush1.msra.mxu0 0.0
  %2606 = vmatprep.subr.mxu0 0.0
  %2607 = vmatpush1.msra.mxu0 0.0
  %2608 = vmatprep.subr.mxu0 0.0
  %2609 = vmatpush1.msra.mxu0 0.0
  %2610 = vmatprep.subr.mxu0 0.0
  %2611 = vmatpush1.msra.mxu0 0.0
  %2612 = vmatprep.subr.mxu0 0.0
  %2613 = vmatpush1.msra.mxu0 0.0
  %2614 = vmatprep.subr.mxu0 0.0
  %2615 = vmatpush1.msra.mxu0 0.0
  %2616 = vmatprep.subr.mxu0 0.0
  %2617 = vmatpush1.msra.mxu0 0.0
  %2618 = vmatprep.subr.mxu0 0.0
  %2619 = vmatpush1.msra.mxu0 0.0
  %2620 = vmatprep.subr.mxu0 0.0
  %2621 = vmatpush1.msra.mxu0 0.0
  %2622 = vmatprep.subr.mxu0 0.0
  %2623 = vmatpush1.msra.mxu0 0.0
  %2624 = vmatprep.subr.mxu0 0.0
  %2625 = vmatpush1.msra.mxu0 0.0
  %2626 = vmatprep.subr.mxu0 0.0
  %2627 = vmatpush1.msra.mxu0 0.0
  %2628 = vmatprep.subr.mxu0 0.0
  %2629 = vmatpush1.msra.mxu0 0.0
  %2630 = vmatprep.subr.mxu0 0.0
  %2631 = vmatpush1.msra.mxu0 0.0
  %2632 = vmatprep.mubr.f32.mxu0 0.0
  %2633 = vmatmul.mubr.f32.gmra.mrb[0].mxu0 %v2563
  %v2634 = vpop.f32.mrb[0].mxu0
  %v2635 = vadd.f32 %v2554, %v2634
  %v2636 = vpop.f32.mrb[0].mxu0
  %2637 = vmatprep.mubr.f32.mxu0 0.0
  %2638 = vmatmul.mubr.f32.gmra.mrb[0].mxu0 %v2566
  %v2639 = vpop.f32.mrb[0].mxu0
  %v2640 = vadd.f32 %v2559, %v2639
  %v2641 = vpop.f32.mrb[0].mxu0
  %2642 = vdwg.mxu0
  %2643 = vrot.lane.b32.xlu0 %v2046, 112
  %v2644 = vpop.permute.xlu0 %2643
  %2645 = vrot.lane.b32.xlu0 %v2047, 112
  %v2646 = vpop.permute.xlu0 %2645
  %2647 = vrot.lane.b32.xlu0 %v2070, 112
  %v2648 = vpop.permute.xlu0 %2647
  %2649 = vrot.lane.b32.xlu0 %v2071, 112
  %v2650 = vpop.permute.xlu0 %2649
  %v2651 = vsel %vm378, %v2644, 0
  %v2653 = vsel %vm378, %v2646, 0
  %v2655 = vsel %vm378, %v2648, 0
  %v2657 = vsel %vm378, %v2650, 0
  %2659 = vmatprep.subr.mxu0 0.0
  %2660 = vmatpush1.xpose.msra.mxu0 %v2655
  %2661 = vmatprep.subr.mxu0 0.0
  %2662 = vmatpush1.xpose.msra.mxu0 %v2657
  %2663 = vmatprep.subr.mxu0 0.0
  %2664 = vmatpush1.xpose.msra.mxu0 0.0
  %2665 = vmatprep.subr.mxu0 0.0
  %2666 = vmatpush1.xpose.msra.mxu0 0.0
  %2667 = vmatprep.subr.mxu0 0.0
  %2668 = vmatpush1.xpose.msra.mxu0 0.0
  %2669 = vmatprep.subr.mxu0 0.0
  %2670 = vmatpush1.xpose.msra.mxu0 0.0
  %2671 = vmatprep.subr.mxu0 0.0
  %2672 = vmatpush1.xpose.msra.mxu0 0.0
  %2673 = vmatprep.subr.mxu0 0.0
  %2674 = vmatpush1.xpose.msra.mxu0 0.0
  %2675 = vmatprep.subr.mxu0 0.0
  %2676 = vmatpush1.xpose.msra.mxu0 0.0
  %2677 = vmatprep.subr.mxu0 0.0
  %2678 = vmatpush1.xpose.msra.mxu0 0.0
  %2679 = vmatprep.subr.mxu0 0.0
  %2680 = vmatpush1.xpose.msra.mxu0 0.0
  %2681 = vmatprep.subr.mxu0 0.0
  %2682 = vmatpush1.xpose.msra.mxu0 0.0
  %2683 = vmatprep.subr.mxu0 0.0
  %2684 = vmatpush1.xpose.msra.mxu0 0.0
  %2685 = vmatprep.subr.mxu0 0.0
  %2686 = vmatpush1.xpose.msra.mxu0 0.0
  %2687 = vmatprep.subr.mxu0 0.0
  %2688 = vmatpush1.xpose.msra.mxu0 0.0
  %2689 = vmatprep.subr.mxu0 0.0
  %2690 = vmatpush1.xpose.msra.mxu0 0.0
  %2691 = vmatprep.subr.mxu0 0.0
  %2692 = vmatpush1.xpose.msra.mxu0 0.0
  %2693 = vmatprep.subr.mxu0 0.0
  %2694 = vmatpush1.xpose.msra.mxu0 0.0
  %2695 = vmatprep.subr.mxu0 0.0
  %2696 = vmatpush1.xpose.msra.mxu0 0.0
  %2697 = vmatprep.subr.mxu0 0.0
  %2698 = vmatpush1.xpose.msra.mxu0 0.0
  %2699 = vmatprep.subr.mxu0 0.0
  %2700 = vmatpush1.xpose.msra.mxu0 0.0
  %2701 = vmatprep.subr.mxu0 0.0
  %2702 = vmatpush1.xpose.msra.mxu0 0.0
  %2703 = vmatprep.subr.mxu0 0.0
  %2704 = vmatpush1.xpose.msra.mxu0 0.0
  %2705 = vmatprep.subr.mxu0 0.0
  %2706 = vmatpush1.xpose.msra.mxu0 0.0
  %2707 = vmatprep.subr.mxu0 0.0
  %2708 = vmatpush1.xpose.msra.mxu0 0.0
  %2709 = vmatprep.subr.mxu0 0.0
  %2710 = vmatpush1.xpose.msra.mxu0 0.0
  %2711 = vmatprep.subr.mxu0 0.0
  %2712 = vmatpush1.xpose.msra.mxu0 0.0
  %2713 = vmatprep.subr.mxu0 0.0
  %2714 = vmatpush1.xpose.msra.mxu0 0.0
  %2715 = vmatprep.subr.mxu0 0.0
  %2716 = vmatpush1.xpose.msra.mxu0 0.0
  %2717 = vmatprep.subr.mxu0 0.0
  %2718 = vmatpush1.xpose.msra.mxu0 0.0
  %2719 = vmatprep.subr.mxu0 0.0
  %2720 = vmatpush1.xpose.msra.mxu0 0.0
  %2721 = vmatprep.subr.mxu0 0.0
  %2722 = vmatpush1.xpose.msra.mxu0 0.0
  %2723 = vmatprep.mubr.f32.mxu0 0.0
  %2724 = vmatmul.mubr.f32.gmra.mrb[0].mxu0 %v2651
  %v2725 = vpop.f32.mrb[0].mxu0
  %v2726 = vadd.f32 0.0, %v2725
  %v2727 = vpop.f32.mrb[0].mxu0
  %2728 = vmatprep.mubr.f32.mxu0 0.0
  %2729 = vmatmul.mubr.f32.gmra.mrb[0].mxu0 %v2653
  %v2730 = vpop.f32.mrb[0].mxu0
  %v2731 = vadd.f32 0.0, %v2730
  %v2732 = vpop.f32.mrb[0].mxu0
  %2733 = vdwg.mxu0
  %v2734 = vmul.f32 %v2726, 0.35355338
  %v2735 = vmul.f32 %v2731, 0.35355338
  %v2736 = vadd.f32 %v2734, %v54
  %v2737 = vadd.f32 %v2735, %v55
  %v2738 = vsel %vm470, %v2736, -inf
  %2739 = vmax.xlane.f32.xlu0 %v2738
  %v2740 = vpop.xlane.xlu0 %2739
  %v2741 = vsel %vm470, %v2737, -inf
  %2742 = vmax.xlane.f32.xlu0 %v2741
  %v2743 = vpop.xlane.xlu0 %2742
  %v2744 = vsub.f32 %v2736, %v2740
  %v2745 = vsub.f32 %v2737, %v2743
  %v2746 = vmul.f32 %v2744, 1.442695
  %v2747 = vpow.pop %v2746
  %v2748 = vmul.f32 %v2745, 1.442695
  %v2749 = vpow.pop %v2748
  %v2750 = vsel %vm470, %v2747, 0.0
  %2751 = vadd.xlane.f32.xlu0 %v2750
  %v2752 = vpop.xlane.xlu0 %2751
  %v2753 = vsel %vm470, %v2749, 0.0
  %2754 = vadd.xlane.f32.xlu0 %v2753
  %v2755 = vpop.xlane.xlu0 %2754
  %v2756 = vrcp.pop %v2752
  %v2757 = vrcp.pop %v2755
  %v2758 = vmul.f32 %v2747, %v2756
  %v2759 = vmul.f32 %v2749, %v2757
  %2760 = vrot.lane.b32.xlu0 %v1870, 48
  %v2761 = vpop.permute.xlu0 %2760
  %2762 = vrot.lane.b32.xlu0 %v1875, 48
  %v2763 = vpop.permute.xlu0 %2762
  %v2767 = vsel %vm470, %v2758, 0
  %v2770 = vsel %vm470, %v2759, 0
  %2772 = vmatprep.subr.mxu0 0.0
  %2773 = vmatpush1.msra.mxu0 %v2761
  %2774 = vmatprep.subr.mxu0 0.0
  %2775 = vmatpush1.msra.mxu0 %v2763
  %2776 = vmatprep.subr.mxu0 0.0
  %2777 = vmatpush1.msra.mxu0 0.0
  %2778 = vmatprep.subr.mxu0 0.0
  %2779 = vmatpush1.msra.mxu0 0.0
  %2780 = vmatprep.subr.mxu0 0.0
  %2781 = vmatpush1.msra.mxu0 0.0
  %2782 = vmatprep.subr.mxu0 0.0
  %2783 = vmatpush1.msra.mxu0 0.0
  %2784 = vmatprep.subr.mxu0 0.0
  %2785 = vmatpush1.msra.mxu0 0.0
  %2786 = vmatprep.subr.mxu0 0.0
  %2787 = vmatpush1.msra.mxu0 0.0
  %2788 = vmatprep.subr.mxu0 0.0
  %2789 = vmatpush1.msra.mxu0 0.0
  %2790 = vmatprep.subr.mxu0 0.0
  %2791 = vmatpush1.msra.mxu0 0.0
  %2792 = vmatprep.subr.mxu0 0.0
  %2793 = vmatpush1.msra.mxu0 0.0
  %2794 = vmatprep.subr.mxu0 0.0
  %2795 = vmatpush1.msra.mxu0 0.0
  %2796 = vmatprep.subr.mxu0 0.0
  %2797 = vmatpush1.msra.mxu0 0.0
  %2798 = vmatprep.subr.mxu0 0.0
  %2799 = vmatpush1.msra.mxu0 0.0
  %2800 = vmatprep.subr.mxu0 0.0
  %2801 = vmatpush1.msra.mxu0 0.0
  %2802 = vmatprep.subr.mxu0 0.0
  %2803 = vmatpush1.msra.mxu0 0.0
  %2804 = vmatprep.subr.mxu0 0.0
  %2805 = vmatpush1.msra.mxu0 0.0
  %2806 = vmatprep.subr.mxu0 0.0
  %2807 = vmatpush1.msra.mxu0 0.0
  %2808 = vmatprep.subr.mxu0 0.0
  %2809 = vmatpush1.msra.mxu0 0.0
  %2810 = vmatprep.subr.mxu0 0.0
  %2811 = vmatpush1.msra.mxu0 0.0
  %2812 = vmatprep.subr.mxu0 0.0
  %2813 = vmatpush1.msra.mxu0 0.0
  %2814 = vmatprep.subr.mxu0 0.0
  %2815 = vmatpush1.msra.mxu0 0.0
  %2816 = vmatprep.subr.mxu0 0.0
  %2817 = vmatpush1.msra.mxu0 0.0
  %2818 = vmatprep.subr.mxu0 0.0
  %2819 = vmatpush1.msra.mxu0 0.0
  %2820 = vmatprep.subr.mxu0 0.0
  %2821 = vmatpush1.msra.mxu0 0.0
  %2822 = vmatprep.subr.mxu0 0.0
  %2823 = vmatpush1.msra.mxu0 0.0
  %2824 = vmatprep.subr.mxu0 0.0
  %2825 = vmatpush1.msra.mxu0 0.0
  %2826 = vmatprep.subr.mxu0 0.0
  %2827 = vmatpush1.msra.mxu0 0.0
  %2828 = vmatprep.subr.mxu0 0.0
  %2829 = vmatpush1.msra.mxu0 0.0
  %2830 = vmatprep.subr.mxu0 0.0
  %2831 = vmatpush1.msra.mxu0 0.0
  %2832 = vmatprep.subr.mxu0 0.0
  %2833 = vmatpush1.msra.mxu0 0.0
  %2834 = vmatprep.subr.mxu0 0.0
  %2835 = vmatpush1.msra.mxu0 0.0
  %2836 = vmatprep.mubr.f32.mxu0 0.0
  %2837 = vmatmul.mubr.f32.gmra.mrb[0].mxu0 %v2767
  %v2838 = vpop.f32.mrb[0].mxu0
  %v2839 = vadd.f32 0.0, %v2838
  %v2840 = vpop.f32.mrb[0].mxu0
  %2841 = vmatprep.mubr.f32.mxu0 0.0
  %2842 = vmatmul.mubr.f32.gmra.mrb[0].mxu0 %v2770
  %v2843 = vpop.f32.mrb[0].mxu0
  %v2844 = vadd.f32 0.0, %v2843
  %v2845 = vpop.f32.mrb[0].mxu0
  %2846 = vdwg.mxu0
  %v2848 = vsel %vm378, %v2839, 0
  %v2851 = vsel %vm378, %v2844, 0
  %2853 = vmatprep.subr.mxu0 0.0
  %2854 = vmatpush1.msra.mxu0 %v2075
  %2855 = vmatprep.subr.mxu0 0.0
  %2856 = vmatpush1.msra.mxu0 0.0
  %2857 = vmatprep.subr.mxu0 0.0
  %2858 = vmatpush1.msra.mxu0 0.0
  %2859 = vmatprep.subr.mxu0 0.0
  %2860 = vmatpush1.msra.mxu0 0.0
  %2861 = vmatprep.subr.mxu0 0.0
  %2862 = vmatpush1.msra.mxu0 0.0
  %2863 = vmatprep.subr.mxu0 0.0
  %2864 = vmatpush1.msra.mxu0 0.0
  %2865 = vmatprep.subr.mxu0 0.0
  %2866 = vmatpush1.msra.mxu0 0.0
  %2867 = vmatprep.subr.mxu0 0.0
  %2868 = vmatpush1.msra.mxu0 0.0
  %2869 = vmatprep.subr.mxu0 0.0
  %2870 = vmatpush1.msra.mxu0 0.0
  %2871 = vmatprep.subr.mxu0 0.0
  %2872 = vmatpush1.msra.mxu0 0.0
  %2873 = vmatprep.subr.mxu0 0.0
  %2874 = vmatpush1.msra.mxu0 0.0
  %2875 = vmatprep.subr.mxu0 0.0
  %2876 = vmatpush1.msra.mxu0 0.0
  %2877 = vmatprep.subr.mxu0 0.0
  %2878 = vmatpush1.msra.mxu0 0.0
  %2879 = vmatprep.subr.mxu0 0.0
  %2880 = vmatpush1.msra.mxu0 0.0
  %2881 = vmatprep.subr.mxu0 0.0
  %2882 = vmatpush1.msra.mxu0 0.0
  %2883 = vmatprep.subr.mxu0 0.0
  %2884 = vmatpush1.msra.mxu0 0.0
  %2885 = vmatprep.subr.mxu0 0.0
  %2886 = vmatpush1.msra.mxu0 0.0
  %2887 = vmatprep.subr.mxu0 0.0
  %2888 = vmatpush1.msra.mxu0 0.0
  %2889 = vmatprep.subr.mxu0 0.0
  %2890 = vmatpush1.msra.mxu0 0.0
  %2891 = vmatprep.subr.mxu0 0.0
  %2892 = vmatpush1.msra.mxu0 0.0
  %2893 = vmatprep.subr.mxu0 0.0
  %2894 = vmatpush1.msra.mxu0 0.0
  %2895 = vmatprep.subr.mxu0 0.0
  %2896 = vmatpush1.msra.mxu0 0.0
  %2897 = vmatprep.subr.mxu0 0.0
  %2898 = vmatpush1.msra.mxu0 0.0
  %2899 = vmatprep.subr.mxu0 0.0
  %2900 = vmatpush1.msra.mxu0 0.0
  %2901 = vmatprep.subr.mxu0 0.0
  %2902 = vmatpush1.msra.mxu0 0.0
  %2903 = vmatprep.subr.mxu0 0.0
  %2904 = vmatpush1.msra.mxu0 0.0
  %2905 = vmatprep.subr.mxu0 0.0
  %2906 = vmatpush1.msra.mxu0 0.0
  %2907 = vmatprep.subr.mxu0 0.0
  %2908 = vmatpush1.msra.mxu0 0.0
  %2909 = vmatprep.subr.mxu0 0.0
  %2910 = vmatpush1.msra.mxu0 0.0
  %2911 = vmatprep.subr.mxu0 0.0
  %2912 = vmatpush1.msra.mxu0 0.0
  %2913 = vmatprep.subr.mxu0 0.0
  %2914 = vmatpush1.msra.mxu0 0.0
  %2915 = vmatprep.subr.mxu0 0.0
  %2916 = vmatpush1.msra.mxu0 0.0
  %2917 = vmatprep.mubr.f32.mxu0 0.0
  %2918 = vmatmul.mubr.f32.gmra.mrb[0].mxu0 %v2848
  %v2919 = vpop.f32.mrb[0].mxu0
  %v2920 = vadd.f32 0.0, %v2919
  %v2921 = vpop.f32.mrb[0].mxu0
  %2922 = vmatprep.mubr.f32.mxu0 0.0
  %2923 = vmatmul.mubr.f32.gmra.mrb[0].mxu0 %v2851
  %v2924 = vpop.f32.mrb[0].mxu0
  %v2925 = vadd.f32 0.0, %v2924
  %v2926 = vpop.f32.mrb[0].mxu0
  %2927 = vdwg.mxu0
  %v2928 = vadd.f32 %v2635, %v2920
  %v2929 = vadd.f32 %v2640, %v2925
  %2930 = vrot.lane.b32.xlu0 %v2046, 104
  %v2931 = vpop.permute.xlu0 %2930
  %2932 = vrot.lane.b32.xlu0 %v2047, 104
  %v2933 = vpop.permute.xlu0 %2932
  %2934 = vrot.lane.b32.xlu0 %v2070, 104
  %v2935 = vpop.permute.xlu0 %2934
  %2936 = vrot.lane.b32.xlu0 %v2071, 104
  %v2937 = vpop.permute.xlu0 %2936
  %v2938 = vsel %vm378, %v2931, 0
  %v2940 = vsel %vm378, %v2933, 0
  %v2942 = vsel %vm378, %v2935, 0
  %v2944 = vsel %vm378, %v2937, 0
  %2946 = vmatprep.subr.mxu0 0.0
  %2947 = vmatpush1.xpose.msra.mxu0 %v2942
  %2948 = vmatprep.subr.mxu0 0.0
  %2949 = vmatpush1.xpose.msra.mxu0 %v2944
  %2950 = vmatprep.subr.mxu0 0.0
  %2951 = vmatpush1.xpose.msra.mxu0 0.0
  %2952 = vmatprep.subr.mxu0 0.0
  %2953 = vmatpush1.xpose.msra.mxu0 0.0
  %2954 = vmatprep.subr.mxu0 0.0
  %2955 = vmatpush1.xpose.msra.mxu0 0.0
  %2956 = vmatprep.subr.mxu0 0.0
  %2957 = vmatpush1.xpose.msra.mxu0 0.0
  %2958 = vmatprep.subr.mxu0 0.0
  %2959 = vmatpush1.xpose.msra.mxu0 0.0
  %2960 = vmatprep.subr.mxu0 0.0
  %2961 = vmatpush1.xpose.msra.mxu0 0.0
  %2962 = vmatprep.subr.mxu0 0.0
  %2963 = vmatpush1.xpose.msra.mxu0 0.0
  %2964 = vmatprep.subr.mxu0 0.0
  %2965 = vmatpush1.xpose.msra.mxu0 0.0
  %2966 = vmatprep.subr.mxu0 0.0
  %2967 = vmatpush1.xpose.msra.mxu0 0.0
  %2968 = vmatprep.subr.mxu0 0.0
  %2969 = vmatpush1.xpose.msra.mxu0 0.0
  %2970 = vmatprep.subr.mxu0 0.0
  %2971 = vmatpush1.xpose.msra.mxu0 0.0
  %2972 = vmatprep.subr.mxu0 0.0
  %2973 = vmatpush1.xpose.msra.mxu0 0.0
  %2974 = vmatprep.subr.mxu0 0.0
  %2975 = vmatpush1.xpose.msra.mxu0 0.0
  %2976 = vmatprep.subr.mxu0 0.0
  %2977 = vmatpush1.xpose.msra.mxu0 0.0
  %2978 = vmatprep.subr.mxu0 0.0
  %2979 = vmatpush1.xpose.msra.mxu0 0.0
  %2980 = vmatprep.subr.mxu0 0.0
  %2981 = vmatpush1.xpose.msra.mxu0 0.0
  %2982 = vmatprep.subr.mxu0 0.0
  %2983 = vmatpush1.xpose.msra.mxu0 0.0
  %2984 = vmatprep.subr.mxu0 0.0
  %2985 = vmatpush1.xpose.msra.mxu0 0.0
  %2986 = vmatprep.subr.mxu0 0.0
  %2987 = vmatpush1.xpose.msra.mxu0 0.0
  %2988 = vmatprep.subr.mxu0 0.0
  %2989 = vmatpush1.xpose.msra.mxu0 0.0
  %2990 = vmatprep.subr.mxu0 0.0
  %2991 = vmatpush1.xpose.msra.mxu0 0.0
  %2992 = vmatprep.subr.mxu0 0.0
  %2993 = vmatpush1.xpose.msra.mxu0 0.0
  %2994 = vmatprep.subr.mxu0 0.0
  %2995 = vmatpush1.xpose.msra.mxu0 0.0
  %2996 = vmatprep.subr.mxu0 0.0
  %2997 = vmatpush1.xpose.msra.mxu0 0.0
  %2998 = vmatprep.subr.mxu0 0.0
  %2999 = vmatpush1.xpose.msra.mxu0 0.0
  %3000 = vmatprep.subr.mxu0 0.0
  %3001 = vmatpush1.xpose.msra.mxu0 0.0
  %3002 = vmatprep.subr.mxu0 0.0
  %3003 = vmatpush1.xpose.msra.mxu0 0.0
  %3004 = vmatprep.subr.mxu0 0.0
  %3005 = vmatpush1.xpose.msra.mxu0 0.0
  %3006 = vmatprep.subr.mxu0 0.0
  %3007 = vmatpush1.xpose.msra.mxu0 0.0
  %3008 = vmatprep.subr.mxu0 0.0
  %3009 = vmatpush1.xpose.msra.mxu0 0.0
  %3010 = vmatprep.mubr.f32.mxu0 0.0
  %3011 = vmatmul.mubr.f32.gmra.mrb[0].mxu0 %v2938
  %v3012 = vpop.f32.mrb[0].mxu0
  %v3013 = vadd.f32 0.0, %v3012
  %v3014 = vpop.f32.mrb[0].mxu0
  %3015 = vmatprep.mubr.f32.mxu0 0.0
  %3016 = vmatmul.mubr.f32.gmra.mrb[0].mxu0 %v2940
  %v3017 = vpop.f32.mrb[0].mxu0
  %v3018 = vadd.f32 0.0, %v3017
  %v3019 = vpop.f32.mrb[0].mxu0
  %3020 = vdwg.mxu0
  %v3021 = vmul.f32 %v3013, 0.35355338
  %v3022 = vmul.f32 %v3018, 0.35355338
  %v3023 = vadd.f32 %v3021, %v54
  %v3024 = vadd.f32 %v3022, %v55
  %v3025 = vsel %vm470, %v3023, -inf
  %3026 = vmax.xlane.f32.xlu0 %v3025
  %v3027 = vpop.xlane.xlu0 %3026
  %v3028 = vsel %vm470, %v3024, -inf
  %3029 = vmax.xlane.f32.xlu0 %v3028
  %v3030 = vpop.xlane.xlu0 %3029
  %v3031 = vsub.f32 %v3023, %v3027
  %v3032 = vsub.f32 %v3024, %v3030
  %v3033 = vmul.f32 %v3031, 1.442695
  %v3034 = vpow.pop %v3033
  %v3035 = vmul.f32 %v3032, 1.442695
  %v3036 = vpow.pop %v3035
  %v3037 = vsel %vm470, %v3034, 0.0
  %3038 = vadd.xlane.f32.xlu0 %v3037
  %v3039 = vpop.xlane.xlu0 %3038
  %v3040 = vsel %vm470, %v3036, 0.0
  %3041 = vadd.xlane.f32.xlu0 %v3040
  %v3042 = vpop.xlane.xlu0 %3041
  %v3043 = vrcp.pop %v3039
  %v3044 = vrcp.pop %v3042
  %v3045 = vmul.f32 %v3034, %v3043
  %v3046 = vmul.f32 %v3036, %v3044
  %3047 = vrot.lane.b32.xlu0 %v1870, 40
  %v3048 = vpop.permute.xlu0 %3047
  %3049 = vrot.lane.b32.xlu0 %v1875, 40
  %v3050 = vpop.permute.xlu0 %3049
  %v3054 = vsel %vm470, %v3045, 0
  %v3057 = vsel %vm470, %v3046, 0
  %3059 = vmatprep.subr.mxu0 0.0
  %3060 = vmatpush1.msra.mxu0 %v3048
  %3061 = vmatprep.subr.mxu0 0.0
  %3062 = vmatpush1.msra.mxu0 %v3050
  %3063 = vmatprep.subr.mxu0 0.0
  %3064 = vmatpush1.msra.mxu0 0.0
  %3065 = vmatprep.subr.mxu0 0.0
  %3066 = vmatpush1.msra.mxu0 0.0
  %3067 = vmatprep.subr.mxu0 0.0
  %3068 = vmatpush1.msra.mxu0 0.0
  %3069 = vmatprep.subr.mxu0 0.0
  %3070 = vmatpush1.msra.mxu0 0.0
  %3071 = vmatprep.subr.mxu0 0.0
  %3072 = vmatpush1.msra.mxu0 0.0
  %3073 = vmatprep.subr.mxu0 0.0
  %3074 = vmatpush1.msra.mxu0 0.0
  %3075 = vmatprep.subr.mxu0 0.0
  %3076 = vmatpush1.msra.mxu0 0.0
  %3077 = vmatprep.subr.mxu0 0.0
  %3078 = vmatpush1.msra.mxu0 0.0
  %3079 = vmatprep.subr.mxu0 0.0
  %3080 = vmatpush1.msra.mxu0 0.0
  %3081 = vmatprep.subr.mxu0 0.0
  %3082 = vmatpush1.msra.mxu0 0.0
  %3083 = vmatprep.subr.mxu0 0.0
  %3084 = vmatpush1.msra.mxu0 0.0
  %3085 = vmatprep.subr.mxu0 0.0
  %3086 = vmatpush1.msra.mxu0 0.0
  %3087 = vmatprep.subr.mxu0 0.0
  %3088 = vmatpush1.msra.mxu0 0.0
  %3089 = vmatprep.subr.mxu0 0.0
  %3090 = vmatpush1.msra.mxu0 0.0
  %3091 = vmatprep.subr.mxu0 0.0
  %3092 = vmatpush1.msra.mxu0 0.0
  %3093 = vmatprep.subr.mxu0 0.0
  %3094 = vmatpush1.msra.mxu0 0.0
  %3095 = vmatprep.subr.mxu0 0.0
  %3096 = vmatpush1.msra.mxu0 0.0
  %3097 = vmatprep.subr.mxu0 0.0
  %3098 = vmatpush1.msra.mxu0 0.0
  %3099 = vmatprep.subr.mxu0 0.0
  %3100 = vmatpush1.msra.mxu0 0.0
  %3101 = vmatprep.subr.mxu0 0.0
  %3102 = vmatpush1.msra.mxu0 0.0
  %3103 = vmatprep.subr.mxu0 0.0
  %3104 = vmatpush1.msra.mxu0 0.0
  %3105 = vmatprep.subr.mxu0 0.0
  %3106 = vmatpush1.msra.mxu0 0.0
  %3107 = vmatprep.subr.mxu0 0.0
  %3108 = vmatpush1.msra.mxu0 0.0
  %3109 = vmatprep.subr.mxu0 0.0
  %3110 = vmatpush1.msra.mxu0 0.0
  %3111 = vmatprep.subr.mxu0 0.0
  %3112 = vmatpush1.msra.mxu0 0.0
  %3113 = vmatprep.subr.mxu0 0.0
  %3114 = vmatpush1.msra.mxu0 0.0
  %3115 = vmatprep.subr.mxu0 0.0
  %3116 = vmatpush1.msra.mxu0 0.0
  %3117 = vmatprep.subr.mxu0 0.0
  %3118 = vmatpush1.msra.mxu0 0.0
  %3119 = vmatprep.subr.mxu0 0.0
  %3120 = vmatpush1.msra.mxu0 0.0
  %3121 = vmatprep.subr.mxu0 0.0
  %3122 = vmatpush1.msra.mxu0 0.0
  %3123 = vmatprep.mubr.f32.mxu0 0.0
  %3124 = vmatmul.mubr.f32.gmra.mrb[0].mxu0 %v3054
  %v3125 = vpop.f32.mrb[0].mxu0
  %v3126 = vadd.f32 0.0, %v3125
  %v3127 = vpop.f32.mrb[0].mxu0
  %3128 = vmatprep.mubr.f32.mxu0 0.0
  %3129 = vmatmul.mubr.f32.gmra.mrb[0].mxu0 %v3057
  %v3130 = vpop.f32.mrb[0].mxu0
  %v3131 = vadd.f32 0.0, %v3130
  %v3132 = vpop.f32.mrb[0].mxu0
  %3133 = vdwg.mxu0
  %v3135 = vsel %vm378, %v3126, 0
  %v3138 = vsel %vm378, %v3131, 0
  %3140 = vmatprep.subr.mxu0 0.0
  %3141 = vmatpush1.msra.mxu0 %v2076
  %3142 = vmatprep.subr.mxu0 0.0
  %3143 = vmatpush1.msra.mxu0 0.0
  %3144 = vmatprep.subr.mxu0 0.0
  %3145 = vmatpush1.msra.mxu0 0.0
  %3146 = vmatprep.subr.mxu0 0.0
  %3147 = vmatpush1.msra.mxu0 0.0
  %3148 = vmatprep.subr.mxu0 0.0
  %3149 = vmatpush1.msra.mxu0 0.0
  %3150 = vmatprep.subr.mxu0 0.0
  %3151 = vmatpush1.msra.mxu0 0.0
  %3152 = vmatprep.subr.mxu0 0.0
  %3153 = vmatpush1.msra.mxu0 0.0
  %3154 = vmatprep.subr.mxu0 0.0
  %3155 = vmatpush1.msra.mxu0 0.0
  %3156 = vmatprep.subr.mxu0 0.0
  %3157 = vmatpush1.msra.mxu0 0.0
  %3158 = vmatprep.subr.mxu0 0.0
  %3159 = vmatpush1.msra.mxu0 0.0
  %3160 = vmatprep.subr.mxu0 0.0
  %3161 = vmatpush1.msra.mxu0 0.0
  %3162 = vmatprep.subr.mxu0 0.0
  %3163 = vmatpush1.msra.mxu0 0.0
  %3164 = vmatprep.subr.mxu0 0.0
  %3165 = vmatpush1.msra.mxu0 0.0
  %3166 = vmatprep.subr.mxu0 0.0
  %3167 = vmatpush1.msra.mxu0 0.0
  %3168 = vmatprep.subr.mxu0 0.0
  %3169 = vmatpush1.msra.mxu0 0.0
  %3170 = vmatprep.subr.mxu0 0.0
  %3171 = vmatpush1.msra.mxu0 0.0
  %3172 = vmatprep.subr.mxu0 0.0
  %3173 = vmatpush1.msra.mxu0 0.0
  %3174 = vmatprep.subr.mxu0 0.0
  %3175 = vmatpush1.msra.mxu0 0.0
  %3176 = vmatprep.subr.mxu0 0.0
  %3177 = vmatpush1.msra.mxu0 0.0
  %3178 = vmatprep.subr.mxu0 0.0
  %3179 = vmatpush1.msra.mxu0 0.0
  %3180 = vmatprep.subr.mxu0 0.0
  %3181 = vmatpush1.msra.mxu0 0.0
  %3182 = vmatprep.subr.mxu0 0.0
  %3183 = vmatpush1.msra.mxu0 0.0
  %3184 = vmatprep.subr.mxu0 0.0
  %3185 = vmatpush1.msra.mxu0 0.0
  %3186 = vmatprep.subr.mxu0 0.0
  %3187 = vmatpush1.msra.mxu0 0.0
  %3188 = vmatprep.subr.mxu0 0.0
  %3189 = vmatpush1.msra.mxu0 0.0
  %3190 = vmatprep.subr.mxu0 0.0
  %3191 = vmatpush1.msra.mxu0 0.0
  %3192 = vmatprep.subr.mxu0 0.0
  %3193 = vmatpush1.msra.mxu0 0.0
  %3194 = vmatprep.subr.mxu0 0.0
  %3195 = vmatpush1.msra.mxu0 0.0
  %3196 = vmatprep.subr.mxu0 0.0
  %3197 = vmatpush1.msra.mxu0 0.0
  %3198 = vmatprep.subr.mxu0 0.0
  %3199 = vmatpush1.msra.mxu0 0.0
  %3200 = vmatprep.subr.mxu0 0.0
  %3201 = vmatpush1.msra.mxu0 0.0
  %3202 = vmatprep.subr.mxu0 0.0
  %3203 = vmatpush1.msra.mxu0 0.0
  %3204 = vmatprep.mubr.f32.mxu0 0.0
  %3205 = vmatmul.mubr.f32.gmra.mrb[0].mxu0 %v3135
  %v3206 = vpop.f32.mrb[0].mxu0
  %v3207 = vadd.f32 0.0, %v3206
  %v3208 = vpop.f32.mrb[0].mxu0
  %3209 = vmatprep.mubr.f32.mxu0 0.0
  %3210 = vmatmul.mubr.f32.gmra.mrb[0].mxu0 %v3138
  %v3211 = vpop.f32.mrb[0].mxu0
  %v3212 = vadd.f32 0.0, %v3211
  %v3213 = vpop.f32.mrb[0].mxu0
  %3214 = vdwg.mxu0
  %v3215 = vadd.f32 %v2928, %v3207
  %v3216 = vadd.f32 %v2929, %v3212
  %v3217 = vadd.f32 %v1764, %v3215
  %v3218 = vadd.f32 %v1765, %v3216
  %s3219 = scalar_lea.vmem %s8, 1
  %v3220 = vld [vmem:[%s3219] sm:$0x1]
  %v3221 = vmul.f32 %v3217, %v3217
  %v3222 = vmul.f32 %v3218, %v3218
  %v3223 = vsel %vm63, %v3221, 0.0
  %3224 = vadd.xlane.f32.xlu0 %v3223
  %v3225 = vpop.xlane.xlu0 %3224
  %v3226 = vsel %vm63, %v3222, 0.0
  %3227 = vadd.xlane.f32.xlu0 %v3226
  %v3228 = vpop.xlane.xlu0 %3227
  %v3229 = vmul.f32 %v3225, %v70
  %v3230 = vmul.f32 %v3228, %v70
  %v3231 = vadd.f32 %v3229, 1e-05
  %v3232 = vadd.f32 %v3230, 1e-05
  %v3233 = vrsqrt.pop %v3231
  %v3234 = vrsqrt.pop %v3232
  %v3235 = vmul.f32 %v3217, %v3233
  %v3236 = vmul.f32 %v3218, %v3234
  %v3238 = vlaneseq
  %v3239 = vshrl.u32 %v3238, 7
  %v3240 = vsub.s32 0, %v3239
  %v3241 = vrot.slane %v3220, %v3240
  %v3243 = vmul.f32 %v3235, %v3241
  %v3244 = vmul.f32 %v3236, %v3241
  %s3245 = scalar_lea.vmem %s9, 64
  %v3246 = vld [vmem:[%s3245] sm:$0xff]
  %v3247 = vld [vmem:[%s3245 + $0x8] sm:$0xff]
  %v3248 = vld [vmem:[%s3245 + $0x10] sm:$0xff]
  %v3249 = vld [vmem:[%s3245 + $0x18] sm:$0xff]
  %v3250 = vld [vmem:[%s3245 + $0x20] sm:$0xff]
  %v3251 = vld [vmem:[%s3245 + $0x28] sm:$0xff]
  %v3252 = vld [vmem:[%s3245 + $0x30] sm:$0xff]
  %v3253 = vld [vmem:[%s3245 + $0x38] sm:$0xff]
  %v3255 = vsel %vm63, %v3243, 0
  %v3258 = vsel %vm63, %v3244, 0
  %3260 = vmatprep.subr.mxu0 %v3247
  %3261 = vmatpush1.msra.mxu0 %v3246
  %3262 = vmatprep.subr.mxu0 %v3249
  %3263 = vmatpush1.msra.mxu0 %v3248
  %3264 = vmatprep.subr.mxu0 %v3251
  %3265 = vmatpush1.msra.mxu0 %v3250
  %3266 = vmatprep.subr.mxu0 %v3253
  %3267 = vmatpush1.msra.mxu0 %v3252
  %3268 = vmatprep.subr.mxu0 0.0
  %3269 = vmatpush1.msra.mxu0 0.0
  %3270 = vmatprep.subr.mxu0 0.0
  %3271 = vmatpush1.msra.mxu0 0.0
  %3272 = vmatprep.subr.mxu0 0.0
  %3273 = vmatpush1.msra.mxu0 0.0
  %3274 = vmatprep.subr.mxu0 0.0
  %3275 = vmatpush1.msra.mxu0 0.0
  %3276 = vmatprep.subr.mxu0 0.0
  %3277 = vmatpush1.msra.mxu0 0.0
  %3278 = vmatprep.subr.mxu0 0.0
  %3279 = vmatpush1.msra.mxu0 0.0
  %3280 = vmatprep.subr.mxu0 0.0
  %3281 = vmatpush1.msra.mxu0 0.0
  %3282 = vmatprep.subr.mxu0 0.0
  %3283 = vmatpush1.msra.mxu0 0.0
  %3284 = vmatprep.subr.mxu0 0.0
  %3285 = vmatpush1.msra.mxu0 0.0
  %3286 = vmatprep.subr.mxu0 0.0
  %3287 = vmatpush1.msra.mxu0 0.0
  %3288 = vmatprep.subr.mxu0 0.0
  %3289 = vmatpush1.msra.mxu0 0.0
  %3290 = vmatprep.subr.mxu0 0.0
  %3291 = vmatpush1.msra.mxu0 0.0
  %3292 = vmatprep.subr.mxu0 0.0
  %3293 = vmatpush1.msra.mxu0 0.0
  %3294 = vmatprep.subr.mxu0 0.0
  %3295 = vmatpush1.msra.mxu0 0.0
  %3296 = vmatprep.subr.mxu0 0.0
  %3297 = vmatpush1.msra.mxu0 0.0
  %3298 = vmatprep.subr.mxu0 0.0
  %3299 = vmatpush1.msra.mxu0 0.0
  %3300 = vmatprep.subr.mxu0 0.0
  %3301 = vmatpush1.msra.mxu0 0.0
  %3302 = vmatprep.subr.mxu0 0.0
  %3303 = vmatpush1.msra.mxu0 0.0
  %3304 = vmatprep.subr.mxu0 0.0
  %3305 = vmatpush1.msra.mxu0 0.0
  %3306 = vmatprep.subr.mxu0 0.0
  %3307 = vmatpush1.msra.mxu0 0.0
  %3308 = vmatprep.subr.mxu0 0.0
  %3309 = vmatpush1.msra.mxu0 0.0
  %3310 = vmatprep.subr.mxu0 0.0
  %3311 = vmatpush1.msra.mxu0 0.0
  %3312 = vmatprep.subr.mxu0 0.0
  %3313 = vmatpush1.msra.mxu0 0.0
  %3314 = vmatprep.subr.mxu0 0.0
  %3315 = vmatpush1.msra.mxu0 0.0
  %3316 = vmatprep.subr.mxu0 0.0
  %3317 = vmatpush1.msra.mxu0 0.0
  %3318 = vmatprep.subr.mxu0 0.0
  %3319 = vmatpush1.msra.mxu0 0.0
  %3320 = vmatprep.subr.mxu0 0.0
  %3321 = vmatpush1.msra.mxu0 0.0
  %3322 = vmatprep.subr.mxu0 0.0
  %3323 = vmatpush1.msra.mxu0 0.0
  %3324 = vmatprep.mubr.f32.mxu0 0.0
  %3325 = vmatmul.mubr.f32.gmra.mrb[0].mxu0 %v3255
  %v3326 = vpop.f32.mrb[0].mxu0
  %v3327 = vadd.f32 0.0, %v3326
  %v3328 = vpop.f32.mrb[0].mxu0
  %v3329 = vadd.f32 0.0, %v3328
  %3330 = vmatprep.mubr.f32.mxu0 0.0
  %3331 = vmatmul.mubr.f32.gmra.mrb[0].mxu0 %v3258
  %v3332 = vpop.f32.mrb[0].mxu0
  %v3333 = vadd.f32 0.0, %v3332
  %v3334 = vpop.f32.mrb[0].mxu0
  %v3335 = vadd.f32 0.0, %v3334
  %3336 = vdwg.mxu0
  %v3337 = vxor.u32 %v3327, 2147483648
  %v3338 = vxor.u32 %v3333, 2147483648
  %v3339 = vmul.f32 %v3337, 1.442695
  %v3340 = vpow.pop %v3339
  %v3341 = vmul.f32 %v3338, 1.442695
  %v3342 = vpow.pop %v3341
  %v3343 = vadd.f32 %v3340, 1.0
  %v3344 = vadd.f32 %v3342, 1.0
  %v3345 = vrcp.pop %v3343
  %v3346 = vmul.f32 1.0, %v3345
  %v3347 = vrcp.pop %v3344
  %v3348 = vmul.f32 1.0, %v3347
  %v3349 = vmul.f32 %v3327, %v3346
  %v3350 = vmul.f32 %v3333, %v3348
  %3355 = vrot.lane.b32.xlu0 %v3327, 32
  %v3356 = vpop.permute.xlu0 %3355
  %3357 = vrot.lane.b32.xlu0 %v3329, 32
  %v3358 = vpop.permute.xlu0 %3357
  %3359 = vrot.lane.b32.xlu0 %v3333, 32
  %v3360 = vpop.permute.xlu0 %3359
  %3361 = vrot.lane.b32.xlu0 %v3335, 32
  %v3362 = vpop.permute.xlu0 %3361
  %v3363 = vsel %vm63, %v3356, %v3358
  %v3364 = vsel %vm63, %v3360, %v3362
  %v3367 = vmul.f32 %v3349, %v3363
  %v3368 = vmul.f32 %v3350, %v3364
  %s3369 = scalar_lea.vmem %s10, 96
  %v3370 = vld [vmem:[%s3369] sm:$0xff]
  %v3371 = vld [vmem:[%s3369 + $0x8] sm:$0xff]
  %v3372 = vld [vmem:[%s3369 + $0x10] sm:$0xff]
  %v3373 = vld [vmem:[%s3369 + $0x18] sm:$0xff]
  %v3374 = vld [vmem:[%s3369 + $0x20] sm:$0xff]
  %v3375 = vld [vmem:[%s3369 + $0x28] sm:$0xff]
  %v3376 = vld [vmem:[%s3369 + $0x30] sm:$0xff]
  %v3377 = vld [vmem:[%s3369 + $0x38] sm:$0xff]
  %v3378 = vld [vmem:[%s3369 + $0x40] sm:$0xff]
  %v3379 = vld [vmem:[%s3369 + $0x48] sm:$0xff]
  %v3380 = vld [vmem:[%s3369 + $0x50] sm:$0xff]
  %v3381 = vld [vmem:[%s3369 + $0x58] sm:$0xff]
  %v3383 = vsel %vm1682, %v3367, 0
  %v3386 = vsel %vm1682, %v3368, 0
  %3388 = vmatprep.subr.mxu0 0.0
  %3389 = vmatpush1.msra.mxu0 %v3370
  %3390 = vmatprep.subr.mxu0 0.0
  %3391 = vmatpush1.msra.mxu0 %v3371
  %3392 = vmatprep.subr.mxu0 0.0
  %3393 = vmatpush1.msra.mxu0 %v3372
  %3394 = vmatprep.subr.mxu0 0.0
  %3395 = vmatpush1.msra.mxu0 %v3373
  %3396 = vmatprep.subr.mxu0 0.0
  %3397 = vmatpush1.msra.mxu0 %v3374
  %3398 = vmatprep.subr.mxu0 0.0
  %3399 = vmatpush1.msra.mxu0 %v3375
  %3400 = vmatprep.subr.mxu0 0.0
  %3401 = vmatpush1.msra.mxu0 %v3376
  %3402 = vmatprep.subr.mxu0 0.0
  %3403 = vmatpush1.msra.mxu0 %v3377
  %3404 = vmatprep.subr.mxu0 0.0
  %3405 = vmatpush1.msra.mxu0 %v3378
  %3406 = vmatprep.subr.mxu0 0.0
  %3407 = vmatpush1.msra.mxu0 %v3379
  %3408 = vmatprep.subr.mxu0 0.0
  %3409 = vmatpush1.msra.mxu0 %v3380
  %3410 = vmatprep.subr.mxu0 0.0
  %3411 = vmatpush1.msra.mxu0 %v3381
  %3412 = vmatprep.subr.mxu0 0.0
  %3413 = vmatpush1.msra.mxu0 0.0
  %3414 = vmatprep.subr.mxu0 0.0
  %3415 = vmatpush1.msra.mxu0 0.0
  %3416 = vmatprep.subr.mxu0 0.0
  %3417 = vmatpush1.msra.mxu0 0.0
  %3418 = vmatprep.subr.mxu0 0.0
  %3419 = vmatpush1.msra.mxu0 0.0
  %3420 = vmatprep.subr.mxu0 0.0
  %3421 = vmatpush1.msra.mxu0 0.0
  %3422 = vmatprep.subr.mxu0 0.0
  %3423 = vmatpush1.msra.mxu0 0.0
  %3424 = vmatprep.subr.mxu0 0.0
  %3425 = vmatpush1.msra.mxu0 0.0
  %3426 = vmatprep.subr.mxu0 0.0
  %3427 = vmatpush1.msra.mxu0 0.0
  %3428 = vmatprep.subr.mxu0 0.0
  %3429 = vmatpush1.msra.mxu0 0.0
  %3430 = vmatprep.subr.mxu0 0.0
  %3431 = vmatpush1.msra.mxu0 0.0
  %3432 = vmatprep.subr.mxu0 0.0
  %3433 = vmatpush1.msra.mxu0 0.0
  %3434 = vmatprep.subr.mxu0 0.0
  %3435 = vmatpush1.msra.mxu0 0.0
  %3436 = vmatprep.subr.mxu0 0.0
  %3437 = vmatpush1.msra.mxu0 0.0
  %3438 = vmatprep.subr.mxu0 0.0
  %3439 = vmatpush1.msra.mxu0 0.0
  %3440 = vmatprep.subr.mxu0 0.0
  %3441 = vmatpush1.msra.mxu0 0.0
  %3442 = vmatprep.subr.mxu0 0.0
  %3443 = vmatpush1.msra.mxu0 0.0
  %3444 = vmatprep.subr.mxu0 0.0
  %3445 = vmatpush1.msra.mxu0 0.0
  %3446 = vmatprep.subr.mxu0 0.0
  %3447 = vmatpush1.msra.mxu0 0.0
  %3448 = vmatprep.subr.mxu0 0.0
  %3449 = vmatpush1.msra.mxu0 0.0
  %3450 = vmatprep.subr.mxu0 0.0
  %3451 = vmatpush1.msra.mxu0 0.0
  %3452 = vmatprep.mubr.f32.mxu0 0.0
  %3453 = vmatmul.mubr.f32.gmra.mrb[0].mxu0 %v3383
  %v3454 = vpop.f32.mrb[0].mxu0
  %v3455 = vadd.f32 0.0, %v3454
  %v3456 = vpop.f32.mrb[0].mxu0
  %3457 = vmatprep.mubr.f32.mxu0 0.0
  %3458 = vmatmul.mubr.f32.gmra.mrb[0].mxu0 %v3386
  %v3459 = vpop.f32.mrb[0].mxu0
  %v3460 = vadd.f32 0.0, %v3459
  %v3461 = vpop.f32.mrb[0].mxu0
  %3462 = vdwg.mxu0
  %v3463 = vadd.f32 %v3217, %v3455
  %v3464 = vadd.f32 %v3218, %v3460
  %v3465 = vld [vmem:[%s11] sm:$0x1]
  %v3466 = vmul.f32 %v3463, %v3463
  %v3467 = vmul.f32 %v3464, %v3464
  %v3468 = vsel %vm63, %v3466, 0.0
  %3469 = vadd.xlane.f32.xlu0 %v3468
  %v3470 = vpop.xlane.xlu0 %3469
  %v3471 = vsel %vm63, %v3467, 0.0
  %3472 = vadd.xlane.f32.xlu0 %v3471
  %v3473 = vpop.xlane.xlu0 %3472
  %v3474 = vmul.f32 %v3470, %v70
  %v3475 = vmul.f32 %v3473, %v70
  %v3476 = vadd.f32 %v3474, 1e-05
  %v3477 = vadd.f32 %v3475, 1e-05
  %v3478 = vrsqrt.pop %v3476
  %v3479 = vrsqrt.pop %v3477
  %v3480 = vmul.f32 %v3463, %v3478
  %v3481 = vmul.f32 %v3464, %v3479
  %v3483 = vlaneseq
  %v3484 = vshrl.u32 %v3483, 7
  %v3485 = vsub.s32 0, %v3484
  %v3486 = vrot.slane %v3465, %v3485
  %v3488 = vmul.f32 %v3480, %v3486
  %v3489 = vmul.f32 %v3481, %v3486
  %v3490 = vld [vmem:[%s12] sm:$0xff]
  %v3491 = vld [vmem:[%s12 + $0x8] sm:$0xff]
  %v3492 = vld [vmem:[%s12 + $0x10] sm:$0xff]
  %v3493 = vld [vmem:[%s12 + $0x18] sm:$0xff]
  %v3495 = vsel %vm63, %v3488, 0
  %v3498 = vsel %vm63, %v3489, 0
  %3500 = vmatprep.subr.mxu0 0.0
  %3501 = vmatpush1.msra.mxu0 %v3490
  %3502 = vmatprep.subr.mxu0 0.0
  %3503 = vmatpush1.msra.mxu0 %v3491
  %3504 = vmatprep.subr.mxu0 0.0
  %3505 = vmatpush1.msra.mxu0 %v3492
  %3506 = vmatprep.subr.mxu0 0.0
  %3507 = vmatpush1.msra.mxu0 %v3493
  %3508 = vmatprep.subr.mxu0 0.0
  %3509 = vmatpush1.msra.mxu0 0.0
  %3510 = vmatprep.subr.mxu0 0.0
  %3511 = vmatpush1.msra.mxu0 0.0
  %3512 = vmatprep.subr.mxu0 0.0
  %3513 = vmatpush1.msra.mxu0 0.0
  %3514 = vmatprep.subr.mxu0 0.0
  %3515 = vmatpush1.msra.mxu0 0.0
  %3516 = vmatprep.subr.mxu0 0.0
  %3517 = vmatpush1.msra.mxu0 0.0
  %3518 = vmatprep.subr.mxu0 0.0
  %3519 = vmatpush1.msra.mxu0 0.0
  %3520 = vmatprep.subr.mxu0 0.0
  %3521 = vmatpush1.msra.mxu0 0.0
  %3522 = vmatprep.subr.mxu0 0.0
  %3523 = vmatpush1.msra.mxu0 0.0
  %3524 = vmatprep.subr.mxu0 0.0
  %3525 = vmatpush1.msra.mxu0 0.0
  %3526 = vmatprep.subr.mxu0 0.0
  %3527 = vmatpush1.msra.mxu0 0.0
  %3528 = vmatprep.subr.mxu0 0.0
  %3529 = vmatpush1.msra.mxu0 0.0
  %3530 = vmatprep.subr.mxu0 0.0
  %3531 = vmatpush1.msra.mxu0 0.0
  %3532 = vmatprep.subr.mxu0 0.0
  %3533 = vmatpush1.msra.mxu0 0.0
  %3534 = vmatprep.subr.mxu0 0.0
  %3535 = vmatpush1.msra.mxu0 0.0
  %3536 = vmatprep.subr.mxu0 0.0
  %3537 = vmatpush1.msra.mxu0 0.0
  %3538 = vmatprep.subr.mxu0 0.0
  %3539 = vmatpush1.msra.mxu0 0.0
  %3540 = vmatprep.subr.mxu0 0.0
  %3541 = vmatpush1.msra.mxu0 0.0
  %3542 = vmatprep.subr.mxu0 0.0
  %3543 = vmatpush1.msra.mxu0 0.0
  %3544 = vmatprep.subr.mxu0 0.0
  %3545 = vmatpush1.msra.mxu0 0.0
  %3546 = vmatprep.subr.mxu0 0.0
  %3547 = vmatpush1.msra.mxu0 0.0
  %3548 = vmatprep.subr.mxu0 0.0
  %3549 = vmatpush1.msra.mxu0 0.0
  %3550 = vmatprep.subr.mxu0 0.0
  %3551 = vmatpush1.msra.mxu0 0.0
  %3552 = vmatprep.subr.mxu0 0.0
  %3553 = vmatpush1.msra.mxu0 0.0
  %3554 = vmatprep.subr.mxu0 0.0
  %3555 = vmatpush1.msra.mxu0 0.0
  %3556 = vmatprep.subr.mxu0 0.0
  %3557 = vmatpush1.msra.mxu0 0.0
  %3558 = vmatprep.subr.mxu0 0.0
  %3559 = vmatpush1.msra.mxu0 0.0
  %3560 = vmatprep.subr.mxu0 0.0
  %3561 = vmatpush1.msra.mxu0 0.0
  %3562 = vmatprep.subr.mxu0 0.0
  %3563 = vmatpush1.msra.mxu0 0.0
  %3564 = vmatprep.mubr.f32.mxu0 0.0
  %3565 = vmatmul.mubr.f32.gmra.mrb[0].mxu0 %v3495
  %v3566 = vpop.f32.mrb[0].mxu0
  %v3567 = vadd.f32 0.0, %v3566
  %v3568 = vpop.f32.mrb[0].mxu0
  %3569 = vmatprep.mubr.f32.mxu0 0.0
  %3570 = vmatmul.mubr.f32.gmra.mrb[0].mxu0 %v3498
  %v3571 = vpop.f32.mrb[0].mxu0
  %v3572 = vadd.f32 0.0, %v3571
  %v3573 = vpop.f32.mrb[0].mxu0
  %3574 = vdwg.mxu0
  %3575 = vst [vmem:[%s13] sm:$0xff] %v3567
  %3576 = vst [vmem:[%s13 + $0x8] sm:$0xff] %v3572
  // Predicated region
  $region54: #{transformer_forward.1} parent=0 // pred_check
    _
  $region55: #{transformer_forward.1} parent=0 // pred_check_branch
    %3578 = sbr.rel (0) target = $region57
  $region56: #{transformer_forward.1} parent=0 // pred_region
    _
  $region57: #{transformer_forward.1} parent=0 // pred_fallthru
    _
  // Predicated region
  $region58: #{transformer_forward.1} parent=0 // pred_check
    _
  $region59: #{transformer_forward.1} parent=0 // pred_check_branch
    %3580 = sbr.rel (0) target = $region61
  $region60: #{transformer_forward.1} parent=0 // pred_region
    _
  $region61: #{transformer_forward.1} parent=0 // pred_fallthru
    _

</llo_original>
